<compile_context>
chip_gen: v7x
topology: tpu7x:2x2x1
jax: 0.10.0
libtpu: 0.0.40
codegen_flags: <defaults>
</compile_context>

<pallas_src>
import functools
import math

import numpy as np

import jax
import jax.numpy as jnp
from jax.experimental import pallas as pl
from jax.experimental.pallas import tpu as pltpu


# ----------------------------------------------------------------------------
# Fused whole-network Pallas kernel
# ----------------------------------------------------------------------------
def _pfpcnet_fused_kernel(*refs, layer_dims, n_batch):
    """refs = [x2d, (A,B,bias) per conv unit, w1p, b1, w2p, b2p, out]."""
    n_layers = len(layer_dims)
    x_ref = refs[0]
    conv_refs = [refs[1 + 3 * l: 1 + 3 * (l + 1)] for l in range(n_layers)]
    w1_ref, fb1_ref, w2_ref, fb2_ref = refs[1 + 3 * n_layers: 5 + 3 * n_layers]
    o_ref = refs[5 + 3 * n_layers]

    # Output is sublane/lane padded; define the padded region once.
    o_ref[...] = jnp.zeros(o_ref.shape, o_ref.dtype)

    h0 = layer_dims[0][0]
    h_last, w_last, c_last = layer_dims[-1][3], layer_dims[-1][4], layer_dims[-1][5]
    k_blk = w_last * c_last  # lane width of one activation row feeding fc1

    for n in range(n_batch):
        # Per-image activation, layout rows = h, lanes = (w, c).
        act = x_ref[pl.ds(n * h0, h0), :]

        # ---- encoder: conv3x3 + folded BN + ReLU units -----------------
        for l, (H, W, C, Ho, Wo, Co, s) in enumerate(layer_dims):
            a_ref, b_ref, bias_ref = conv_refs[l]
            acc = jnp.zeros((Ho, Wo * Co), jnp.float32)
            for kh in range(3):
                rows = jnp.dot(a_ref[kh], act,
                               preferred_element_type=jnp.float32)
                acc = acc + jnp.dot(rows, b_ref[kh],
                                    preferred_element_type=jnp.float32)
            act = jnp.maximum(acc + bias_ref[...], 0.0)      # (Ho, Wo*Co)

        # ---- decoder: Dropout(identity at eval) -> fc1 -> fc2 ----------
        acc1 = fb1_ref[...]                                   # (1, pca)
        for h in range(h_last):
            acc1 = acc1 + jnp.dot(act[h:h + 1, :],
                                  w1_ref[pl.ds(h * k_blk, k_blk), :],
                                  preferred_element_type=jnp.float32)
        out_row = jnp.dot(acc1, w2_ref[...],
                          preferred_element_type=jnp.float32) + fb2_ref[...]
        o_ref[pl.ds(n, 1), :] = out_row                       # (1, out_cols_pad)


def _full_block_spec(shape):
    zeros = (0,) * len(shape)
    return pl.BlockSpec(tuple(shape), lambda i, _z=zeros: _z)


# ----------------------------------------------------------------------------
# Parameter construction (folds BN, im2col structure and fc1 permutation)
# ----------------------------------------------------------------------------
def init_pfpcnet_params(key, channels, pca_size, in_channels, in_size, vertices):
    eps = 1e-5
    H, W = in_size
    C = in_channels

    layer_dims = []
    a_mats, b_mats, bias_rows = [], [], []
    raw_convs = []

    for stage_chs in channels:
        for j, c_out in enumerate(stage_chs):
            s = 2 if j == 0 else 1
            Ho = (H + 2 - 3) // s + 1
            Wo = (W + 2 - 3) // s + 1

            key, kw_key = jax.random.split(key)
            fan_in = C * 9
            bound = math.sqrt(6.0 / fan_in)   # kaiming_uniform_ (a=0, leaky_relu)
            w = jax.random.uniform(kw_key, (c_out, C, 3, 3), jnp.float32,
                                   -bound, bound)             # torch OIHW layout

            # Eval-mode BN with default running stats.
            gamma = jnp.ones((c_out,), jnp.float32)
            beta = jnp.zeros((c_out,), jnp.float32)
            mean = jnp.zeros((c_out,), jnp.float32)
            var = jnp.ones((c_out,), jnp.float32)
            scale = gamma / jnp.sqrt(var + eps)
            shift = beta - mean * scale
            raw_convs.append((w, scale, shift, s))

            w_np = np.asarray(w)
            scale_np = np.asarray(scale)
            shift_np = np.asarray(shift)

            # Weff[kh, kw, ci, co] = w[co, ci, kh, kw] * scale[co]
            weff = np.transpose(w_np, (2, 3, 1, 0)) * scale_np[None, None, None, :]

            # Right matrices: fold kw taps, W padding, W stride, BN scale.
            B = np.zeros((3, W * C, Wo * c_out), np.float32)
            for kh in range(3):
                for jo in range(Wo):
                    for kw in range(3):
                        jw = jo * s + kw - 1
                        if 0 <= jw < W:
                            B[kh, jw * C:(jw + 1) * C,
                              jo * c_out:(jo + 1) * c_out] = weff[kh, kw]

            # Left one-hot matrices: fold kh tap shift, H padding, H stride.
            A = np.zeros((3, Ho, H), np.float32)
            for kh in range(3):
                for io in range(Ho):
                    ih = io * s + kh - 1
                    if 0 <= ih < H:
                        A[kh, io, ih] = 1.0

            bias_row = np.tile(shift_np, Wo)[None, :].astype(np.float32)

            layer_dims.append((H, W, C, Ho, Wo, c_out, s))
            a_mats.append(jnp.asarray(A))
            b_mats.append(jnp.asarray(B))
            bias_rows.append(jnp.asarray(bias_row))
            H, W, C = Ho, Wo, c_out

    # PyTorch model hard-codes fc1 fan-in = C * 5 * 4.
    assert (H, W) == (5, 4), (H, W)
    fc1_in = C * H * W

    key, k1, k2, k3, k4 = jax.random.split(key, 5)
    b1b = 1.0 / math.sqrt(fc1_in)
    w1 = jax.random.uniform(k1, (fc1_in, pca_size), jnp.float32, -b1b, b1b)
    bias1 = jax.random.uniform(k2, (pca_size,), jnp.float32, -b1b, b1b)
    b2b = 1.0 / math.sqrt(pca_size)
    w2 = jax.random.uniform(k3, (pca_size, 3 * vertices), jnp.float32, -b2b, b2b)
    bias2 = jax.random.uniform(k4, (3 * vertices,), jnp.float32, -b2b, b2b)

    # Permute fc1 rows once: torch flattens NCHW as (c, h, w); the kernel's
    # activation is rows=h, lanes=(w, c).
    w1_np = np.asarray(w1)
    pos = np.arange(fc1_in)
    hh = pos // (W * C)
    rem = pos % (W * C)
    ww = rem // C
    cc = rem % C
    torch_idx = cc * (H * W) + hh * W + ww
    w1_perm = w1_np[torch_idx, :]

    # Pad fc2 to a lane-dense (multiple of 128) output width.
    out_cols = 3 * vertices
    out_cols_pad = ((out_cols + 127) // 128) * 128
    w2_pad = np.zeros((pca_size, out_cols_pad), np.float32)
    w2_pad[:, :out_cols] = np.asarray(w2)
    b2_pad = np.zeros((1, out_cols_pad), np.float32)
    b2_pad[0, :out_cols] = np.asarray(bias2)

    params = dict(
        A=a_mats, B=b_mats, bias=bias_rows,
        w1p=jnp.asarray(w1_perm),
        b1=jnp.asarray(np.asarray(bias1)[None, :]),
        w2p=jnp.asarray(w2_pad),
        b2p=jnp.asarray(b2_pad),
    )
    cfg = dict(layers=tuple(layer_dims), pca=pca_size, vertices=vertices,
               out_cols_pad=out_cols_pad, in_size=tuple(in_size),
               in_channels=in_channels)
    raw = dict(convs=raw_convs, w1=w1, b1=bias1, w2=w2, b2=bias2)
    return cfg, params, raw


# ----------------------------------------------------------------------------
# Forward pass (one fused pallas_call, jitted end-to-end)
# ----------------------------------------------------------------------------
def make_forward(cfg):
    layers = cfg["layers"]
    vertices = cfg["vertices"]
    out_cols_pad = cfg["out_cols_pad"]

    @jax.jit
    def forward(params, x_nchw):
        n, c0, h0, w0 = x_nchw.shape
        assert (h0, w0) == cfg["in_size"] and c0 == cfg["in_channels"]
        # NCHW -> NHWC -> (rows=(n,h), lanes=(w,c)): pure layout glue.
        x2d = jnp.transpose(x_nchw, (0, 2, 3, 1)).reshape(n * h0, w0 * c0)

        inputs = [x2d]
        for l in range(len(layers)):
            inputs += [params["A"][l], params["B"][l], params["bias"][l]]
        inputs += [params["w1p"], params["b1"], params["w2p"], params["b2p"]]

        out_rows = max(8, ((n + 7) // 8) * 8)        # sublane-dense output rows
        kernel = functools.partial(_pfpcnet_fused_kernel,
                                   layer_dims=layers, n_batch=n)
        out = pl.pallas_call(
            kernel,
            out_shape=jax.ShapeDtypeStruct((out_rows, out_cols_pad), jnp.float32),
            grid=(1,),
            in_specs=[_full_block_spec(a.shape) for a in inputs],
            out_specs=_full_block_spec((out_rows, out_cols_pad)),
            compiler_params=pltpu.CompilerParams(
                dimension_semantics=("arbitrary",)),
        )(*inputs)

        # Drop padding, match PyTorch's x.view(N, -1, 3).
        return out[:n, :3 * vertices].reshape(n, vertices, 3)

    return forward


# ----------------------------------------------------------------------------
# Pure-JAX reference (mirrors the PyTorch module in eval mode)
# ----------------------------------------------------------------------------
def reference_forward(raw, x_nchw, vertices):
    x = x_nchw
    for (w, scale, shift, s) in raw["convs"]:
        y = jax.lax.conv_general_dilated(
            x, w, window_strides=(s, s), padding=((1, 1), (1, 1)),
            dimension_numbers=("NCHW", "OIHW", "NCHW"),
            precision=jax.lax.Precision.HIGHEST)
        y = y * scale[None, :, None, None] + shift[None, :, None, None]
        x = jnp.maximum(y, 0.0)
    n = x.shape[0]
    flat = x.reshape(n, -1)                        # NCHW flatten, as in PyTorch
    h1 = jnp.dot(flat, raw["w1"], precision=jax.lax.Precision.HIGHEST) + raw["b1"]
    h2 = jnp.dot(h1, raw["w2"], precision=jax.lax.Precision.HIGHEST) + raw["b2"]
    return h2.reshape(n, vertices, 3)


if __name__ == "__main__":
    # Small, shape-consistent config: two stride-2 stages reduce (20, 16) ->
    # (5, 4), matching the fc1 fan-in of C*5*4 in the PyTorch model.
    channels = [[8], [16, 16]]
    pca_size = 32
    vertices = 100
    in_channels = 1
    in_size = (20, 16)
    batch = 2

    key = jax.random.PRNGKey(0)
    kp, kx = jax.random.split(key)
    cfg, params, raw = init_pfpcnet_params(kp, channels, pca_size, in_channels,
                                           in_size, vertices)
    x = jax.random.normal(kx, (batch, in_channels, in_size[0], in_size[1]),
                          jnp.float32)

    forward = make_forward(cfg)
    out = jax.block_until_ready(forward(params, x))
    assert out.shape == (batch, vertices, 3), out.shape
    assert bool(jnp.all(jnp.isfinite(out)))

    ref = jax.block_until_ready(reference_forward(raw, x, vertices))
    max_err = float(jnp.max(jnp.abs(out - ref)))
    assert max_err < 5e-2, f"kernel/reference mismatch: {max_err}"

    print("KERNEL_OK")
</pallas_src>

<mosaic_0001>
module attributes {stable_mosaic.version = 11 : i64} {
  func.func @_pfpcnet_fused_kernel(%arg0: i32, %arg1: memref<40x16xf32, #tpu.memory_space<vmem>>, %arg2: memref<3x10x20xf32, #tpu.memory_space<vmem>>, %arg3: memref<3x16x64xf32, #tpu.memory_space<vmem>>, %arg4: memref<1x64xf32, #tpu.memory_space<vmem>>, %arg5: memref<3x5x10xf32, #tpu.memory_space<vmem>>, %arg6: memref<3x64x64xf32, #tpu.memory_space<vmem>>, %arg7: memref<1x64xf32, #tpu.memory_space<vmem>>, %arg8: memref<3x5x5xf32, #tpu.memory_space<vmem>>, %arg9: memref<3x64x64xf32, #tpu.memory_space<vmem>>, %arg10: memref<1x64xf32, #tpu.memory_space<vmem>>, %arg11: memref<320x32xf32, #tpu.memory_space<vmem>>, %arg12: memref<1x32xf32, #tpu.memory_space<vmem>>, %arg13: memref<32x384xf32, #tpu.memory_space<vmem>>, %arg14: memref<1x384xf32, #tpu.memory_space<vmem>>, %arg15: memref<8x384xf32, #tpu.memory_space<vmem>>) attributes {dimension_semantics = [#tpu.dimension_semantics<arbitrary>], iteration_bounds = array<i64: 1>, scalar_prefetch = 0 : i64, scratch_operands = 0 : i64, tpu.core_type = #tpu.core_type<tc>, window_params = [{pipeline_mode = #tpu.pipeline_mode<synchronous>, transform_indices = @transform_0, window_bounds = array<i64: 40, 16>}, {pipeline_mode = #tpu.pipeline_mode<synchronous>, transform_indices = @transform_1, window_bounds = array<i64: 3, 10, 20>}, {pipeline_mode = #tpu.pipeline_mode<synchronous>, transform_indices = @transform_2, window_bounds = array<i64: 3, 16, 64>}, {pipeline_mode = #tpu.pipeline_mode<synchronous>, transform_indices = @transform_3, window_bounds = array<i64: 1, 64>}, {pipeline_mode = #tpu.pipeline_mode<synchronous>, transform_indices = @transform_4, window_bounds = array<i64: 3, 5, 10>}, {pipeline_mode = #tpu.pipeline_mode<synchronous>, transform_indices = @transform_5, window_bounds = array<i64: 3, 64, 64>}, {pipeline_mode = #tpu.pipeline_mode<synchronous>, transform_indices = @transform_6, window_bounds = array<i64: 1, 64>}, {pipeline_mode = #tpu.pipeline_mode<synchronous>, transform_indices = @transform_7, window_bounds = array<i64: 3, 5, 5>}, {pipeline_mode = #tpu.pipeline_mode<synchronous>, transform_indices = @transform_8, window_bounds = array<i64: 3, 64, 64>}, {pipeline_mode = #tpu.pipeline_mode<synchronous>, transform_indices = @transform_9, window_bounds = array<i64: 1, 64>}, {pipeline_mode = #tpu.pipeline_mode<synchronous>, transform_indices = @transform_10, window_bounds = array<i64: 320, 32>}, {pipeline_mode = #tpu.pipeline_mode<synchronous>, transform_indices = @transform_11, window_bounds = array<i64: 1, 32>}, {pipeline_mode = #tpu.pipeline_mode<synchronous>, transform_indices = @transform_12, window_bounds = array<i64: 32, 384>}, {pipeline_mode = #tpu.pipeline_mode<synchronous>, transform_indices = @transform_13, window_bounds = array<i64: 1, 384>}, {pipeline_mode = #tpu.pipeline_mode<synchronous>, transform_indices = @transform_14, window_bounds = array<i64: 8, 384>}]} {
    %cst = arith.constant 0.000000e+00 : f32
    %0 = vector.broadcast %cst : f32 to vector<8x384xf32>
    %c0 = arith.constant 0 : index
    %c0_0 = arith.constant 0 : index
    %1 = vector.load %arg15[%c0, %c0_0] : memref<8x384xf32, #tpu.memory_space<vmem>>, vector<8x384xf32>
    tpu.vector_store %arg15[%c0, %c0_0], %0 {strides = array<i32>} : memref<8x384xf32, #tpu.memory_space<vmem>>, vector<8x384xf32>,
    %c0_1 = arith.constant 0 : index
    %c0_2 = arith.constant 0 : index
    %2 = vector.load %arg1[%c0_1, %c0_2] : memref<40x16xf32, #tpu.memory_space<vmem>>, vector<20x16xf32>
    %cst_3 = arith.constant 0.000000e+00 : f32
    %3 = vector.broadcast %cst_3 : f32 to vector<10x64xf32>
    %c0_4 = arith.constant 0 : index
    %c0_5 = arith.constant 0 : index
    %c0_6 = arith.constant 0 : index
    %4 = vector.load %arg2[%c0_4, %c0_5, %c0_6] : memref<3x10x20xf32, #tpu.memory_space<vmem>>, vector<1x10x20xf32>
    %5 = vector.shape_cast %4 : vector<1x10x20xf32> to vector<10x20xf32>
    %cst_7 = arith.constant dense<0.000000e+00> : vector<10x16xf32>
    %6 = tpu.matmul %5, %2, %cst_7 {dimension_numbers = #tpu.dot_dimension_numbers<[1], [0], [0], [1], [0, 0, 1, 1], [], []>} : vector<10x20xf32>, vector<20x16xf32>, vector<10x16xf32> -> vector<10x16xf32>
    %c0_8 = arith.constant 0 : index
    %c0_9 = arith.constant 0 : index
    %c0_10 = arith.constant 0 : index
    %7 = vector.load %arg3[%c0_8, %c0_9, %c0_10] : memref<3x16x64xf32, #tpu.memory_space<vmem>>, vector<1x16x64xf32>
    %8 = vector.shape_cast %7 : vector<1x16x64xf32> to vector<16x64xf32>
    %cst_11 = arith.constant dense<0.000000e+00> : vector<10x64xf32>
    %9 = tpu.matmul %6, %8, %cst_11 {dimension_numbers = #tpu.dot_dimension_numbers<[1], [0], [0], [1], [0, 0, 1, 1], [], []>} : vector<10x16xf32>, vector<16x64xf32>, vector<10x64xf32> -> vector<10x64xf32>
    %10 = arith.addf %3, %9 : vector<10x64xf32>
    %c1 = arith.constant 1 : index
    %c0_12 = arith.constant 0 : index
    %c0_13 = arith.constant 0 : index
    %11 = vector.load %arg2[%c1, %c0_12, %c0_13] : memref<3x10x20xf32, #tpu.memory_space<vmem>>, vector<1x10x20xf32>
    %12 = vector.shape_cast %11 : vector<1x10x20xf32> to vector<10x20xf32>
    %cst_14 = arith.constant dense<0.000000e+00> : vector<10x16xf32>
    %13 = tpu.matmul %12, %2, %cst_14 {dimension_numbers = #tpu.dot_dimension_numbers<[1], [0], [0], [1], [0, 0, 1, 1], [], []>} : vector<10x20xf32>, vector<20x16xf32>, vector<10x16xf32> -> vector<10x16xf32>
    %c1_15 = arith.constant 1 : index
    %c0_16 = arith.constant 0 : index
    %c0_17 = arith.constant 0 : index
    %14 = vector.load %arg3[%c1_15, %c0_16, %c0_17] : memref<3x16x64xf32, #tpu.memory_space<vmem>>, vector<1x16x64xf32>
    %15 = vector.shape_cast %14 : vector<1x16x64xf32> to vector<16x64xf32>
    %cst_18 = arith.constant dense<0.000000e+00> : vector<10x64xf32>
    %16 = tpu.matmul %13, %15, %cst_18 {dimension_numbers = #tpu.dot_dimension_numbers<[1], [0], [0], [1], [0, 0, 1, 1], [], []>} : vector<10x16xf32>, vector<16x64xf32>, vector<10x64xf32> -> vector<10x64xf32>
    %17 = arith.addf %10, %16 : vector<10x64xf32>
    %c2 = arith.constant 2 : index
    %c0_19 = arith.constant 0 : index
    %c0_20 = arith.constant 0 : index
    %18 = vector.load %arg2[%c2, %c0_19, %c0_20] : memref<3x10x20xf32, #tpu.memory_space<vmem>>, vector<1x10x20xf32>
    %19 = vector.shape_cast %18 : vector<1x10x20xf32> to vector<10x20xf32>
    %cst_21 = arith.constant dense<0.000000e+00> : vector<10x16xf32>
    %20 = tpu.matmul %19, %2, %cst_21 {dimension_numbers = #tpu.dot_dimension_numbers<[1], [0], [0], [1], [0, 0, 1, 1], [], []>} : vector<10x20xf32>, vector<20x16xf32>, vector<10x16xf32> -> vector<10x16xf32>
    %c2_22 = arith.constant 2 : index
    %c0_23 = arith.constant 0 : index
    %c0_24 = arith.constant 0 : index
    %21 = vector.load %arg3[%c2_22, %c0_23, %c0_24] : memref<3x16x64xf32, #tpu.memory_space<vmem>>, vector<1x16x64xf32>
    %22 = vector.shape_cast %21 : vector<1x16x64xf32> to vector<16x64xf32>
    %cst_25 = arith.constant dense<0.000000e+00> : vector<10x64xf32>
    %23 = tpu.matmul %20, %22, %cst_25 {dimension_numbers = #tpu.dot_dimension_numbers<[1], [0], [0], [1], [0, 0, 1, 1], [], []>} : vector<10x16xf32>, vector<16x64xf32>, vector<10x64xf32> -> vector<10x64xf32>
    %24 = arith.addf %17, %23 : vector<10x64xf32>
    %c0_26 = arith.constant 0 : index
    %c0_27 = arith.constant 0 : index
    %25 = vector.load %arg4[%c0_26, %c0_27] : memref<1x64xf32, #tpu.memory_space<vmem>>, vector<1x64xf32>
    %26 = vector.broadcast %25 : vector<1x64xf32> to vector<10x64xf32>
    %27 = arith.addf %24, %26 : vector<10x64xf32>
    %cst_28 = arith.constant 0.000000e+00 : f32
    %28 = vector.broadcast %cst_28 : f32 to vector<10x64xf32>
    %29 = arith.maximumf %27, %28 : vector<10x64xf32>
    %cst_29 = arith.constant 0.000000e+00 : f32
    %30 = vector.broadcast %cst_29 : f32 to vector<5x64xf32>
    %c0_30 = arith.constant 0 : index
    %c0_31 = arith.constant 0 : index
    %c0_32 = arith.constant 0 : index
    %31 = vector.load %arg5[%c0_30, %c0_31, %c0_32] : memref<3x5x10xf32, #tpu.memory_space<vmem>>, vector<1x5x10xf32>
    %32 = vector.shape_cast %31 : vector<1x5x10xf32> to vector<5x10xf32>
    %cst_33 = arith.constant dense<0.000000e+00> : vector<5x64xf32>
    %33 = tpu.matmul %32, %29, %cst_33 {dimension_numbers = #tpu.dot_dimension_numbers<[1], [0], [0], [1], [0, 0, 1, 1], [], []>} : vector<5x10xf32>, vector<10x64xf32>, vector<5x64xf32> -> vector<5x64xf32>
    %c0_34 = arith.constant 0 : index
    %c0_35 = arith.constant 0 : index
    %c0_36 = arith.constant 0 : index
    %34 = vector.load %arg6[%c0_34, %c0_35, %c0_36] : memref<3x64x64xf32, #tpu.memory_space<vmem>>, vector<1x64x64xf32>
    %35 = vector.shape_cast %34 : vector<1x64x64xf32> to vector<64x64xf32>
    %cst_37 = arith.constant dense<0.000000e+00> : vector<5x64xf32>
    %36 = tpu.matmul %33, %35, %cst_37 {dimension_numbers = #tpu.dot_dimension_numbers<[1], [0], [0], [1], [0, 0, 1, 1], [], []>} : vector<5x64xf32>, vector<64x64xf32>, vector<5x64xf32> -> vector<5x64xf32>
    %37 = arith.addf %30, %36 : vector<5x64xf32>
    %c1_38 = arith.constant 1 : index
    %c0_39 = arith.constant 0 : index
    %c0_40 = arith.constant 0 : index
    %38 = vector.load %arg5[%c1_38, %c0_39, %c0_40] : memref<3x5x10xf32, #tpu.memory_space<vmem>>, vector<1x5x10xf32>
    %39 = vector.shape_cast %38 : vector<1x5x10xf32> to vector<5x10xf32>
    %cst_41 = arith.constant dense<0.000000e+00> : vector<5x64xf32>
    %40 = tpu.matmul %39, %29, %cst_41 {dimension_numbers = #tpu.dot_dimension_numbers<[1], [0], [0], [1], [0, 0, 1, 1], [], []>} : vector<5x10xf32>, vector<10x64xf32>, vector<5x64xf32> -> vector<5x64xf32>
    %c1_42 = arith.constant 1 : index
    %c0_43 = arith.constant 0 : index
    %c0_44 = arith.constant 0 : index
    %41 = vector.load %arg6[%c1_42, %c0_43, %c0_44] : memref<3x64x64xf32, #tpu.memory_space<vmem>>, vector<1x64x64xf32>
    %42 = vector.shape_cast %41 : vector<1x64x64xf32> to vector<64x64xf32>
    %cst_45 = arith.constant dense<0.000000e+00> : vector<5x64xf32>
    %43 = tpu.matmul %40, %42, %cst_45 {dimension_numbers = #tpu.dot_dimension_numbers<[1], [0], [0], [1], [0, 0, 1, 1], [], []>} : vector<5x64xf32>, vector<64x64xf32>, vector<5x64xf32> -> vector<5x64xf32>
    %44 = arith.addf %37, %43 : vector<5x64xf32>
    %c2_46 = arith.constant 2 : index
    %c0_47 = arith.constant 0 : index
    %c0_48 = arith.constant 0 : index
    %45 = vector.load %arg5[%c2_46, %c0_47, %c0_48] : memref<3x5x10xf32, #tpu.memory_space<vmem>>, vector<1x5x10xf32>
    %46 = vector.shape_cast %45 : vector<1x5x10xf32> to vector<5x10xf32>
    %cst_49 = arith.constant dense<0.000000e+00> : vector<5x64xf32>
    %47 = tpu.matmul %46, %29, %cst_49 {dimension_numbers = #tpu.dot_dimension_numbers<[1], [0], [0], [1], [0, 0, 1, 1], [], []>} : vector<5x10xf32>, vector<10x64xf32>, vector<5x64xf32> -> vector<5x64xf32>
    %c2_50 = arith.constant 2 : index
    %c0_51 = arith.constant 0 : index
    %c0_52 = arith.constant 0 : index
    %48 = vector.load %arg6[%c2_50, %c0_51, %c0_52] : memref<3x64x64xf32, #tpu.memory_space<vmem>>, vector<1x64x64xf32>
    %49 = vector.shape_cast %48 : vector<1x64x64xf32> to vector<64x64xf32>
    %cst_53 = arith.constant dense<0.000000e+00> : vector<5x64xf32>
    %50 = tpu.matmul %47, %49, %cst_53 {dimension_numbers = #tpu.dot_dimension_numbers<[1], [0], [0], [1], [0, 0, 1, 1], [], []>} : vector<5x64xf32>, vector<64x64xf32>, vector<5x64xf32> -> vector<5x64xf32>
    %51 = arith.addf %44, %50 : vector<5x64xf32>
    %c0_54 = arith.constant 0 : index
    %c0_55 = arith.constant 0 : index
    %52 = vector.load %arg7[%c0_54, %c0_55] : memref<1x64xf32, #tpu.memory_space<vmem>>, vector<1x64xf32>
    %53 = vector.broadcast %52 : vector<1x64xf32> to vector<5x64xf32>
    %54 = arith.addf %51, %53 : vector<5x64xf32>
    %cst_56 = arith.constant 0.000000e+00 : f32
    %55 = vector.broadcast %cst_56 : f32 to vector<5x64xf32>
    %56 = arith.maximumf %54, %55 : vector<5x64xf32>
    %cst_57 = arith.constant 0.000000e+00 : f32
    %57 = vector.broadcast %cst_57 : f32 to vector<5x64xf32>
    %c0_58 = arith.constant 0 : index
    %c0_59 = arith.constant 0 : index
    %c0_60 = arith.constant 0 : index
    %58 = vector.load %arg8[%c0_58, %c0_59, %c0_60] : memref<3x5x5xf32, #tpu.memory_space<vmem>>, vector<1x5x5xf32>
    %59 = vector.shape_cast %58 : vector<1x5x5xf32> to vector<5x5xf32>
    %cst_61 = arith.constant dense<0.000000e+00> : vector<5x64xf32>
    %60 = tpu.matmul %59, %56, %cst_61 {dimension_numbers = #tpu.dot_dimension_numbers<[1], [0], [0], [1], [0, 0, 1, 1], [], []>} : vector<5x5xf32>, vector<5x64xf32>, vector<5x64xf32> -> vector<5x64xf32>
    %c0_62 = arith.constant 0 : index
    %c0_63 = arith.constant 0 : index
    %c0_64 = arith.constant 0 : index
    %61 = vector.load %arg9[%c0_62, %c0_63, %c0_64] : memref<3x64x64xf32, #tpu.memory_space<vmem>>, vector<1x64x64xf32>
    %62 = vector.shape_cast %61 : vector<1x64x64xf32> to vector<64x64xf32>
    %cst_65 = arith.constant dense<0.000000e+00> : vector<5x64xf32>
    %63 = tpu.matmul %60, %62, %cst_65 {dimension_numbers = #tpu.dot_dimension_numbers<[1], [0], [0], [1], [0, 0, 1, 1], [], []>} : vector<5x64xf32>, vector<64x64xf32>, vector<5x64xf32> -> vector<5x64xf32>
    %64 = arith.addf %57, %63 : vector<5x64xf32>
    %c1_66 = arith.constant 1 : index
    %c0_67 = arith.constant 0 : index
    %c0_68 = arith.constant 0 : index
    %65 = vector.load %arg8[%c1_66, %c0_67, %c0_68] : memref<3x5x5xf32, #tpu.memory_space<vmem>>, vector<1x5x5xf32>
    %66 = vector.shape_cast %65 : vector<1x5x5xf32> to vector<5x5xf32>
    %cst_69 = arith.constant dense<0.000000e+00> : vector<5x64xf32>
    %67 = tpu.matmul %66, %56, %cst_69 {dimension_numbers = #tpu.dot_dimension_numbers<[1], [0], [0], [1], [0, 0, 1, 1], [], []>} : vector<5x5xf32>, vector<5x64xf32>, vector<5x64xf32> -> vector<5x64xf32>
    %c1_70 = arith.constant 1 : index
    %c0_71 = arith.constant 0 : index
    %c0_72 = arith.constant 0 : index
    %68 = vector.load %arg9[%c1_70, %c0_71, %c0_72] : memref<3x64x64xf32, #tpu.memory_space<vmem>>, vector<1x64x64xf32>
    %69 = vector.shape_cast %68 : vector<1x64x64xf32> to vector<64x64xf32>
    %cst_73 = arith.constant dense<0.000000e+00> : vector<5x64xf32>
    %70 = tpu.matmul %67, %69, %cst_73 {dimension_numbers = #tpu.dot_dimension_numbers<[1], [0], [0], [1], [0, 0, 1, 1], [], []>} : vector<5x64xf32>, vector<64x64xf32>, vector<5x64xf32> -> vector<5x64xf32>
    %71 = arith.addf %64, %70 : vector<5x64xf32>
    %c2_74 = arith.constant 2 : index
    %c0_75 = arith.constant 0 : index
    %c0_76 = arith.constant 0 : index
    %72 = vector.load %arg8[%c2_74, %c0_75, %c0_76] : memref<3x5x5xf32, #tpu.memory_space<vmem>>, vector<1x5x5xf32>
    %73 = vector.shape_cast %72 : vector<1x5x5xf32> to vector<5x5xf32>
    %cst_77 = arith.constant dense<0.000000e+00> : vector<5x64xf32>
    %74 = tpu.matmul %73, %56, %cst_77 {dimension_numbers = #tpu.dot_dimension_numbers<[1], [0], [0], [1], [0, 0, 1, 1], [], []>} : vector<5x5xf32>, vector<5x64xf32>, vector<5x64xf32> -> vector<5x64xf32>
    %c2_78 = arith.constant 2 : index
    %c0_79 = arith.constant 0 : index
    %c0_80 = arith.constant 0 : index
    %75 = vector.load %arg9[%c2_78, %c0_79, %c0_80] : memref<3x64x64xf32, #tpu.memory_space<vmem>>, vector<1x64x64xf32>
    %76 = vector.shape_cast %75 : vector<1x64x64xf32> to vector<64x64xf32>
    %cst_81 = arith.constant dense<0.000000e+00> : vector<5x64xf32>
    %77 = tpu.matmul %74, %76, %cst_81 {dimension_numbers = #tpu.dot_dimension_numbers<[1], [0], [0], [1], [0, 0, 1, 1], [], []>} : vector<5x64xf32>, vector<64x64xf32>, vector<5x64xf32> -> vector<5x64xf32>
    %78 = arith.addf %71, %77 : vector<5x64xf32>
    %c0_82 = arith.constant 0 : index
    %c0_83 = arith.constant 0 : index
    %79 = vector.load %arg10[%c0_82, %c0_83] : memref<1x64xf32, #tpu.memory_space<vmem>>, vector<1x64xf32>
    %80 = vector.broadcast %79 : vector<1x64xf32> to vector<5x64xf32>
    %81 = arith.addf %78, %80 : vector<5x64xf32>
    %cst_84 = arith.constant 0.000000e+00 : f32
    %82 = vector.broadcast %cst_84 : f32 to vector<5x64xf32>
    %83 = arith.maximumf %81, %82 : vector<5x64xf32>
    %c0_85 = arith.constant 0 : index
    %c0_86 = arith.constant 0 : index
    %84 = vector.load %arg12[%c0_85, %c0_86] : memref<1x32xf32, #tpu.memory_space<vmem>>, vector<1x32xf32>
    %85 = vector.extract_strided_slice %83 {offsets = [0, 0], sizes = [1, 64], strides = [1, 1]} : vector<5x64xf32> to vector<1x64xf32>
    %c0_87 = arith.constant 0 : index
    %c0_88 = arith.constant 0 : index
    %86 = vector.load %arg11[%c0_87, %c0_88] : memref<320x32xf32, #tpu.memory_space<vmem>>, vector<64x32xf32>
    %cst_89 = arith.constant dense<0.000000e+00> : vector<1x32xf32>
    %87 = tpu.matmul %85, %86, %cst_89 {dimension_numbers = #tpu.dot_dimension_numbers<[1], [0], [0], [1], [0, 0, 1, 1], [], []>} : vector<1x64xf32>, vector<64x32xf32>, vector<1x32xf32> -> vector<1x32xf32>
    %88 = arith.addf %84, %87 : vector<1x32xf32>
    %89 = vector.extract_strided_slice %83 {offsets = [1, 0], sizes = [1, 64], strides = [1, 1]} : vector<5x64xf32> to vector<1x64xf32>
    %c64 = arith.constant 64 : index
    %c0_90 = arith.constant 0 : index
    %90 = vector.load %arg11[%c64, %c0_90] : memref<320x32xf32, #tpu.memory_space<vmem>>, vector<64x32xf32>
    %cst_91 = arith.constant dense<0.000000e+00> : vector<1x32xf32>
    %91 = tpu.matmul %89, %90, %cst_91 {dimension_numbers = #tpu.dot_dimension_numbers<[1], [0], [0], [1], [0, 0, 1, 1], [], []>} : vector<1x64xf32>, vector<64x32xf32>, vector<1x32xf32> -> vector<1x32xf32>
    %92 = arith.addf %88, %91 : vector<1x32xf32>
    %93 = vector.extract_strided_slice %83 {offsets = [2, 0], sizes = [1, 64], strides = [1, 1]} : vector<5x64xf32> to vector<1x64xf32>
    %c128 = arith.constant 128 : index
    %c0_92 = arith.constant 0 : index
    %94 = vector.load %arg11[%c128, %c0_92] : memref<320x32xf32, #tpu.memory_space<vmem>>, vector<64x32xf32>
    %cst_93 = arith.constant dense<0.000000e+00> : vector<1x32xf32>
    %95 = tpu.matmul %93, %94, %cst_93 {dimension_numbers = #tpu.dot_dimension_numbers<[1], [0], [0], [1], [0, 0, 1, 1], [], []>} : vector<1x64xf32>, vector<64x32xf32>, vector<1x32xf32> -> vector<1x32xf32>
    %96 = arith.addf %92, %95 : vector<1x32xf32>
    %97 = vector.extract_strided_slice %83 {offsets = [3, 0], sizes = [1, 64], strides = [1, 1]} : vector<5x64xf32> to vector<1x64xf32>
    %c192 = arith.constant 192 : index
    %c0_94 = arith.constant 0 : index
    %98 = vector.load %arg11[%c192, %c0_94] : memref<320x32xf32, #tpu.memory_space<vmem>>, vector<64x32xf32>
    %cst_95 = arith.constant dense<0.000000e+00> : vector<1x32xf32>
    %99 = tpu.matmul %97, %98, %cst_95 {dimension_numbers = #tpu.dot_dimension_numbers<[1], [0], [0], [1], [0, 0, 1, 1], [], []>} : vector<1x64xf32>, vector<64x32xf32>, vector<1x32xf32> -> vector<1x32xf32>
    %100 = arith.addf %96, %99 : vector<1x32xf32>
    %101 = vector.extract_strided_slice %83 {offsets = [4, 0], sizes = [1, 64], strides = [1, 1]} : vector<5x64xf32> to vector<1x64xf32>
    %c256 = arith.constant 256 : index
    %c0_96 = arith.constant 0 : index
    %102 = vector.load %arg11[%c256, %c0_96] : memref<320x32xf32, #tpu.memory_space<vmem>>, vector<64x32xf32>
    %cst_97 = arith.constant dense<0.000000e+00> : vector<1x32xf32>
    %103 = tpu.matmul %101, %102, %cst_97 {dimension_numbers = #tpu.dot_dimension_numbers<[1], [0], [0], [1], [0, 0, 1, 1], [], []>} : vector<1x64xf32>, vector<64x32xf32>, vector<1x32xf32> -> vector<1x32xf32>
    %104 = arith.addf %100, %103 : vector<1x32xf32>
    %c0_98 = arith.constant 0 : index
    %c0_99 = arith.constant 0 : index
    %105 = vector.load %arg13[%c0_98, %c0_99] : memref<32x384xf32, #tpu.memory_space<vmem>>, vector<32x384xf32>
    %cst_100 = arith.constant dense<0.000000e+00> : vector<1x384xf32>
    %106 = tpu.matmul %104, %105, %cst_100 {dimension_numbers = #tpu.dot_dimension_numbers<[1], [0], [0], [1], [0, 0, 1, 1], [], []>} : vector<1x32xf32>, vector<32x384xf32>, vector<1x384xf32> -> vector<1x384xf32>
    %c0_101 = arith.constant 0 : index
    %c0_102 = arith.constant 0 : index
    %107 = vector.load %arg14[%c0_101, %c0_102] : memref<1x384xf32, #tpu.memory_space<vmem>>, vector<1x384xf32>
    %108 = arith.addf %106, %107 : vector<1x384xf32>
    %c0_103 = arith.constant 0 : index
    %c0_104 = arith.constant 0 : index
    %109 = vector.load %arg15[%c0_103, %c0_104] : memref<8x384xf32, #tpu.memory_space<vmem>>, vector<1x384xf32>
    tpu.vector_store %arg15[%c0_103, %c0_104], %108 {strides = array<i32>} : memref<8x384xf32, #tpu.memory_space<vmem>>, vector<1x384xf32>,
    %c20 = arith.constant 20 : index
    %c0_105 = arith.constant 0 : index
    %110 = vector.load %arg1[%c20, %c0_105] : memref<40x16xf32, #tpu.memory_space<vmem>>, vector<20x16xf32>
    %cst_106 = arith.constant 0.000000e+00 : f32
    %111 = vector.broadcast %cst_106 : f32 to vector<10x64xf32>
    %c0_107 = arith.constant 0 : index
    %c0_108 = arith.constant 0 : index
    %c0_109 = arith.constant 0 : index
    %112 = vector.load %arg2[%c0_107, %c0_108, %c0_109] : memref<3x10x20xf32, #tpu.memory_space<vmem>>, vector<1x10x20xf32>
    %113 = vector.shape_cast %112 : vector<1x10x20xf32> to vector<10x20xf32>
    %cst_110 = arith.constant dense<0.000000e+00> : vector<10x16xf32>
    %114 = tpu.matmul %113, %110, %cst_110 {dimension_numbers = #tpu.dot_dimension_numbers<[1], [0], [0], [1], [0, 0, 1, 1], [], []>} : vector<10x20xf32>, vector<20x16xf32>, vector<10x16xf32> -> vector<10x16xf32>
    %c0_111 = arith.constant 0 : index
    %c0_112 = arith.constant 0 : index
    %c0_113 = arith.constant 0 : index
    %115 = vector.load %arg3[%c0_111, %c0_112, %c0_113] : memref<3x16x64xf32, #tpu.memory_space<vmem>>, vector<1x16x64xf32>
    %116 = vector.shape_cast %115 : vector<1x16x64xf32> to vector<16x64xf32>
    %cst_114 = arith.constant dense<0.000000e+00> : vector<10x64xf32>
    %117 = tpu.matmul %114, %116, %cst_114 {dimension_numbers = #tpu.dot_dimension_numbers<[1], [0], [0], [1], [0, 0, 1, 1], [], []>} : vector<10x16xf32>, vector<16x64xf32>, vector<10x64xf32> -> vector<10x64xf32>
    %118 = arith.addf %111, %117 : vector<10x64xf32>
    %c1_115 = arith.constant 1 : index
    %c0_116 = arith.constant 0 : index
    %c0_117 = arith.constant 0 : index
    %119 = vector.load %arg2[%c1_115, %c0_116, %c0_117] : memref<3x10x20xf32, #tpu.memory_space<vmem>>, vector<1x10x20xf32>
    %120 = vector.shape_cast %119 : vector<1x10x20xf32> to vector<10x20xf32>
    %cst_118 = arith.constant dense<0.000000e+00> : vector<10x16xf32>
    %121 = tpu.matmul %120, %110, %cst_118 {dimension_numbers = #tpu.dot_dimension_numbers<[1], [0], [0], [1], [0, 0, 1, 1], [], []>} : vector<10x20xf32>, vector<20x16xf32>, vector<10x16xf32> -> vector<10x16xf32>
    %c1_119 = arith.constant 1 : index
    %c0_120 = arith.constant 0 : index
    %c0_121 = arith.constant 0 : index
    %122 = vector.load %arg3[%c1_119, %c0_120, %c0_121] : memref<3x16x64xf32, #tpu.memory_space<vmem>>, vector<1x16x64xf32>
    %123 = vector.shape_cast %122 : vector<1x16x64xf32> to vector<16x64xf32>
    %cst_122 = arith.constant dense<0.000000e+00> : vector<10x64xf32>
    %124 = tpu.matmul %121, %123, %cst_122 {dimension_numbers = #tpu.dot_dimension_numbers<[1], [0], [0], [1], [0, 0, 1, 1], [], []>} : vector<10x16xf32>, vector<16x64xf32>, vector<10x64xf32> -> vector<10x64xf32>
    %125 = arith.addf %118, %124 : vector<10x64xf32>
    %c2_123 = arith.constant 2 : index
    %c0_124 = arith.constant 0 : index
    %c0_125 = arith.constant 0 : index
    %126 = vector.load %arg2[%c2_123, %c0_124, %c0_125] : memref<3x10x20xf32, #tpu.memory_space<vmem>>, vector<1x10x20xf32>
    %127 = vector.shape_cast %126 : vector<1x10x20xf32> to vector<10x20xf32>
    %cst_126 = arith.constant dense<0.000000e+00> : vector<10x16xf32>
    %128 = tpu.matmul %127, %110, %cst_126 {dimension_numbers = #tpu.dot_dimension_numbers<[1], [0], [0], [1], [0, 0, 1, 1], [], []>} : vector<10x20xf32>, vector<20x16xf32>, vector<10x16xf32> -> vector<10x16xf32>
    %c2_127 = arith.constant 2 : index
    %c0_128 = arith.constant 0 : index
    %c0_129 = arith.constant 0 : index
    %129 = vector.load %arg3[%c2_127, %c0_128, %c0_129] : memref<3x16x64xf32, #tpu.memory_space<vmem>>, vector<1x16x64xf32>
    %130 = vector.shape_cast %129 : vector<1x16x64xf32> to vector<16x64xf32>
    %cst_130 = arith.constant dense<0.000000e+00> : vector<10x64xf32>
    %131 = tpu.matmul %128, %130, %cst_130 {dimension_numbers = #tpu.dot_dimension_numbers<[1], [0], [0], [1], [0, 0, 1, 1], [], []>} : vector<10x16xf32>, vector<16x64xf32>, vector<10x64xf32> -> vector<10x64xf32>
    %132 = arith.addf %125, %131 : vector<10x64xf32>
    %c0_131 = arith.constant 0 : index
    %c0_132 = arith.constant 0 : index
    %133 = vector.load %arg4[%c0_131, %c0_132] : memref<1x64xf32, #tpu.memory_space<vmem>>, vector<1x64xf32>
    %134 = vector.broadcast %133 : vector<1x64xf32> to vector<10x64xf32>
    %135 = arith.addf %132, %134 : vector<10x64xf32>
    %cst_133 = arith.constant 0.000000e+00 : f32
    %136 = vector.broadcast %cst_133 : f32 to vector<10x64xf32>
    %137 = arith.maximumf %135, %136 : vector<10x64xf32>
    %cst_134 = arith.constant 0.000000e+00 : f32
    %138 = vector.broadcast %cst_134 : f32 to vector<5x64xf32>
    %c0_135 = arith.constant 0 : index
    %c0_136 = arith.constant 0 : index
    %c0_137 = arith.constant 0 : index
    %139 = vector.load %arg5[%c0_135, %c0_136, %c0_137] : memref<3x5x10xf32, #tpu.memory_space<vmem>>, vector<1x5x10xf32>
    %140 = vector.shape_cast %139 : vector<1x5x10xf32> to vector<5x10xf32>
    %cst_138 = arith.constant dense<0.000000e+00> : vector<5x64xf32>
    %141 = tpu.matmul %140, %137, %cst_138 {dimension_numbers = #tpu.dot_dimension_numbers<[1], [0], [0], [1], [0, 0, 1, 1], [], []>} : vector<5x10xf32>, vector<10x64xf32>, vector<5x64xf32> -> vector<5x64xf32>
    %c0_139 = arith.constant 0 : index
    %c0_140 = arith.constant 0 : index
    %c0_141 = arith.constant 0 : index
    %142 = vector.load %arg6[%c0_139, %c0_140, %c0_141] : memref<3x64x64xf32, #tpu.memory_space<vmem>>, vector<1x64x64xf32>
    %143 = vector.shape_cast %142 : vector<1x64x64xf32> to vector<64x64xf32>
    %cst_142 = arith.constant dense<0.000000e+00> : vector<5x64xf32>
    %144 = tpu.matmul %141, %143, %cst_142 {dimension_numbers = #tpu.dot_dimension_numbers<[1], [0], [0], [1], [0, 0, 1, 1], [], []>} : vector<5x64xf32>, vector<64x64xf32>, vector<5x64xf32> -> vector<5x64xf32>
    %145 = arith.addf %138, %144 : vector<5x64xf32>
    %c1_143 = arith.constant 1 : index
    %c0_144 = arith.constant 0 : index
    %c0_145 = arith.constant 0 : index
    %146 = vector.load %arg5[%c1_143, %c0_144, %c0_145] : memref<3x5x10xf32, #tpu.memory_space<vmem>>, vector<1x5x10xf32>
    %147 = vector.shape_cast %146 : vector<1x5x10xf32> to vector<5x10xf32>
    %cst_146 = arith.constant dense<0.000000e+00> : vector<5x64xf32>
    %148 = tpu.matmul %147, %137, %cst_146 {dimension_numbers = #tpu.dot_dimension_numbers<[1], [0], [0], [1], [0, 0, 1, 1], [], []>} : vector<5x10xf32>, vector<10x64xf32>, vector<5x64xf32> -> vector<5x64xf32>
    %c1_147 = arith.constant 1 : index
    %c0_148 = arith.constant 0 : index
    %c0_149 = arith.constant 0 : index
    %149 = vector.load %arg6[%c1_147, %c0_148, %c0_149] : memref<3x64x64xf32, #tpu.memory_space<vmem>>, vector<1x64x64xf32>
    %150 = vector.shape_cast %149 : vector<1x64x64xf32> to vector<64x64xf32>
    %cst_150 = arith.constant dense<0.000000e+00> : vector<5x64xf32>
    %151 = tpu.matmul %148, %150, %cst_150 {dimension_numbers = #tpu.dot_dimension_numbers<[1], [0], [0], [1], [0, 0, 1, 1], [], []>} : vector<5x64xf32>, vector<64x64xf32>, vector<5x64xf32> -> vector<5x64xf32>
    %152 = arith.addf %145, %151 : vector<5x64xf32>
    %c2_151 = arith.constant 2 : index
    %c0_152 = arith.constant 0 : index
    %c0_153 = arith.constant 0 : index
    %153 = vector.load %arg5[%c2_151, %c0_152, %c0_153] : memref<3x5x10xf32, #tpu.memory_space<vmem>>, vector<1x5x10xf32>
    %154 = vector.shape_cast %153 : vector<1x5x10xf32> to vector<5x10xf32>
    %cst_154 = arith.constant dense<0.000000e+00> : vector<5x64xf32>
    %155 = tpu.matmul %154, %137, %cst_154 {dimension_numbers = #tpu.dot_dimension_numbers<[1], [0], [0], [1], [0, 0, 1, 1], [], []>} : vector<5x10xf32>, vector<10x64xf32>, vector<5x64xf32> -> vector<5x64xf32>
    %c2_155 = arith.constant 2 : index
    %c0_156 = arith.constant 0 : index
    %c0_157 = arith.constant 0 : index
    %156 = vector.load %arg6[%c2_155, %c0_156, %c0_157] : memref<3x64x64xf32, #tpu.memory_space<vmem>>, vector<1x64x64xf32>
    %157 = vector.shape_cast %156 : vector<1x64x64xf32> to vector<64x64xf32>
    %cst_158 = arith.constant dense<0.000000e+00> : vector<5x64xf32>
    %158 = tpu.matmul %155, %157, %cst_158 {dimension_numbers = #tpu.dot_dimension_numbers<[1], [0], [0], [1], [0, 0, 1, 1], [], []>} : vector<5x64xf32>, vector<64x64xf32>, vector<5x64xf32> -> vector<5x64xf32>
    %159 = arith.addf %152, %158 : vector<5x64xf32>
    %c0_159 = arith.constant 0 : index
    %c0_160 = arith.constant 0 : index
    %160 = vector.load %arg7[%c0_159, %c0_160] : memref<1x64xf32, #tpu.memory_space<vmem>>, vector<1x64xf32>
    %161 = vector.broadcast %160 : vector<1x64xf32> to vector<5x64xf32>
    %162 = arith.addf %159, %161 : vector<5x64xf32>
    %cst_161 = arith.constant 0.000000e+00 : f32
    %163 = vector.broadcast %cst_161 : f32 to vector<5x64xf32>
    %164 = arith.maximumf %162, %163 : vector<5x64xf32>
    %cst_162 = arith.constant 0.000000e+00 : f32
    %165 = vector.broadcast %cst_162 : f32 to vector<5x64xf32>
    %c0_163 = arith.constant 0 : index
    %c0_164 = arith.constant 0 : index
    %c0_165 = arith.constant 0 : index
    %166 = vector.load %arg8[%c0_163, %c0_164, %c0_165] : memref<3x5x5xf32, #tpu.memory_space<vmem>>, vector<1x5x5xf32>
    %167 = vector.shape_cast %166 : vector<1x5x5xf32> to vector<5x5xf32>
    %cst_166 = arith.constant dense<0.000000e+00> : vector<5x64xf32>
    %168 = tpu.matmul %167, %164, %cst_166 {dimension_numbers = #tpu.dot_dimension_numbers<[1], [0], [0], [1], [0, 0, 1, 1], [], []>} : vector<5x5xf32>, vector<5x64xf32>, vector<5x64xf32> -> vector<5x64xf32>
    %c0_167 = arith.constant 0 : index
    %c0_168 = arith.constant 0 : index
    %c0_169 = arith.constant 0 : index
    %169 = vector.load %arg9[%c0_167, %c0_168, %c0_169] : memref<3x64x64xf32, #tpu.memory_space<vmem>>, vector<1x64x64xf32>
    %170 = vector.shape_cast %169 : vector<1x64x64xf32> to vector<64x64xf32>
    %cst_170 = arith.constant dense<0.000000e+00> : vector<5x64xf32>
    %171 = tpu.matmul %168, %170, %cst_170 {dimension_numbers = #tpu.dot_dimension_numbers<[1], [0], [0], [1], [0, 0, 1, 1], [], []>} : vector<5x64xf32>, vector<64x64xf32>, vector<5x64xf32> -> vector<5x64xf32>
    %172 = arith.addf %165, %171 : vector<5x64xf32>
    %c1_171 = arith.constant 1 : index
    %c0_172 = arith.constant 0 : index
    %c0_173 = arith.constant 0 : index
    %173 = vector.load %arg8[%c1_171, %c0_172, %c0_173] : memref<3x5x5xf32, #tpu.memory_space<vmem>>, vector<1x5x5xf32>
    %174 = vector.shape_cast %173 : vector<1x5x5xf32> to vector<5x5xf32>
    %cst_174 = arith.constant dense<0.000000e+00> : vector<5x64xf32>
    %175 = tpu.matmul %174, %164, %cst_174 {dimension_numbers = #tpu.dot_dimension_numbers<[1], [0], [0], [1], [0, 0, 1, 1], [], []>} : vector<5x5xf32>, vector<5x64xf32>, vector<5x64xf32> -> vector<5x64xf32>
    %c1_175 = arith.constant 1 : index
    %c0_176 = arith.constant 0 : index
    %c0_177 = arith.constant 0 : index
    %176 = vector.load %arg9[%c1_175, %c0_176, %c0_177] : memref<3x64x64xf32, #tpu.memory_space<vmem>>, vector<1x64x64xf32>
    %177 = vector.shape_cast %176 : vector<1x64x64xf32> to vector<64x64xf32>
    %cst_178 = arith.constant dense<0.000000e+00> : vector<5x64xf32>
    %178 = tpu.matmul %175, %177, %cst_178 {dimension_numbers = #tpu.dot_dimension_numbers<[1], [0], [0], [1], [0, 0, 1, 1], [], []>} : vector<5x64xf32>, vector<64x64xf32>, vector<5x64xf32> -> vector<5x64xf32>
    %179 = arith.addf %172, %178 : vector<5x64xf32>
    %c2_179 = arith.constant 2 : index
    %c0_180 = arith.constant 0 : index
    %c0_181 = arith.constant 0 : index
    %180 = vector.load %arg8[%c2_179, %c0_180, %c0_181] : memref<3x5x5xf32, #tpu.memory_space<vmem>>, vector<1x5x5xf32>
    %181 = vector.shape_cast %180 : vector<1x5x5xf32> to vector<5x5xf32>
    %cst_182 = arith.constant dense<0.000000e+00> : vector<5x64xf32>
    %182 = tpu.matmul %181, %164, %cst_182 {dimension_numbers = #tpu.dot_dimension_numbers<[1], [0], [0], [1], [0, 0, 1, 1], [], []>} : vector<5x5xf32>, vector<5x64xf32>, vector<5x64xf32> -> vector<5x64xf32>
    %c2_183 = arith.constant 2 : index
    %c0_184 = arith.constant 0 : index
    %c0_185 = arith.constant 0 : index
    %183 = vector.load %arg9[%c2_183, %c0_184, %c0_185] : memref<3x64x64xf32, #tpu.memory_space<vmem>>, vector<1x64x64xf32>
    %184 = vector.shape_cast %183 : vector<1x64x64xf32> to vector<64x64xf32>
    %cst_186 = arith.constant dense<0.000000e+00> : vector<5x64xf32>
    %185 = tpu.matmul %182, %184, %cst_186 {dimension_numbers = #tpu.dot_dimension_numbers<[1], [0], [0], [1], [0, 0, 1, 1], [], []>} : vector<5x64xf32>, vector<64x64xf32>, vector<5x64xf32> -> vector<5x64xf32>
    %186 = arith.addf %179, %185 : vector<5x64xf32>
    %c0_187 = arith.constant 0 : index
    %c0_188 = arith.constant 0 : index
    %187 = vector.load %arg10[%c0_187, %c0_188] : memref<1x64xf32, #tpu.memory_space<vmem>>, vector<1x64xf32>
    %188 = vector.broadcast %187 : vector<1x64xf32> to vector<5x64xf32>
    %189 = arith.addf %186, %188 : vector<5x64xf32>
    %cst_189 = arith.constant 0.000000e+00 : f32
    %190 = vector.broadcast %cst_189 : f32 to vector<5x64xf32>
    %191 = arith.maximumf %189, %190 : vector<5x64xf32>
    %c0_190 = arith.constant 0 : index
    %c0_191 = arith.constant 0 : index
    %192 = vector.load %arg12[%c0_190, %c0_191] : memref<1x32xf32, #tpu.memory_space<vmem>>, vector<1x32xf32>
    %193 = vector.extract_strided_slice %191 {offsets = [0, 0], sizes = [1, 64], strides = [1, 1]} : vector<5x64xf32> to vector<1x64xf32>
    %c0_192 = arith.constant 0 : index
    %c0_193 = arith.constant 0 : index
    %194 = vector.load %arg11[%c0_192, %c0_193] : memref<320x32xf32, #tpu.memory_space<vmem>>, vector<64x32xf32>
    %cst_194 = arith.constant dense<0.000000e+00> : vector<1x32xf32>
    %195 = tpu.matmul %193, %194, %cst_194 {dimension_numbers = #tpu.dot_dimension_numbers<[1], [0], [0], [1], [0, 0, 1, 1], [], []>} : vector<1x64xf32>, vector<64x32xf32>, vector<1x32xf32> -> vector<1x32xf32>
    %196 = arith.addf %192, %195 : vector<1x32xf32>
    %197 = vector.extract_strided_slice %191 {offsets = [1, 0], sizes = [1, 64], strides = [1, 1]} : vector<5x64xf32> to vector<1x64xf32>
    %c64_195 = arith.constant 64 : index
    %c0_196 = arith.constant 0 : index
    %198 = vector.load %arg11[%c64_195, %c0_196] : memref<320x32xf32, #tpu.memory_space<vmem>>, vector<64x32xf32>
    %cst_197 = arith.constant dense<0.000000e+00> : vector<1x32xf32>
    %199 = tpu.matmul %197, %198, %cst_197 {dimension_numbers = #tpu.dot_dimension_numbers<[1], [0], [0], [1], [0, 0, 1, 1], [], []>} : vector<1x64xf32>, vector<64x32xf32>, vector<1x32xf32> -> vector<1x32xf32>
    %200 = arith.addf %196, %199 : vector<1x32xf32>
    %201 = vector.extract_strided_slice %191 {offsets = [2, 0], sizes = [1, 64], strides = [1, 1]} : vector<5x64xf32> to vector<1x64xf32>
    %c128_198 = arith.constant 128 : index
    %c0_199 = arith.constant 0 : index
    %202 = vector.load %arg11[%c128_198, %c0_199] : memref<320x32xf32, #tpu.memory_space<vmem>>, vector<64x32xf32>
    %cst_200 = arith.constant dense<0.000000e+00> : vector<1x32xf32>
    %203 = tpu.matmul %201, %202, %cst_200 {dimension_numbers = #tpu.dot_dimension_numbers<[1], [0], [0], [1], [0, 0, 1, 1], [], []>} : vector<1x64xf32>, vector<64x32xf32>, vector<1x32xf32> -> vector<1x32xf32>
    %204 = arith.addf %200, %203 : vector<1x32xf32>
    %205 = vector.extract_strided_slice %191 {offsets = [3, 0], sizes = [1, 64], strides = [1, 1]} : vector<5x64xf32> to vector<1x64xf32>
    %c192_201 = arith.constant 192 : index
    %c0_202 = arith.constant 0 : index
    %206 = vector.load %arg11[%c192_201, %c0_202] : memref<320x32xf32, #tpu.memory_space<vmem>>, vector<64x32xf32>
    %cst_203 = arith.constant dense<0.000000e+00> : vector<1x32xf32>
    %207 = tpu.matmul %205, %206, %cst_203 {dimension_numbers = #tpu.dot_dimension_numbers<[1], [0], [0], [1], [0, 0, 1, 1], [], []>} : vector<1x64xf32>, vector<64x32xf32>, vector<1x32xf32> -> vector<1x32xf32>
    %208 = arith.addf %204, %207 : vector<1x32xf32>
    %209 = vector.extract_strided_slice %191 {offsets = [4, 0], sizes = [1, 64], strides = [1, 1]} : vector<5x64xf32> to vector<1x64xf32>
    %c256_204 = arith.constant 256 : index
    %c0_205 = arith.constant 0 : index
    %210 = vector.load %arg11[%c256_204, %c0_205] : memref<320x32xf32, #tpu.memory_space<vmem>>, vector<64x32xf32>
    %cst_206 = arith.constant dense<0.000000e+00> : vector<1x32xf32>
    %211 = tpu.matmul %209, %210, %cst_206 {dimension_numbers = #tpu.dot_dimension_numbers<[1], [0], [0], [1], [0, 0, 1, 1], [], []>} : vector<1x64xf32>, vector<64x32xf32>, vector<1x32xf32> -> vector<1x32xf32>
    %212 = arith.addf %208, %211 : vector<1x32xf32>
    %c0_207 = arith.constant 0 : index
    %c0_208 = arith.constant 0 : index
    %213 = vector.load %arg13[%c0_207, %c0_208] : memref<32x384xf32, #tpu.memory_space<vmem>>, vector<32x384xf32>
    %cst_209 = arith.constant dense<0.000000e+00> : vector<1x384xf32>
    %214 = tpu.matmul %212, %213, %cst_209 {dimension_numbers = #tpu.dot_dimension_numbers<[1], [0], [0], [1], [0, 0, 1, 1], [], []>} : vector<1x32xf32>, vector<32x384xf32>, vector<1x384xf32> -> vector<1x384xf32>
    %c0_210 = arith.constant 0 : index
    %c0_211 = arith.constant 0 : index
    %215 = vector.load %arg14[%c0_210, %c0_211] : memref<1x384xf32, #tpu.memory_space<vmem>>, vector<1x384xf32>
    %216 = arith.addf %214, %215 : vector<1x384xf32>
    %c1_212 = arith.constant 1 : index
    %c0_213 = arith.constant 0 : index
    %217 = vector.load %arg15[%c1_212, %c0_213] : memref<8x384xf32, #tpu.memory_space<vmem>>, vector<1x384xf32>
    tpu.vector_store %arg15[%c1_212, %c0_213], %216 {strides = array<i32>} : memref<8x384xf32, #tpu.memory_space<vmem>>, vector<1x384xf32>,
    return
  }
  func.func @transform_0(%arg0: i32) -> (i32, i32) {
    %c0_i32 = arith.constant 0 : i32
    %c0_i32_0 = arith.constant 0 : i32
    %c0_i32_1 = arith.constant 0 : i32
    return %c0_i32, %c0_i32_0 : i32, i32
  }
  func.func @transform_1(%arg0: i32) -> (i32, i32, i32) {
    %c0_i32 = arith.constant 0 : i32
    %c0_i32_0 = arith.constant 0 : i32
    %c0_i32_1 = arith.constant 0 : i32
    %c0_i32_2 = arith.constant 0 : i32
    return %c0_i32, %c0_i32_0, %c0_i32_1 : i32, i32, i32
  }
  func.func @transform_2(%arg0: i32) -> (i32, i32, i32) {
    %c0_i32 = arith.constant 0 : i32
    %c0_i32_0 = arith.constant 0 : i32
    %c0_i32_1 = arith.constant 0 : i32
    %c0_i32_2 = arith.constant 0 : i32
    return %c0_i32, %c0_i32_0, %c0_i32_1 : i32, i32, i32
  }
  func.func @transform_3(%arg0: i32) -> (i32, i32) {
    %c0_i32 = arith.constant 0 : i32
    %c0_i32_0 = arith.constant 0 : i32
    %c0_i32_1 = arith.constant 0 : i32
    return %c0_i32, %c0_i32_0 : i32, i32
  }
  func.func @transform_4(%arg0: i32) -> (i32, i32, i32) {
    %c0_i32 = arith.constant 0 : i32
    %c0_i32_0 = arith.constant 0 : i32
    %c0_i32_1 = arith.constant 0 : i32
    %c0_i32_2 = arith.constant 0 : i32
    return %c0_i32, %c0_i32_0, %c0_i32_1 : i32, i32, i32
  }
  func.func @transform_5(%arg0: i32) -> (i32, i32, i32) {
    %c0_i32 = arith.constant 0 : i32
    %c0_i32_0 = arith.constant 0 : i32
    %c0_i32_1 = arith.constant 0 : i32
    %c0_i32_2 = arith.constant 0 : i32
    return %c0_i32, %c0_i32_0, %c0_i32_1 : i32, i32, i32
  }
  func.func @transform_6(%arg0: i32) -> (i32, i32) {
    %c0_i32 = arith.constant 0 : i32
    %c0_i32_0 = arith.constant 0 : i32
    %c0_i32_1 = arith.constant 0 : i32
    return %c0_i32, %c0_i32_0 : i32, i32
  }
  func.func @transform_7(%arg0: i32) -> (i32, i32, i32) {
    %c0_i32 = arith.constant 0 : i32
    %c0_i32_0 = arith.constant 0 : i32
    %c0_i32_1 = arith.constant 0 : i32
    %c0_i32_2 = arith.constant 0 : i32
    return %c0_i32, %c0_i32_0, %c0_i32_1 : i32, i32, i32
  }
  func.func @transform_8(%arg0: i32) -> (i32, i32, i32) {
    %c0_i32 = arith.constant 0 : i32
    %c0_i32_0 = arith.constant 0 : i32
    %c0_i32_1 = arith.constant 0 : i32
    %c0_i32_2 = arith.constant 0 : i32
    return %c0_i32, %c0_i32_0, %c0_i32_1 : i32, i32, i32
  }
  func.func @transform_9(%arg0: i32) -> (i32, i32) {
    %c0_i32 = arith.constant 0 : i32
    %c0_i32_0 = arith.constant 0 : i32
    %c0_i32_1 = arith.constant 0 : i32
    return %c0_i32, %c0_i32_0 : i32, i32
  }
  func.func @transform_10(%arg0: i32) -> (i32, i32) {
    %c0_i32 = arith.constant 0 : i32
    %c0_i32_0 = arith.constant 0 : i32
    %c0_i32_1 = arith.constant 0 : i32
    return %c0_i32, %c0_i32_0 : i32, i32
  }
  func.func @transform_11(%arg0: i32) -> (i32, i32) {
    %c0_i32 = arith.constant 0 : i32
    %c0_i32_0 = arith.constant 0 : i32
    %c0_i32_1 = arith.constant 0 : i32
    return %c0_i32, %c0_i32_0 : i32, i32
  }
  func.func @transform_12(%arg0: i32) -> (i32, i32) {
    %c0_i32 = arith.constant 0 : i32
    %c0_i32_0 = arith.constant 0 : i32
    %c0_i32_1 = arith.constant 0 : i32
    return %c0_i32, %c0_i32_0 : i32, i32
  }
  func.func @transform_13(%arg0: i32) -> (i32, i32) {
    %c0_i32 = arith.constant 0 : i32
    %c0_i32_0 = arith.constant 0 : i32
    %c0_i32_1 = arith.constant 0 : i32
    return %c0_i32, %c0_i32_0 : i32, i32
  }
  func.func @transform_14(%arg0: i32) -> (i32, i32) {
    %c0_i32 = arith.constant 0 : i32
    %c0_i32_0 = arith.constant 0 : i32
    %c0_i32_1 = arith.constant 0 : i32
    return %c0_i32, %c0_i32_0 : i32, i32
  }
}

</mosaic_0001>

<llo_original>
// kernel: forward.1
$region0: #{forward.1}
  #allocation0 [shape = 'u32[]', space=smem, size = 0x4, offset = 0x4, fixed_abs, tag = 'smem constant byte address 0x4 - core index']
  #allocation1 [shape = 'u32[144,128]{1,0:T(1,128)}', space=vmem, size = 0x12000, scoped, tag = 'internal scratch']
  %s0 = inlined_call_operand.vmem [shape: f32[40,16], index: 0, kind: input, shape index: {}]
  %s1 = inlined_call_operand.vmem [shape: f32[3,10,20], index: 1, kind: input, shape index: {}]
  %s2 = inlined_call_operand.vmem [shape: f32[3,16,64], index: 2, kind: input, shape index: {}]
  %s3 = inlined_call_operand.vmem [shape: f32[1,64], index: 3, kind: input, shape index: {}]
  %s4 = inlined_call_operand.vmem [shape: f32[3,5,10], index: 4, kind: input, shape index: {}]
  %s5 = inlined_call_operand.vmem [shape: f32[3,64,64], index: 5, kind: input, shape index: {}]
  %s6 = inlined_call_operand.vmem [shape: f32[1,64], index: 6, kind: input, shape index: {}]
  %s7 = inlined_call_operand.vmem [shape: f32[3,5,5], index: 7, kind: input, shape index: {}]
  %s8 = inlined_call_operand.vmem [shape: f32[3,64,64], index: 8, kind: input, shape index: {}]
  %s9 = inlined_call_operand.vmem [shape: f32[1,64], index: 9, kind: input, shape index: {}]
  %s10 = inlined_call_operand.vmem [shape: f32[320,32], index: 10, kind: input, shape index: {}]
  %s11 = inlined_call_operand.vmem [shape: f32[1,32], index: 11, kind: input, shape index: {}]
  %s12 = inlined_call_operand.vmem [shape: f32[32,384], index: 12, kind: input, shape index: {}]
  %s13 = inlined_call_operand.vmem [shape: f32[1,384], index: 13, kind: input, shape index: {}]
  %s14 = inlined_call_operand.vmem [shape: f32[8,384], index: 14, kind: output, shape index: {}]
  %s15 = sld [smem:[#allocation0]]
  $region66: #{forward.1} parent=0
    _
  %s17 = ssub.s32 1, %s15
  %s18 = scalar_select 0, %s17, %s15
  // Predicated region
  $region2: #{forward.1} parent=0 // pred_check
    _
  $region3: #{forward.1} parent=0 // pred_check_branch
    %20 = sbr.rel (0) target = $region5
  $region4: #{forward.1} parent=0 // pred_region
    _
  $region5: #{forward.1} parent=0 // pred_fallthru
    _
  // Predicated region
  $region6: #{forward.1} parent=0 // pred_check
    _
  $region7: #{forward.1} parent=0 // pred_check_branch
    %22 = sbr.rel (0) target = $region9
  $region8: #{forward.1} parent=0 // pred_region
    _
  $region9: #{forward.1} parent=0 // pred_fallthru
    _
  // Predicated region
  $region10: #{forward.1} parent=0 // pred_check
    _
  $region11: #{forward.1} parent=0 // pred_check_branch
    %24 = sbr.rel (0) target = $region13
  $region12: #{forward.1} parent=0 // pred_region
    _
  $region13: #{forward.1} parent=0 // pred_fallthru
    _
  // Predicated region
  $region14: #{forward.1} parent=0 // pred_check
    _
  $region15: #{forward.1} parent=0 // pred_check_branch
    %26 = sbr.rel (0) target = $region17
  $region16: #{forward.1} parent=0 // pred_region
    _
  $region17: #{forward.1} parent=0 // pred_fallthru
    _
  // Predicated region
  $region18: #{forward.1} parent=0 // pred_check
    _
  $region19: #{forward.1} parent=0 // pred_check_branch
    %28 = sbr.rel (0) target = $region21
  $region20: #{forward.1} parent=0 // pred_region
    _
  $region21: #{forward.1} parent=0 // pred_fallthru
    _
  // Predicated region
  $region22: #{forward.1} parent=0 // pred_check
    _
  $region23: #{forward.1} parent=0 // pred_check_branch
    %30 = sbr.rel (0) target = $region25
  $region24: #{forward.1} parent=0 // pred_region
    _
  $region25: #{forward.1} parent=0 // pred_fallthru
    _
  // Predicated region
  $region26: #{forward.1} parent=0 // pred_check
    _
  $region27: #{forward.1} parent=0 // pred_check_branch
    %32 = sbr.rel (0) target = $region29
  $region28: #{forward.1} parent=0 // pred_region
    _
  $region29: #{forward.1} parent=0 // pred_fallthru
    _
  // Predicated region
  $region30: #{forward.1} parent=0 // pred_check
    _
  $region31: #{forward.1} parent=0 // pred_check_branch
    %34 = sbr.rel (0) target = $region33
  $region32: #{forward.1} parent=0 // pred_region
    _
  $region33: #{forward.1} parent=0 // pred_fallthru
    _
  // Predicated region
  $region34: #{forward.1} parent=0 // pred_check
    _
  $region35: #{forward.1} parent=0 // pred_check_branch
    %36 = sbr.rel (0) target = $region37
  $region36: #{forward.1} parent=0 // pred_region
    _
  $region37: #{forward.1} parent=0 // pred_fallthru
    _
  // Predicated region
  $region38: #{forward.1} parent=0 // pred_check
    _
  $region39: #{forward.1} parent=0 // pred_check_branch
    %38 = sbr.rel (0) target = $region41
  $region40: #{forward.1} parent=0 // pred_region
    _
  $region41: #{forward.1} parent=0 // pred_fallthru
    _
  // Predicated region
  $region42: #{forward.1} parent=0 // pred_check
    _
  $region43: #{forward.1} parent=0 // pred_check_branch
    %40 = sbr.rel (0) target = $region45
  $region44: #{forward.1} parent=0 // pred_region
    _
  $region45: #{forward.1} parent=0 // pred_fallthru
    _
  // Predicated region
  $region46: #{forward.1} parent=0 // pred_check
    _
  $region47: #{forward.1} parent=0 // pred_check_branch
    %42 = sbr.rel (0) target = $region49
  $region48: #{forward.1} parent=0 // pred_region
    _
  $region49: #{forward.1} parent=0 // pred_fallthru
    _
  // Predicated region
  $region50: #{forward.1} parent=0 // pred_check
    _
  $region51: #{forward.1} parent=0 // pred_check_branch
    %44 = sbr.rel (0) target = $region53
  $region52: #{forward.1} parent=0 // pred_region
    _
  $region53: #{forward.1} parent=0 // pred_fallthru
    _
  // Predicated region
  $region54: #{forward.1} parent=0 // pred_check
    _
  $region55: #{forward.1} parent=0 // pred_check_branch
    %46 = sbr.rel (0) target = $region57
  $region56: #{forward.1} parent=0 // pred_region
    _
  $region57: #{forward.1} parent=0 // pred_fallthru
    _
  %47 = vst [vmem:[%s14] sm:$0xff] 0.0
  %48 = vst [vmem:[%s14 + $0x8] sm:$0xff] 0.0
  %49 = vst [vmem:[%s14 + $0x10] sm:$0xff] 0.0
  %v50 = vld [vmem:[%s0] sm:$0xff]
  %v51 = vld [vmem:[%s0 + $0x8] sm:$0xff]
  %v52 = vld [vmem:[%s0 + $0x10] sm:$0xf]
  %v53 = vld [vmem:[%s1] sm:$0xff]
  %v54 = vld [vmem:[%s1 + $0x8] sm:$0x3]
  %vm55 = vcmask 162816
  %v57 = vsel %vm55, %v53, 0
  %v60 = vsel %vm55, %v54, 0
  %vm62 = vcmask 1043456
  %v64 = vsel %vm62, %v52, 0
  %66 = vmatprep.subr.mxu0 0.0
  %67 = vmatpush1.msra.mxu0 %v50
  %68 = vmatprep.subr.mxu0 0.0
  %69 = vmatpush1.msra.mxu0 %v51
  %70 = vmatprep.subr.mxu0 0.0
  %71 = vmatpush1.msra.mxu0 %v64
  %72 = vmatprep.subr.mxu0 0.0
  %73 = vmatpush1.msra.mxu0 0.0
  %74 = vmatprep.subr.mxu0 0.0
  %75 = vmatpush1.msra.mxu0 0.0
  %76 = vmatprep.subr.mxu0 0.0
  %77 = vmatpush1.msra.mxu0 0.0
  %78 = vmatprep.subr.mxu0 0.0
  %79 = vmatpush1.msra.mxu0 0.0
  %80 = vmatprep.subr.mxu0 0.0
  %81 = vmatpush1.msra.mxu0 0.0
  %82 = vmatprep.subr.mxu0 0.0
  %83 = vmatpush1.msra.mxu0 0.0
  %84 = vmatprep.subr.mxu0 0.0
  %85 = vmatpush1.msra.mxu0 0.0
  %86 = vmatprep.subr.mxu0 0.0
  %87 = vmatpush1.msra.mxu0 0.0
  %88 = vmatprep.subr.mxu0 0.0
  %89 = vmatpush1.msra.mxu0 0.0
  %90 = vmatprep.subr.mxu0 0.0
  %91 = vmatpush1.msra.mxu0 0.0
  %92 = vmatprep.subr.mxu0 0.0
  %93 = vmatpush1.msra.mxu0 0.0
  %94 = vmatprep.subr.mxu0 0.0
  %95 = vmatpush1.msra.mxu0 0.0
  %96 = vmatprep.subr.mxu0 0.0
  %97 = vmatpush1.msra.mxu0 0.0
  %98 = vmatprep.subr.mxu0 0.0
  %99 = vmatpush1.msra.mxu0 0.0
  %100 = vmatprep.subr.mxu0 0.0
  %101 = vmatpush1.msra.mxu0 0.0
  %102 = vmatprep.subr.mxu0 0.0
  %103 = vmatpush1.msra.mxu0 0.0
  %104 = vmatprep.subr.mxu0 0.0
  %105 = vmatpush1.msra.mxu0 0.0
  %106 = vmatprep.subr.mxu0 0.0
  %107 = vmatpush1.msra.mxu0 0.0
  %108 = vmatprep.subr.mxu0 0.0
  %109 = vmatpush1.msra.mxu0 0.0
  %110 = vmatprep.subr.mxu0 0.0
  %111 = vmatpush1.msra.mxu0 0.0
  %112 = vmatprep.subr.mxu0 0.0
  %113 = vmatpush1.msra.mxu0 0.0
  %114 = vmatprep.subr.mxu0 0.0
  %115 = vmatpush1.msra.mxu0 0.0
  %116 = vmatprep.subr.mxu0 0.0
  %117 = vmatpush1.msra.mxu0 0.0
  %118 = vmatprep.subr.mxu0 0.0
  %119 = vmatpush1.msra.mxu0 0.0
  %120 = vmatprep.subr.mxu0 0.0
  %121 = vmatpush1.msra.mxu0 0.0
  %122 = vmatprep.subr.mxu0 0.0
  %123 = vmatpush1.msra.mxu0 0.0
  %124 = vmatprep.subr.mxu0 0.0
  %125 = vmatpush1.msra.mxu0 0.0
  %126 = vmatprep.subr.mxu0 0.0
  %127 = vmatpush1.msra.mxu0 0.0
  %128 = vmatprep.subr.mxu0 0.0
  %129 = vmatpush1.msra.mxu0 0.0
  %130 = vmatprep.mubr.f32.mxu0 0.0
  %131 = vmatmul.mubr.f32.gmra.mrb[0].mxu0 %v57
  %v132 = vpop.f32.mrb[0].mxu0
  %v133 = vadd.f32 0.0, %v132
  %v134 = vpop.f32.mrb[0].mxu0
  %135 = vmatprep.mubr.f32.mxu0 0.0
  %136 = vmatmul.mubr.f32.gmra.mrb[0].mxu0 %v60
  %v137 = vpop.f32.mrb[0].mxu0
  %v138 = vadd.f32 0.0, %v137
  %v139 = vpop.f32.mrb[0].mxu0
  %140 = vdwg.mxu0
  %v141 = vld [vmem:[%s2] sm:$0xff]
  %v142 = vld [vmem:[%s2 + $0x8] sm:$0xff]
  %s143 = scalar_lea.vmem %s1, 16
  %v144 = vld [vmem:[%s143] sm:$0xff]
  %v145 = vld [vmem:[%s143 + $0x8] sm:$0x3]
  %v147 = vsel %vm55, %v144, 0
  %v150 = vsel %vm55, %v145, 0
  %152 = vmatprep.subr.mxu0 0.0
  %153 = vmatpush1.msra.mxu0 %v50
  %154 = vmatprep.subr.mxu0 0.0
  %155 = vmatpush1.msra.mxu0 %v51
  %156 = vmatprep.subr.mxu0 0.0
  %157 = vmatpush1.msra.mxu0 %v64
  %158 = vmatprep.subr.mxu0 0.0
  %159 = vmatpush1.msra.mxu0 0.0
  %160 = vmatprep.subr.mxu0 0.0
  %161 = vmatpush1.msra.mxu0 0.0
  %162 = vmatprep.subr.mxu0 0.0
  %163 = vmatpush1.msra.mxu0 0.0
  %164 = vmatprep.subr.mxu0 0.0
  %165 = vmatpush1.msra.mxu0 0.0
  %166 = vmatprep.subr.mxu0 0.0
  %167 = vmatpush1.msra.mxu0 0.0
  %168 = vmatprep.subr.mxu0 0.0
  %169 = vmatpush1.msra.mxu0 0.0
  %170 = vmatprep.subr.mxu0 0.0
  %171 = vmatpush1.msra.mxu0 0.0
  %172 = vmatprep.subr.mxu0 0.0
  %173 = vmatpush1.msra.mxu0 0.0
  %174 = vmatprep.subr.mxu0 0.0
  %175 = vmatpush1.msra.mxu0 0.0
  %176 = vmatprep.subr.mxu0 0.0
  %177 = vmatpush1.msra.mxu0 0.0
  %178 = vmatprep.subr.mxu0 0.0
  %179 = vmatpush1.msra.mxu0 0.0
  %180 = vmatprep.subr.mxu0 0.0
  %181 = vmatpush1.msra.mxu0 0.0
  %182 = vmatprep.subr.mxu0 0.0
  %183 = vmatpush1.msra.mxu0 0.0
  %184 = vmatprep.subr.mxu0 0.0
  %185 = vmatpush1.msra.mxu0 0.0
  %186 = vmatprep.subr.mxu0 0.0
  %187 = vmatpush1.msra.mxu0 0.0
  %188 = vmatprep.subr.mxu0 0.0
  %189 = vmatpush1.msra.mxu0 0.0
  %190 = vmatprep.subr.mxu0 0.0
  %191 = vmatpush1.msra.mxu0 0.0
  %192 = vmatprep.subr.mxu0 0.0
  %193 = vmatpush1.msra.mxu0 0.0
  %194 = vmatprep.subr.mxu0 0.0
  %195 = vmatpush1.msra.mxu0 0.0
  %196 = vmatprep.subr.mxu0 0.0
  %197 = vmatpush1.msra.mxu0 0.0
  %198 = vmatprep.subr.mxu0 0.0
  %199 = vmatpush1.msra.mxu0 0.0
  %200 = vmatprep.subr.mxu0 0.0
  %201 = vmatpush1.msra.mxu0 0.0
  %202 = vmatprep.subr.mxu0 0.0
  %203 = vmatpush1.msra.mxu0 0.0
  %204 = vmatprep.subr.mxu0 0.0
  %205 = vmatpush1.msra.mxu0 0.0
  %206 = vmatprep.subr.mxu0 0.0
  %207 = vmatpush1.msra.mxu0 0.0
  %208 = vmatprep.subr.mxu0 0.0
  %209 = vmatpush1.msra.mxu0 0.0
  %210 = vmatprep.subr.mxu0 0.0
  %211 = vmatpush1.msra.mxu0 0.0
  %212 = vmatprep.subr.mxu0 0.0
  %213 = vmatpush1.msra.mxu0 0.0
  %214 = vmatprep.subr.mxu0 0.0
  %215 = vmatpush1.msra.mxu0 0.0
  %216 = vmatprep.mubr.f32.mxu0 0.0
  %217 = vmatmul.mubr.f32.gmra.mrb[0].mxu0 %v147
  %v218 = vpop.f32.mrb[0].mxu0
  %v219 = vadd.f32 0.0, %v218
  %v220 = vpop.f32.mrb[0].mxu0
  %221 = vmatprep.mubr.f32.mxu0 0.0
  %222 = vmatmul.mubr.f32.gmra.mrb[0].mxu0 %v150
  %v223 = vpop.f32.mrb[0].mxu0
  %v224 = vadd.f32 0.0, %v223
  %v225 = vpop.f32.mrb[0].mxu0
  %226 = vdwg.mxu0
  %s227 = scalar_lea.vmem %s2, 16
  %v228 = vld [vmem:[%s227] sm:$0xff]
  %v229 = vld [vmem:[%s227 + $0x8] sm:$0xff]
  %vm230 = vcmask 130048
  %v232 = vsel %vm230, %v219, 0
  %v235 = vsel %vm230, %v224, 0
  %237 = vmatprep.subr.mxu0 0.0
  %238 = vmatpush1.msra.mxu0 %v228
  %239 = vmatprep.subr.mxu0 0.0
  %240 = vmatpush1.msra.mxu0 %v229
  %241 = vmatprep.subr.mxu0 0.0
  %242 = vmatpush1.msra.mxu0 0.0
  %243 = vmatprep.subr.mxu0 0.0
  %244 = vmatpush1.msra.mxu0 0.0
  %245 = vmatprep.subr.mxu0 0.0
  %246 = vmatpush1.msra.mxu0 0.0
  %247 = vmatprep.subr.mxu0 0.0
  %248 = vmatpush1.msra.mxu0 0.0
  %249 = vmatprep.subr.mxu0 0.0
  %250 = vmatpush1.msra.mxu0 0.0
  %251 = vmatprep.subr.mxu0 0.0
  %252 = vmatpush1.msra.mxu0 0.0
  %253 = vmatprep.subr.mxu0 0.0
  %254 = vmatpush1.msra.mxu0 0.0
  %255 = vmatprep.subr.mxu0 0.0
  %256 = vmatpush1.msra.mxu0 0.0
  %257 = vmatprep.subr.mxu0 0.0
  %258 = vmatpush1.msra.mxu0 0.0
  %259 = vmatprep.subr.mxu0 0.0
  %260 = vmatpush1.msra.mxu0 0.0
  %261 = vmatprep.subr.mxu0 0.0
  %262 = vmatpush1.msra.mxu0 0.0
  %263 = vmatprep.subr.mxu0 0.0
  %264 = vmatpush1.msra.mxu0 0.0
  %265 = vmatprep.subr.mxu0 0.0
  %266 = vmatpush1.msra.mxu0 0.0
  %267 = vmatprep.subr.mxu0 0.0
  %268 = vmatpush1.msra.mxu0 0.0
  %269 = vmatprep.subr.mxu0 0.0
  %270 = vmatpush1.msra.mxu0 0.0
  %271 = vmatprep.subr.mxu0 0.0
  %272 = vmatpush1.msra.mxu0 0.0
  %273 = vmatprep.subr.mxu0 0.0
  %274 = vmatpush1.msra.mxu0 0.0
  %275 = vmatprep.subr.mxu0 0.0
  %276 = vmatpush1.msra.mxu0 0.0
  %277 = vmatprep.subr.mxu0 0.0
  %278 = vmatpush1.msra.mxu0 0.0
  %279 = vmatprep.subr.mxu0 0.0
  %280 = vmatpush1.msra.mxu0 0.0
  %281 = vmatprep.subr.mxu0 0.0
  %282 = vmatpush1.msra.mxu0 0.0
  %283 = vmatprep.subr.mxu0 0.0
  %284 = vmatpush1.msra.mxu0 0.0
  %285 = vmatprep.subr.mxu0 0.0
  %286 = vmatpush1.msra.mxu0 0.0
  %287 = vmatprep.subr.mxu0 0.0
  %288 = vmatpush1.msra.mxu0 0.0
  %289 = vmatprep.subr.mxu0 0.0
  %290 = vmatpush1.msra.mxu0 0.0
  %291 = vmatprep.subr.mxu0 0.0
  %292 = vmatpush1.msra.mxu0 0.0
  %293 = vmatprep.subr.mxu0 0.0
  %294 = vmatpush1.msra.mxu0 0.0
  %295 = vmatprep.subr.mxu0 0.0
  %296 = vmatpush1.msra.mxu0 0.0
  %297 = vmatprep.subr.mxu0 0.0
  %298 = vmatpush1.msra.mxu0 0.0
  %299 = vmatprep.subr.mxu0 0.0
  %300 = vmatpush1.msra.mxu0 0.0
  %301 = vmatprep.mubr.f32.mxu0 0.0
  %302 = vmatmul.mubr.f32.gmra.mrb[0].mxu0 %v232
  %v303 = vpop.f32.mrb[0].mxu0
  %v304 = vadd.f32 0.0, %v303
  %v305 = vpop.f32.mrb[0].mxu0
  %306 = vmatprep.mubr.f32.mxu0 0.0
  %307 = vmatmul.mubr.f32.gmra.mrb[0].mxu0 %v235
  %v308 = vpop.f32.mrb[0].mxu0
  %v309 = vadd.f32 0.0, %v308
  %v310 = vpop.f32.mrb[0].mxu0
  %311 = vdwg.mxu0
  %v313 = vsel %vm230, %v133, 0
  %v316 = vsel %vm230, %v138, 0
  %318 = vmatprep.subr.mxu0 0.0
  %319 = vmatpush1.msra.mxu0 %v141
  %320 = vmatprep.subr.mxu0 0.0
  %321 = vmatpush1.msra.mxu0 %v142
  %322 = vmatprep.subr.mxu0 0.0
  %323 = vmatpush1.msra.mxu0 0.0
  %324 = vmatprep.subr.mxu0 0.0
  %325 = vmatpush1.msra.mxu0 0.0
  %326 = vmatprep.subr.mxu0 0.0
  %327 = vmatpush1.msra.mxu0 0.0
  %328 = vmatprep.subr.mxu0 0.0
  %329 = vmatpush1.msra.mxu0 0.0
  %330 = vmatprep.subr.mxu0 0.0
  %331 = vmatpush1.msra.mxu0 0.0
  %332 = vmatprep.subr.mxu0 0.0
  %333 = vmatpush1.msra.mxu0 0.0
  %334 = vmatprep.subr.mxu0 0.0
  %335 = vmatpush1.msra.mxu0 0.0
  %336 = vmatprep.subr.mxu0 0.0
  %337 = vmatpush1.msra.mxu0 0.0
  %338 = vmatprep.subr.mxu0 0.0
  %339 = vmatpush1.msra.mxu0 0.0
  %340 = vmatprep.subr.mxu0 0.0
  %341 = vmatpush1.msra.mxu0 0.0
  %342 = vmatprep.subr.mxu0 0.0
  %343 = vmatpush1.msra.mxu0 0.0
  %344 = vmatprep.subr.mxu0 0.0
  %345 = vmatpush1.msra.mxu0 0.0
  %346 = vmatprep.subr.mxu0 0.0
  %347 = vmatpush1.msra.mxu0 0.0
  %348 = vmatprep.subr.mxu0 0.0
  %349 = vmatpush1.msra.mxu0 0.0
  %350 = vmatprep.subr.mxu0 0.0
  %351 = vmatpush1.msra.mxu0 0.0
  %352 = vmatprep.subr.mxu0 0.0
  %353 = vmatpush1.msra.mxu0 0.0
  %354 = vmatprep.subr.mxu0 0.0
  %355 = vmatpush1.msra.mxu0 0.0
  %356 = vmatprep.subr.mxu0 0.0
  %357 = vmatpush1.msra.mxu0 0.0
  %358 = vmatprep.subr.mxu0 0.0
  %359 = vmatpush1.msra.mxu0 0.0
  %360 = vmatprep.subr.mxu0 0.0
  %361 = vmatpush1.msra.mxu0 0.0
  %362 = vmatprep.subr.mxu0 0.0
  %363 = vmatpush1.msra.mxu0 0.0
  %364 = vmatprep.subr.mxu0 0.0
  %365 = vmatpush1.msra.mxu0 0.0
  %366 = vmatprep.subr.mxu0 0.0
  %367 = vmatpush1.msra.mxu0 0.0
  %368 = vmatprep.subr.mxu0 0.0
  %369 = vmatpush1.msra.mxu0 0.0
  %370 = vmatprep.subr.mxu0 0.0
  %371 = vmatpush1.msra.mxu0 0.0
  %372 = vmatprep.subr.mxu0 0.0
  %373 = vmatpush1.msra.mxu0 0.0
  %374 = vmatprep.subr.mxu0 0.0
  %375 = vmatpush1.msra.mxu0 0.0
  %376 = vmatprep.subr.mxu0 0.0
  %377 = vmatpush1.msra.mxu0 0.0
  %378 = vmatprep.subr.mxu0 0.0
  %379 = vmatpush1.msra.mxu0 0.0
  %380 = vmatprep.subr.mxu0 0.0
  %381 = vmatpush1.msra.mxu0 0.0
  %382 = vmatprep.mubr.f32.mxu0 0.0
  %383 = vmatmul.mubr.f32.gmra.mrb[0].mxu0 %v313
  %v384 = vpop.f32.mrb[0].mxu0
  %v385 = vadd.f32 %v304, %v384
  %v386 = vpop.f32.mrb[0].mxu0
  %387 = vmatprep.mubr.f32.mxu0 0.0
  %388 = vmatmul.mubr.f32.gmra.mrb[0].mxu0 %v316
  %v389 = vpop.f32.mrb[0].mxu0
  %v390 = vadd.f32 %v309, %v389
  %v391 = vpop.f32.mrb[0].mxu0
  %392 = vdwg.mxu0
  %s393 = scalar_lea.vmem %s1, 32
  %v394 = vld [vmem:[%s393] sm:$0xff]
  %v395 = vld [vmem:[%s393 + $0x8] sm:$0x3]
  %v397 = vsel %vm55, %v394, 0
  %v400 = vsel %vm55, %v395, 0
  %402 = vmatprep.subr.mxu0 0.0
  %403 = vmatpush1.msra.mxu0 %v50
  %404 = vmatprep.subr.mxu0 0.0
  %405 = vmatpush1.msra.mxu0 %v51
  %406 = vmatprep.subr.mxu0 0.0
  %407 = vmatpush1.msra.mxu0 %v64
  %408 = vmatprep.subr.mxu0 0.0
  %409 = vmatpush1.msra.mxu0 0.0
  %410 = vmatprep.subr.mxu0 0.0
  %411 = vmatpush1.msra.mxu0 0.0
  %412 = vmatprep.subr.mxu0 0.0
  %413 = vmatpush1.msra.mxu0 0.0
  %414 = vmatprep.subr.mxu0 0.0
  %415 = vmatpush1.msra.mxu0 0.0
  %416 = vmatprep.subr.mxu0 0.0
  %417 = vmatpush1.msra.mxu0 0.0
  %418 = vmatprep.subr.mxu0 0.0
  %419 = vmatpush1.msra.mxu0 0.0
  %420 = vmatprep.subr.mxu0 0.0
  %421 = vmatpush1.msra.mxu0 0.0
  %422 = vmatprep.subr.mxu0 0.0
  %423 = vmatpush1.msra.mxu0 0.0
  %424 = vmatprep.subr.mxu0 0.0
  %425 = vmatpush1.msra.mxu0 0.0
  %426 = vmatprep.subr.mxu0 0.0
  %427 = vmatpush1.msra.mxu0 0.0
  %428 = vmatprep.subr.mxu0 0.0
  %429 = vmatpush1.msra.mxu0 0.0
  %430 = vmatprep.subr.mxu0 0.0
  %431 = vmatpush1.msra.mxu0 0.0
  %432 = vmatprep.subr.mxu0 0.0
  %433 = vmatpush1.msra.mxu0 0.0
  %434 = vmatprep.subr.mxu0 0.0
  %435 = vmatpush1.msra.mxu0 0.0
  %436 = vmatprep.subr.mxu0 0.0
  %437 = vmatpush1.msra.mxu0 0.0
  %438 = vmatprep.subr.mxu0 0.0
  %439 = vmatpush1.msra.mxu0 0.0
  %440 = vmatprep.subr.mxu0 0.0
  %441 = vmatpush1.msra.mxu0 0.0
  %442 = vmatprep.subr.mxu0 0.0
  %443 = vmatpush1.msra.mxu0 0.0
  %444 = vmatprep.subr.mxu0 0.0
  %445 = vmatpush1.msra.mxu0 0.0
  %446 = vmatprep.subr.mxu0 0.0
  %447 = vmatpush1.msra.mxu0 0.0
  %448 = vmatprep.subr.mxu0 0.0
  %449 = vmatpush1.msra.mxu0 0.0
  %450 = vmatprep.subr.mxu0 0.0
  %451 = vmatpush1.msra.mxu0 0.0
  %452 = vmatprep.subr.mxu0 0.0
  %453 = vmatpush1.msra.mxu0 0.0
  %454 = vmatprep.subr.mxu0 0.0
  %455 = vmatpush1.msra.mxu0 0.0
  %456 = vmatprep.subr.mxu0 0.0
  %457 = vmatpush1.msra.mxu0 0.0
  %458 = vmatprep.subr.mxu0 0.0
  %459 = vmatpush1.msra.mxu0 0.0
  %460 = vmatprep.subr.mxu0 0.0
  %461 = vmatpush1.msra.mxu0 0.0
  %462 = vmatprep.subr.mxu0 0.0
  %463 = vmatpush1.msra.mxu0 0.0
  %464 = vmatprep.subr.mxu0 0.0
  %465 = vmatpush1.msra.mxu0 0.0
  %466 = vmatprep.mubr.f32.mxu0 0.0
  %467 = vmatmul.mubr.f32.gmra.mrb[0].mxu0 %v397
  %v468 = vpop.f32.mrb[0].mxu0
  %v469 = vadd.f32 0.0, %v468
  %v470 = vpop.f32.mrb[0].mxu0
  %471 = vmatprep.mubr.f32.mxu0 0.0
  %472 = vmatmul.mubr.f32.gmra.mrb[0].mxu0 %v400
  %v473 = vpop.f32.mrb[0].mxu0
  %v474 = vadd.f32 0.0, %v473
  %v475 = vpop.f32.mrb[0].mxu0
  %476 = vdwg.mxu0
  %s477 = scalar_lea.vmem %s2, 32
  %v478 = vld [vmem:[%s477] sm:$0xff]
  %v479 = vld [vmem:[%s477 + $0x8] sm:$0xff]
  %v481 = vsel %vm230, %v469, 0
  %v484 = vsel %vm230, %v474, 0
  %486 = vmatprep.subr.mxu0 0.0
  %487 = vmatpush1.msra.mxu0 %v478
  %488 = vmatprep.subr.mxu0 0.0
  %489 = vmatpush1.msra.mxu0 %v479
  %490 = vmatprep.subr.mxu0 0.0
  %491 = vmatpush1.msra.mxu0 0.0
  %492 = vmatprep.subr.mxu0 0.0
  %493 = vmatpush1.msra.mxu0 0.0
  %494 = vmatprep.subr.mxu0 0.0
  %495 = vmatpush1.msra.mxu0 0.0
  %496 = vmatprep.subr.mxu0 0.0
  %497 = vmatpush1.msra.mxu0 0.0
  %498 = vmatprep.subr.mxu0 0.0
  %499 = vmatpush1.msra.mxu0 0.0
  %500 = vmatprep.subr.mxu0 0.0
  %501 = vmatpush1.msra.mxu0 0.0
  %502 = vmatprep.subr.mxu0 0.0
  %503 = vmatpush1.msra.mxu0 0.0
  %504 = vmatprep.subr.mxu0 0.0
  %505 = vmatpush1.msra.mxu0 0.0
  %506 = vmatprep.subr.mxu0 0.0
  %507 = vmatpush1.msra.mxu0 0.0
  %508 = vmatprep.subr.mxu0 0.0
  %509 = vmatpush1.msra.mxu0 0.0
  %510 = vmatprep.subr.mxu0 0.0
  %511 = vmatpush1.msra.mxu0 0.0
  %512 = vmatprep.subr.mxu0 0.0
  %513 = vmatpush1.msra.mxu0 0.0
  %514 = vmatprep.subr.mxu0 0.0
  %515 = vmatpush1.msra.mxu0 0.0
  %516 = vmatprep.subr.mxu0 0.0
  %517 = vmatpush1.msra.mxu0 0.0
  %518 = vmatprep.subr.mxu0 0.0
  %519 = vmatpush1.msra.mxu0 0.0
  %520 = vmatprep.subr.mxu0 0.0
  %521 = vmatpush1.msra.mxu0 0.0
  %522 = vmatprep.subr.mxu0 0.0
  %523 = vmatpush1.msra.mxu0 0.0
  %524 = vmatprep.subr.mxu0 0.0
  %525 = vmatpush1.msra.mxu0 0.0
  %526 = vmatprep.subr.mxu0 0.0
  %527 = vmatpush1.msra.mxu0 0.0
  %528 = vmatprep.subr.mxu0 0.0
  %529 = vmatpush1.msra.mxu0 0.0
  %530 = vmatprep.subr.mxu0 0.0
  %531 = vmatpush1.msra.mxu0 0.0
  %532 = vmatprep.subr.mxu0 0.0
  %533 = vmatpush1.msra.mxu0 0.0
  %534 = vmatprep.subr.mxu0 0.0
  %535 = vmatpush1.msra.mxu0 0.0
  %536 = vmatprep.subr.mxu0 0.0
  %537 = vmatpush1.msra.mxu0 0.0
  %538 = vmatprep.subr.mxu0 0.0
  %539 = vmatpush1.msra.mxu0 0.0
  %540 = vmatprep.subr.mxu0 0.0
  %541 = vmatpush1.msra.mxu0 0.0
  %542 = vmatprep.subr.mxu0 0.0
  %543 = vmatpush1.msra.mxu0 0.0
  %544 = vmatprep.subr.mxu0 0.0
  %545 = vmatpush1.msra.mxu0 0.0
  %546 = vmatprep.subr.mxu0 0.0
  %547 = vmatpush1.msra.mxu0 0.0
  %548 = vmatprep.subr.mxu0 0.0
  %549 = vmatpush1.msra.mxu0 0.0
  %550 = vmatprep.mubr.f32.mxu0 0.0
  %551 = vmatmul.mubr.f32.gmra.mrb[0].mxu0 %v481
  %v552 = vpop.f32.mrb[0].mxu0
  %v553 = vadd.f32 0.0, %v552
  %v554 = vpop.f32.mrb[0].mxu0
  %555 = vmatprep.mubr.f32.mxu0 0.0
  %556 = vmatmul.mubr.f32.gmra.mrb[0].mxu0 %v484
  %v557 = vpop.f32.mrb[0].mxu0
  %v558 = vadd.f32 0.0, %v557
  %v559 = vpop.f32.mrb[0].mxu0
  %560 = vdwg.mxu0
  %v561 = vadd.f32 %v385, %v553
  %v562 = vadd.f32 %v390, %v558
  %v563 = vld [vmem:[%s3] sm:$0x1]
  %v565 = vlaneseq
  %v566 = vshrl.u32 %v565, 7
  %v567 = vsub.s32 0, %v566
  %v568 = vrot.slane %v563, %v567
  %v570 = vadd.f32 %v561, %v568
  %v571 = vadd.f32 %v562, %v568
  %v572 = vmax.f32 %v570, 0.0
  %v573 = vmax.f32 %v571, 0.0
  %v574 = vld [vmem:[%s4] sm:$0x1f]
  %vm575 = vcmask 80896
  %v577 = vsel %vm575, %v574, 0
  %vm579 = vcmask 1041408
  %v581 = vsel %vm579, %v573, 0
  %583 = vmatprep.subr.mxu0 0.0
  %584 = vmatpush1.msra.mxu0 %v572
  %585 = vmatprep.subr.mxu0 0.0
  %586 = vmatpush1.msra.mxu0 %v581
  %587 = vmatprep.subr.mxu0 0.0
  %588 = vmatpush1.msra.mxu0 0.0
  %589 = vmatprep.subr.mxu0 0.0
  %590 = vmatpush1.msra.mxu0 0.0
  %591 = vmatprep.subr.mxu0 0.0
  %592 = vmatpush1.msra.mxu0 0.0
  %593 = vmatprep.subr.mxu0 0.0
  %594 = vmatpush1.msra.mxu0 0.0
  %595 = vmatprep.subr.mxu0 0.0
  %596 = vmatpush1.msra.mxu0 0.0
  %597 = vmatprep.subr.mxu0 0.0
  %598 = vmatpush1.msra.mxu0 0.0
  %599 = vmatprep.subr.mxu0 0.0
  %600 = vmatpush1.msra.mxu0 0.0
  %601 = vmatprep.subr.mxu0 0.0
  %602 = vmatpush1.msra.mxu0 0.0
  %603 = vmatprep.subr.mxu0 0.0
  %604 = vmatpush1.msra.mxu0 0.0
  %605 = vmatprep.subr.mxu0 0.0
  %606 = vmatpush1.msra.mxu0 0.0
  %607 = vmatprep.subr.mxu0 0.0
  %608 = vmatpush1.msra.mxu0 0.0
  %609 = vmatprep.subr.mxu0 0.0
  %610 = vmatpush1.msra.mxu0 0.0
  %611 = vmatprep.subr.mxu0 0.0
  %612 = vmatpush1.msra.mxu0 0.0
  %613 = vmatprep.subr.mxu0 0.0
  %614 = vmatpush1.msra.mxu0 0.0
  %615 = vmatprep.subr.mxu0 0.0
  %616 = vmatpush1.msra.mxu0 0.0
  %617 = vmatprep.subr.mxu0 0.0
  %618 = vmatpush1.msra.mxu0 0.0
  %619 = vmatprep.subr.mxu0 0.0
  %620 = vmatpush1.msra.mxu0 0.0
  %621 = vmatprep.subr.mxu0 0.0
  %622 = vmatpush1.msra.mxu0 0.0
  %623 = vmatprep.subr.mxu0 0.0
  %624 = vmatpush1.msra.mxu0 0.0
  %625 = vmatprep.subr.mxu0 0.0
  %626 = vmatpush1.msra.mxu0 0.0
  %627 = vmatprep.subr.mxu0 0.0
  %628 = vmatpush1.msra.mxu0 0.0
  %629 = vmatprep.subr.mxu0 0.0
  %630 = vmatpush1.msra.mxu0 0.0
  %631 = vmatprep.subr.mxu0 0.0
  %632 = vmatpush1.msra.mxu0 0.0
  %633 = vmatprep.subr.mxu0 0.0
  %634 = vmatpush1.msra.mxu0 0.0
  %635 = vmatprep.subr.mxu0 0.0
  %636 = vmatpush1.msra.mxu0 0.0
  %637 = vmatprep.subr.mxu0 0.0
  %638 = vmatpush1.msra.mxu0 0.0
  %639 = vmatprep.subr.mxu0 0.0
  %640 = vmatpush1.msra.mxu0 0.0
  %641 = vmatprep.subr.mxu0 0.0
  %642 = vmatpush1.msra.mxu0 0.0
  %643 = vmatprep.subr.mxu0 0.0
  %644 = vmatpush1.msra.mxu0 0.0
  %645 = vmatprep.subr.mxu0 0.0
  %646 = vmatpush1.msra.mxu0 0.0
  %647 = vmatprep.mubr.f32.mxu0 0.0
  %648 = vmatmul.mubr.f32.gmra.mrb[0].mxu0 %v577
  %v649 = vpop.f32.mrb[0].mxu0
  %v650 = vadd.f32 0.0, %v649
  %v651 = vpop.f32.mrb[0].mxu0
  %652 = vdwg.mxu0
  %v653 = vld [vmem:[%s5] sm:$0xff]
  %v654 = vld [vmem:[%s5 + $0x8] sm:$0xff]
  %v655 = vld [vmem:[%s5 + $0x10] sm:$0xff]
  %v656 = vld [vmem:[%s5 + $0x18] sm:$0xff]
  %v657 = vld [vmem:[%s5 + $0x20] sm:$0xff]
  %v658 = vld [vmem:[%s5 + $0x28] sm:$0xff]
  %v659 = vld [vmem:[%s5 + $0x30] sm:$0xff]
  %v660 = vld [vmem:[%s5 + $0x38] sm:$0xff]
  %s661 = scalar_lea.vmem %s4, 8
  %v662 = vld [vmem:[%s661] sm:$0x1f]
  %v664 = vsel %vm575, %v662, 0
  %666 = vmatprep.subr.mxu0 0.0
  %667 = vmatpush1.msra.mxu0 %v572
  %668 = vmatprep.subr.mxu0 0.0
  %669 = vmatpush1.msra.mxu0 %v581
  %670 = vmatprep.subr.mxu0 0.0
  %671 = vmatpush1.msra.mxu0 0.0
  %672 = vmatprep.subr.mxu0 0.0
  %673 = vmatpush1.msra.mxu0 0.0
  %674 = vmatprep.subr.mxu0 0.0
  %675 = vmatpush1.msra.mxu0 0.0
  %676 = vmatprep.subr.mxu0 0.0
  %677 = vmatpush1.msra.mxu0 0.0
  %678 = vmatprep.subr.mxu0 0.0
  %679 = vmatpush1.msra.mxu0 0.0
  %680 = vmatprep.subr.mxu0 0.0
  %681 = vmatpush1.msra.mxu0 0.0
  %682 = vmatprep.subr.mxu0 0.0
  %683 = vmatpush1.msra.mxu0 0.0
  %684 = vmatprep.subr.mxu0 0.0
  %685 = vmatpush1.msra.mxu0 0.0
  %686 = vmatprep.subr.mxu0 0.0
  %687 = vmatpush1.msra.mxu0 0.0
  %688 = vmatprep.subr.mxu0 0.0
  %689 = vmatpush1.msra.mxu0 0.0
  %690 = vmatprep.subr.mxu0 0.0
  %691 = vmatpush1.msra.mxu0 0.0
  %692 = vmatprep.subr.mxu0 0.0
  %693 = vmatpush1.msra.mxu0 0.0
  %694 = vmatprep.subr.mxu0 0.0
  %695 = vmatpush1.msra.mxu0 0.0
  %696 = vmatprep.subr.mxu0 0.0
  %697 = vmatpush1.msra.mxu0 0.0
  %698 = vmatprep.subr.mxu0 0.0
  %699 = vmatpush1.msra.mxu0 0.0
  %700 = vmatprep.subr.mxu0 0.0
  %701 = vmatpush1.msra.mxu0 0.0
  %702 = vmatprep.subr.mxu0 0.0
  %703 = vmatpush1.msra.mxu0 0.0
  %704 = vmatprep.subr.mxu0 0.0
  %705 = vmatpush1.msra.mxu0 0.0
  %706 = vmatprep.subr.mxu0 0.0
  %707 = vmatpush1.msra.mxu0 0.0
  %708 = vmatprep.subr.mxu0 0.0
  %709 = vmatpush1.msra.mxu0 0.0
  %710 = vmatprep.subr.mxu0 0.0
  %711 = vmatpush1.msra.mxu0 0.0
  %712 = vmatprep.subr.mxu0 0.0
  %713 = vmatpush1.msra.mxu0 0.0
  %714 = vmatprep.subr.mxu0 0.0
  %715 = vmatpush1.msra.mxu0 0.0
  %716 = vmatprep.subr.mxu0 0.0
  %717 = vmatpush1.msra.mxu0 0.0
  %718 = vmatprep.subr.mxu0 0.0
  %719 = vmatpush1.msra.mxu0 0.0
  %720 = vmatprep.subr.mxu0 0.0
  %721 = vmatpush1.msra.mxu0 0.0
  %722 = vmatprep.subr.mxu0 0.0
  %723 = vmatpush1.msra.mxu0 0.0
  %724 = vmatprep.subr.mxu0 0.0
  %725 = vmatpush1.msra.mxu0 0.0
  %726 = vmatprep.subr.mxu0 0.0
  %727 = vmatpush1.msra.mxu0 0.0
  %728 = vmatprep.subr.mxu0 0.0
  %729 = vmatpush1.msra.mxu0 0.0
  %730 = vmatprep.mubr.f32.mxu0 0.0
  %731 = vmatmul.mubr.f32.gmra.mrb[0].mxu0 %v664
  %v732 = vpop.f32.mrb[0].mxu0
  %v733 = vadd.f32 0.0, %v732
  %v734 = vpop.f32.mrb[0].mxu0
  %735 = vdwg.mxu0
  %s736 = scalar_lea.vmem %s5, 64
  %v737 = vld [vmem:[%s736] sm:$0xff]
  %v738 = vld [vmem:[%s736 + $0x8] sm:$0xff]
  %v739 = vld [vmem:[%s736 + $0x10] sm:$0xff]
  %v740 = vld [vmem:[%s736 + $0x18] sm:$0xff]
  %v741 = vld [vmem:[%s736 + $0x20] sm:$0xff]
  %v742 = vld [vmem:[%s736 + $0x28] sm:$0xff]
  %v743 = vld [vmem:[%s736 + $0x30] sm:$0xff]
  %v744 = vld [vmem:[%s736 + $0x38] sm:$0xff]
  %vm745 = vcmask 523264
  %v747 = vsel %vm745, %v733, 0
  %749 = vmatprep.subr.mxu0 0.0
  %750 = vmatpush1.msra.mxu0 %v737
  %751 = vmatprep.subr.mxu0 0.0
  %752 = vmatpush1.msra.mxu0 %v738
  %753 = vmatprep.subr.mxu0 0.0
  %754 = vmatpush1.msra.mxu0 %v739
  %755 = vmatprep.subr.mxu0 0.0
  %756 = vmatpush1.msra.mxu0 %v740
  %757 = vmatprep.subr.mxu0 0.0
  %758 = vmatpush1.msra.mxu0 %v741
  %759 = vmatprep.subr.mxu0 0.0
  %760 = vmatpush1.msra.mxu0 %v742
  %761 = vmatprep.subr.mxu0 0.0
  %762 = vmatpush1.msra.mxu0 %v743
  %763 = vmatprep.subr.mxu0 0.0
  %764 = vmatpush1.msra.mxu0 %v744
  %765 = vmatprep.subr.mxu0 0.0
  %766 = vmatpush1.msra.mxu0 0.0
  %767 = vmatprep.subr.mxu0 0.0
  %768 = vmatpush1.msra.mxu0 0.0
  %769 = vmatprep.subr.mxu0 0.0
  %770 = vmatpush1.msra.mxu0 0.0
  %771 = vmatprep.subr.mxu0 0.0
  %772 = vmatpush1.msra.mxu0 0.0
  %773 = vmatprep.subr.mxu0 0.0
  %774 = vmatpush1.msra.mxu0 0.0
  %775 = vmatprep.subr.mxu0 0.0
  %776 = vmatpush1.msra.mxu0 0.0
  %777 = vmatprep.subr.mxu0 0.0
  %778 = vmatpush1.msra.mxu0 0.0
  %779 = vmatprep.subr.mxu0 0.0
  %780 = vmatpush1.msra.mxu0 0.0
  %781 = vmatprep.subr.mxu0 0.0
  %782 = vmatpush1.msra.mxu0 0.0
  %783 = vmatprep.subr.mxu0 0.0
  %784 = vmatpush1.msra.mxu0 0.0
  %785 = vmatprep.subr.mxu0 0.0
  %786 = vmatpush1.msra.mxu0 0.0
  %787 = vmatprep.subr.mxu0 0.0
  %788 = vmatpush1.msra.mxu0 0.0
  %789 = vmatprep.subr.mxu0 0.0
  %790 = vmatpush1.msra.mxu0 0.0
  %791 = vmatprep.subr.mxu0 0.0
  %792 = vmatpush1.msra.mxu0 0.0
  %793 = vmatprep.subr.mxu0 0.0
  %794 = vmatpush1.msra.mxu0 0.0
  %795 = vmatprep.subr.mxu0 0.0
  %796 = vmatpush1.msra.mxu0 0.0
  %797 = vmatprep.subr.mxu0 0.0
  %798 = vmatpush1.msra.mxu0 0.0
  %799 = vmatprep.subr.mxu0 0.0
  %800 = vmatpush1.msra.mxu0 0.0
  %801 = vmatprep.subr.mxu0 0.0
  %802 = vmatpush1.msra.mxu0 0.0
  %803 = vmatprep.subr.mxu0 0.0
  %804 = vmatpush1.msra.mxu0 0.0
  %805 = vmatprep.subr.mxu0 0.0
  %806 = vmatpush1.msra.mxu0 0.0
  %807 = vmatprep.subr.mxu0 0.0
  %808 = vmatpush1.msra.mxu0 0.0
  %809 = vmatprep.subr.mxu0 0.0
  %810 = vmatpush1.msra.mxu0 0.0
  %811 = vmatprep.subr.mxu0 0.0
  %812 = vmatpush1.msra.mxu0 0.0
  %813 = vmatprep.mubr.f32.mxu0 0.0
  %814 = vmatmul.mubr.f32.gmra.mrb[0].mxu0 %v747
  %v815 = vpop.f32.mrb[0].mxu0
  %v816 = vadd.f32 0.0, %v815
  %v817 = vpop.f32.mrb[0].mxu0
  %818 = vdwg.mxu0
  %v820 = vsel %vm745, %v650, 0
  %822 = vmatprep.subr.mxu0 0.0
  %823 = vmatpush1.msra.mxu0 %v653
  %824 = vmatprep.subr.mxu0 0.0
  %825 = vmatpush1.msra.mxu0 %v654
  %826 = vmatprep.subr.mxu0 0.0
  %827 = vmatpush1.msra.mxu0 %v655
  %828 = vmatprep.subr.mxu0 0.0
  %829 = vmatpush1.msra.mxu0 %v656
  %830 = vmatprep.subr.mxu0 0.0
  %831 = vmatpush1.msra.mxu0 %v657
  %832 = vmatprep.subr.mxu0 0.0
  %833 = vmatpush1.msra.mxu0 %v658
  %834 = vmatprep.subr.mxu0 0.0
  %835 = vmatpush1.msra.mxu0 %v659
  %836 = vmatprep.subr.mxu0 0.0
  %837 = vmatpush1.msra.mxu0 %v660
  %838 = vmatprep.subr.mxu0 0.0
  %839 = vmatpush1.msra.mxu0 0.0
  %840 = vmatprep.subr.mxu0 0.0
  %841 = vmatpush1.msra.mxu0 0.0
  %842 = vmatprep.subr.mxu0 0.0
  %843 = vmatpush1.msra.mxu0 0.0
  %844 = vmatprep.subr.mxu0 0.0
  %845 = vmatpush1.msra.mxu0 0.0
  %846 = vmatprep.subr.mxu0 0.0
  %847 = vmatpush1.msra.mxu0 0.0
  %848 = vmatprep.subr.mxu0 0.0
  %849 = vmatpush1.msra.mxu0 0.0
  %850 = vmatprep.subr.mxu0 0.0
  %851 = vmatpush1.msra.mxu0 0.0
  %852 = vmatprep.subr.mxu0 0.0
  %853 = vmatpush1.msra.mxu0 0.0
  %854 = vmatprep.subr.mxu0 0.0
  %855 = vmatpush1.msra.mxu0 0.0
  %856 = vmatprep.subr.mxu0 0.0
  %857 = vmatpush1.msra.mxu0 0.0
  %858 = vmatprep.subr.mxu0 0.0
  %859 = vmatpush1.msra.mxu0 0.0
  %860 = vmatprep.subr.mxu0 0.0
  %861 = vmatpush1.msra.mxu0 0.0
  %862 = vmatprep.subr.mxu0 0.0
  %863 = vmatpush1.msra.mxu0 0.0
  %864 = vmatprep.subr.mxu0 0.0
  %865 = vmatpush1.msra.mxu0 0.0
  %866 = vmatprep.subr.mxu0 0.0
  %867 = vmatpush1.msra.mxu0 0.0
  %868 = vmatprep.subr.mxu0 0.0
  %869 = vmatpush1.msra.mxu0 0.0
  %870 = vmatprep.subr.mxu0 0.0
  %871 = vmatpush1.msra.mxu0 0.0
  %872 = vmatprep.subr.mxu0 0.0
  %873 = vmatpush1.msra.mxu0 0.0
  %874 = vmatprep.subr.mxu0 0.0
  %875 = vmatpush1.msra.mxu0 0.0
  %876 = vmatprep.subr.mxu0 0.0
  %877 = vmatpush1.msra.mxu0 0.0
  %878 = vmatprep.subr.mxu0 0.0
  %879 = vmatpush1.msra.mxu0 0.0
  %880 = vmatprep.subr.mxu0 0.0
  %881 = vmatpush1.msra.mxu0 0.0
  %882 = vmatprep.subr.mxu0 0.0
  %883 = vmatpush1.msra.mxu0 0.0
  %884 = vmatprep.subr.mxu0 0.0
  %885 = vmatpush1.msra.mxu0 0.0
  %886 = vmatprep.mubr.f32.mxu0 0.0
  %887 = vmatmul.mubr.f32.gmra.mrb[0].mxu0 %v820
  %v888 = vpop.f32.mrb[0].mxu0
  %v889 = vadd.f32 %v816, %v888
  %v890 = vpop.f32.mrb[0].mxu0
  %891 = vdwg.mxu0
  %s892 = scalar_lea.vmem %s4, 16
  %v893 = vld [vmem:[%s892] sm:$0x1f]
  %v895 = vsel %vm575, %v893, 0
  %897 = vmatprep.subr.mxu0 0.0
  %898 = vmatpush1.msra.mxu0 %v572
  %899 = vmatprep.subr.mxu0 0.0
  %900 = vmatpush1.msra.mxu0 %v581
  %901 = vmatprep.subr.mxu0 0.0
  %902 = vmatpush1.msra.mxu0 0.0
  %903 = vmatprep.subr.mxu0 0.0
  %904 = vmatpush1.msra.mxu0 0.0
  %905 = vmatprep.subr.mxu0 0.0
  %906 = vmatpush1.msra.mxu0 0.0
  %907 = vmatprep.subr.mxu0 0.0
  %908 = vmatpush1.msra.mxu0 0.0
  %909 = vmatprep.subr.mxu0 0.0
  %910 = vmatpush1.msra.mxu0 0.0
  %911 = vmatprep.subr.mxu0 0.0
  %912 = vmatpush1.msra.mxu0 0.0
  %913 = vmatprep.subr.mxu0 0.0
  %914 = vmatpush1.msra.mxu0 0.0
  %915 = vmatprep.subr.mxu0 0.0
  %916 = vmatpush1.msra.mxu0 0.0
  %917 = vmatprep.subr.mxu0 0.0
  %918 = vmatpush1.msra.mxu0 0.0
  %919 = vmatprep.subr.mxu0 0.0
  %920 = vmatpush1.msra.mxu0 0.0
  %921 = vmatprep.subr.mxu0 0.0
  %922 = vmatpush1.msra.mxu0 0.0
  %923 = vmatprep.subr.mxu0 0.0
  %924 = vmatpush1.msra.mxu0 0.0
  %925 = vmatprep.subr.mxu0 0.0
  %926 = vmatpush1.msra.mxu0 0.0
  %927 = vmatprep.subr.mxu0 0.0
  %928 = vmatpush1.msra.mxu0 0.0
  %929 = vmatprep.subr.mxu0 0.0
  %930 = vmatpush1.msra.mxu0 0.0
  %931 = vmatprep.subr.mxu0 0.0
  %932 = vmatpush1.msra.mxu0 0.0
  %933 = vmatprep.subr.mxu0 0.0
  %934 = vmatpush1.msra.mxu0 0.0
  %935 = vmatprep.subr.mxu0 0.0
  %936 = vmatpush1.msra.mxu0 0.0
  %937 = vmatprep.subr.mxu0 0.0
  %938 = vmatpush1.msra.mxu0 0.0
  %939 = vmatprep.subr.mxu0 0.0
  %940 = vmatpush1.msra.mxu0 0.0
  %941 = vmatprep.subr.mxu0 0.0
  %942 = vmatpush1.msra.mxu0 0.0
  %943 = vmatprep.subr.mxu0 0.0
  %944 = vmatpush1.msra.mxu0 0.0
  %945 = vmatprep.subr.mxu0 0.0
  %946 = vmatpush1.msra.mxu0 0.0
  %947 = vmatprep.subr.mxu0 0.0
  %948 = vmatpush1.msra.mxu0 0.0
  %949 = vmatprep.subr.mxu0 0.0
  %950 = vmatpush1.msra.mxu0 0.0
  %951 = vmatprep.subr.mxu0 0.0
  %952 = vmatpush1.msra.mxu0 0.0
  %953 = vmatprep.subr.mxu0 0.0
  %954 = vmatpush1.msra.mxu0 0.0
  %955 = vmatprep.subr.mxu0 0.0
  %956 = vmatpush1.msra.mxu0 0.0
  %957 = vmatprep.subr.mxu0 0.0
  %958 = vmatpush1.msra.mxu0 0.0
  %959 = vmatprep.subr.mxu0 0.0
  %960 = vmatpush1.msra.mxu0 0.0
  %961 = vmatprep.mubr.f32.mxu0 0.0
  %962 = vmatmul.mubr.f32.gmra.mrb[0].mxu0 %v895
  %v963 = vpop.f32.mrb[0].mxu0
  %v964 = vadd.f32 0.0, %v963
  %v965 = vpop.f32.mrb[0].mxu0
  %966 = vdwg.mxu0
  %s967 = scalar_lea.vmem %s5, 128
  %v968 = vld [vmem:[%s967] sm:$0xff]
  %v969 = vld [vmem:[%s967 + $0x8] sm:$0xff]
  %v970 = vld [vmem:[%s967 + $0x10] sm:$0xff]
  %v971 = vld [vmem:[%s967 + $0x18] sm:$0xff]
  %v972 = vld [vmem:[%s967 + $0x20] sm:$0xff]
  %v973 = vld [vmem:[%s967 + $0x28] sm:$0xff]
  %v974 = vld [vmem:[%s967 + $0x30] sm:$0xff]
  %v975 = vld [vmem:[%s967 + $0x38] sm:$0xff]
  %v977 = vsel %vm745, %v964, 0
  %979 = vmatprep.subr.mxu0 0.0
  %980 = vmatpush1.msra.mxu0 %v968
  %981 = vmatprep.subr.mxu0 0.0
  %982 = vmatpush1.msra.mxu0 %v969
  %983 = vmatprep.subr.mxu0 0.0
  %984 = vmatpush1.msra.mxu0 %v970
  %985 = vmatprep.subr.mxu0 0.0
  %986 = vmatpush1.msra.mxu0 %v971
  %987 = vmatprep.subr.mxu0 0.0
  %988 = vmatpush1.msra.mxu0 %v972
  %989 = vmatprep.subr.mxu0 0.0
  %990 = vmatpush1.msra.mxu0 %v973
  %991 = vmatprep.subr.mxu0 0.0
  %992 = vmatpush1.msra.mxu0 %v974
  %993 = vmatprep.subr.mxu0 0.0
  %994 = vmatpush1.msra.mxu0 %v975
  %995 = vmatprep.subr.mxu0 0.0
  %996 = vmatpush1.msra.mxu0 0.0
  %997 = vmatprep.subr.mxu0 0.0
  %998 = vmatpush1.msra.mxu0 0.0
  %999 = vmatprep.subr.mxu0 0.0
  %1000 = vmatpush1.msra.mxu0 0.0
  %1001 = vmatprep.subr.mxu0 0.0
  %1002 = vmatpush1.msra.mxu0 0.0
  %1003 = vmatprep.subr.mxu0 0.0
  %1004 = vmatpush1.msra.mxu0 0.0
  %1005 = vmatprep.subr.mxu0 0.0
  %1006 = vmatpush1.msra.mxu0 0.0
  %1007 = vmatprep.subr.mxu0 0.0
  %1008 = vmatpush1.msra.mxu0 0.0
  %1009 = vmatprep.subr.mxu0 0.0
  %1010 = vmatpush1.msra.mxu0 0.0
  %1011 = vmatprep.subr.mxu0 0.0
  %1012 = vmatpush1.msra.mxu0 0.0
  %1013 = vmatprep.subr.mxu0 0.0
  %1014 = vmatpush1.msra.mxu0 0.0
  %1015 = vmatprep.subr.mxu0 0.0
  %1016 = vmatpush1.msra.mxu0 0.0
  %1017 = vmatprep.subr.mxu0 0.0
  %1018 = vmatpush1.msra.mxu0 0.0
  %1019 = vmatprep.subr.mxu0 0.0
  %1020 = vmatpush1.msra.mxu0 0.0
  %1021 = vmatprep.subr.mxu0 0.0
  %1022 = vmatpush1.msra.mxu0 0.0
  %1023 = vmatprep.subr.mxu0 0.0
  %1024 = vmatpush1.msra.mxu0 0.0
  %1025 = vmatprep.subr.mxu0 0.0
  %1026 = vmatpush1.msra.mxu0 0.0
  %1027 = vmatprep.subr.mxu0 0.0
  %1028 = vmatpush1.msra.mxu0 0.0
  %1029 = vmatprep.subr.mxu0 0.0
  %1030 = vmatpush1.msra.mxu0 0.0
  %1031 = vmatprep.subr.mxu0 0.0
  %1032 = vmatpush1.msra.mxu0 0.0
  %1033 = vmatprep.subr.mxu0 0.0
  %1034 = vmatpush1.msra.mxu0 0.0
  %1035 = vmatprep.subr.mxu0 0.0
  %1036 = vmatpush1.msra.mxu0 0.0
  %1037 = vmatprep.subr.mxu0 0.0
  %1038 = vmatpush1.msra.mxu0 0.0
  %1039 = vmatprep.subr.mxu0 0.0
  %1040 = vmatpush1.msra.mxu0 0.0
  %1041 = vmatprep.subr.mxu0 0.0
  %1042 = vmatpush1.msra.mxu0 0.0
  %1043 = vmatprep.mubr.f32.mxu0 0.0
  %1044 = vmatmul.mubr.f32.gmra.mrb[0].mxu0 %v977
  %v1045 = vpop.f32.mrb[0].mxu0
  %v1046 = vadd.f32 0.0, %v1045
  %v1047 = vpop.f32.mrb[0].mxu0
  %1048 = vdwg.mxu0
  %v1049 = vadd.f32 %v889, %v1046
  %v1050 = vld [vmem:[%s6] sm:$0x1]
  %v1052 = vlaneseq
  %v1053 = vshrl.u32 %v1052, 7
  %v1054 = vsub.s32 0, %v1053
  %v1055 = vrot.slane %v1050, %v1054
  %v1057 = vadd.f32 %v1049, %v1055
  %v1058 = vmax.f32 %v1057, 0.0
  %v1059 = vld [vmem:[%s7] sm:$0x1f]
  %vm1060 = vcmask 39936
  %v1062 = vsel %vm1060, %v1059, 0
  %vm1064 = vcmask 1044480
  %v1066 = vsel %vm1064, %v1058, 0
  %1068 = vmatprep.subr.mxu0 0.0
  %1069 = vmatpush1.msra.mxu0 %v1066
  %1070 = vmatprep.subr.mxu0 0.0
  %1071 = vmatpush1.msra.mxu0 0.0
  %1072 = vmatprep.subr.mxu0 0.0
  %1073 = vmatpush1.msra.mxu0 0.0
  %1074 = vmatprep.subr.mxu0 0.0
  %1075 = vmatpush1.msra.mxu0 0.0
  %1076 = vmatprep.subr.mxu0 0.0
  %1077 = vmatpush1.msra.mxu0 0.0
  %1078 = vmatprep.subr.mxu0 0.0
  %1079 = vmatpush1.msra.mxu0 0.0
  %1080 = vmatprep.subr.mxu0 0.0
  %1081 = vmatpush1.msra.mxu0 0.0
  %1082 = vmatprep.subr.mxu0 0.0
  %1083 = vmatpush1.msra.mxu0 0.0
  %1084 = vmatprep.subr.mxu0 0.0
  %1085 = vmatpush1.msra.mxu0 0.0
  %1086 = vmatprep.subr.mxu0 0.0
  %1087 = vmatpush1.msra.mxu0 0.0
  %1088 = vmatprep.subr.mxu0 0.0
  %1089 = vmatpush1.msra.mxu0 0.0
  %1090 = vmatprep.subr.mxu0 0.0
  %1091 = vmatpush1.msra.mxu0 0.0
  %1092 = vmatprep.subr.mxu0 0.0
  %1093 = vmatpush1.msra.mxu0 0.0
  %1094 = vmatprep.subr.mxu0 0.0
  %1095 = vmatpush1.msra.mxu0 0.0
  %1096 = vmatprep.subr.mxu0 0.0
  %1097 = vmatpush1.msra.mxu0 0.0
  %1098 = vmatprep.subr.mxu0 0.0
  %1099 = vmatpush1.msra.mxu0 0.0
  %1100 = vmatprep.subr.mxu0 0.0
  %1101 = vmatpush1.msra.mxu0 0.0
  %1102 = vmatprep.subr.mxu0 0.0
  %1103 = vmatpush1.msra.mxu0 0.0
  %1104 = vmatprep.subr.mxu0 0.0
  %1105 = vmatpush1.msra.mxu0 0.0
  %1106 = vmatprep.subr.mxu0 0.0
  %1107 = vmatpush1.msra.mxu0 0.0
  %1108 = vmatprep.subr.mxu0 0.0
  %1109 = vmatpush1.msra.mxu0 0.0
  %1110 = vmatprep.subr.mxu0 0.0
  %1111 = vmatpush1.msra.mxu0 0.0
  %1112 = vmatprep.subr.mxu0 0.0
  %1113 = vmatpush1.msra.mxu0 0.0
  %1114 = vmatprep.subr.mxu0 0.0
  %1115 = vmatpush1.msra.mxu0 0.0
  %1116 = vmatprep.subr.mxu0 0.0
  %1117 = vmatpush1.msra.mxu0 0.0
  %1118 = vmatprep.subr.mxu0 0.0
  %1119 = vmatpush1.msra.mxu0 0.0
  %1120 = vmatprep.subr.mxu0 0.0
  %1121 = vmatpush1.msra.mxu0 0.0
  %1122 = vmatprep.subr.mxu0 0.0
  %1123 = vmatpush1.msra.mxu0 0.0
  %1124 = vmatprep.subr.mxu0 0.0
  %1125 = vmatpush1.msra.mxu0 0.0
  %1126 = vmatprep.subr.mxu0 0.0
  %1127 = vmatpush1.msra.mxu0 0.0
  %1128 = vmatprep.subr.mxu0 0.0
  %1129 = vmatpush1.msra.mxu0 0.0
  %1130 = vmatprep.subr.mxu0 0.0
  %1131 = vmatpush1.msra.mxu0 0.0
  %1132 = vmatprep.mubr.f32.mxu0 0.0
  %1133 = vmatmul.mubr.f32.gmra.mrb[0].mxu0 %v1062
  %v1134 = vpop.f32.mrb[0].mxu0
  %v1135 = vadd.f32 0.0, %v1134
  %v1136 = vpop.f32.mrb[0].mxu0
  %1137 = vdwg.mxu0
  %v1138 = vld [vmem:[%s8] sm:$0xff]
  %v1139 = vld [vmem:[%s8 + $0x8] sm:$0xff]
  %v1140 = vld [vmem:[%s8 + $0x10] sm:$0xff]
  %v1141 = vld [vmem:[%s8 + $0x18] sm:$0xff]
  %v1142 = vld [vmem:[%s8 + $0x20] sm:$0xff]
  %v1143 = vld [vmem:[%s8 + $0x28] sm:$0xff]
  %v1144 = vld [vmem:[%s8 + $0x30] sm:$0xff]
  %v1145 = vld [vmem:[%s8 + $0x38] sm:$0xff]
  %s1146 = scalar_lea.vmem %s7, 8
  %v1147 = vld [vmem:[%s1146] sm:$0x1f]
  %v1149 = vsel %vm1060, %v1147, 0
  %1151 = vmatprep.subr.mxu0 0.0
  %1152 = vmatpush1.msra.mxu0 %v1066
  %1153 = vmatprep.subr.mxu0 0.0
  %1154 = vmatpush1.msra.mxu0 0.0
  %1155 = vmatprep.subr.mxu0 0.0
  %1156 = vmatpush1.msra.mxu0 0.0
  %1157 = vmatprep.subr.mxu0 0.0
  %1158 = vmatpush1.msra.mxu0 0.0
  %1159 = vmatprep.subr.mxu0 0.0
  %1160 = vmatpush1.msra.mxu0 0.0
  %1161 = vmatprep.subr.mxu0 0.0
  %1162 = vmatpush1.msra.mxu0 0.0
  %1163 = vmatprep.subr.mxu0 0.0
  %1164 = vmatpush1.msra.mxu0 0.0
  %1165 = vmatprep.subr.mxu0 0.0
  %1166 = vmatpush1.msra.mxu0 0.0
  %1167 = vmatprep.subr.mxu0 0.0
  %1168 = vmatpush1.msra.mxu0 0.0
  %1169 = vmatprep.subr.mxu0 0.0
  %1170 = vmatpush1.msra.mxu0 0.0
  %1171 = vmatprep.subr.mxu0 0.0
  %1172 = vmatpush1.msra.mxu0 0.0
  %1173 = vmatprep.subr.mxu0 0.0
  %1174 = vmatpush1.msra.mxu0 0.0
  %1175 = vmatprep.subr.mxu0 0.0
  %1176 = vmatpush1.msra.mxu0 0.0
  %1177 = vmatprep.subr.mxu0 0.0
  %1178 = vmatpush1.msra.mxu0 0.0
  %1179 = vmatprep.subr.mxu0 0.0
  %1180 = vmatpush1.msra.mxu0 0.0
  %1181 = vmatprep.subr.mxu0 0.0
  %1182 = vmatpush1.msra.mxu0 0.0
  %1183 = vmatprep.subr.mxu0 0.0
  %1184 = vmatpush1.msra.mxu0 0.0
  %1185 = vmatprep.subr.mxu0 0.0
  %1186 = vmatpush1.msra.mxu0 0.0
  %1187 = vmatprep.subr.mxu0 0.0
  %1188 = vmatpush1.msra.mxu0 0.0
  %1189 = vmatprep.subr.mxu0 0.0
  %1190 = vmatpush1.msra.mxu0 0.0
  %1191 = vmatprep.subr.mxu0 0.0
  %1192 = vmatpush1.msra.mxu0 0.0
  %1193 = vmatprep.subr.mxu0 0.0
  %1194 = vmatpush1.msra.mxu0 0.0
  %1195 = vmatprep.subr.mxu0 0.0
  %1196 = vmatpush1.msra.mxu0 0.0
  %1197 = vmatprep.subr.mxu0 0.0
  %1198 = vmatpush1.msra.mxu0 0.0
  %1199 = vmatprep.subr.mxu0 0.0
  %1200 = vmatpush1.msra.mxu0 0.0
  %1201 = vmatprep.subr.mxu0 0.0
  %1202 = vmatpush1.msra.mxu0 0.0
  %1203 = vmatprep.subr.mxu0 0.0
  %1204 = vmatpush1.msra.mxu0 0.0
  %1205 = vmatprep.subr.mxu0 0.0
  %1206 = vmatpush1.msra.mxu0 0.0
  %1207 = vmatprep.subr.mxu0 0.0
  %1208 = vmatpush1.msra.mxu0 0.0
  %1209 = vmatprep.subr.mxu0 0.0
  %1210 = vmatpush1.msra.mxu0 0.0
  %1211 = vmatprep.subr.mxu0 0.0
  %1212 = vmatpush1.msra.mxu0 0.0
  %1213 = vmatprep.subr.mxu0 0.0
  %1214 = vmatpush1.msra.mxu0 0.0
  %1215 = vmatprep.mubr.f32.mxu0 0.0
  %1216 = vmatmul.mubr.f32.gmra.mrb[0].mxu0 %v1149
  %v1217 = vpop.f32.mrb[0].mxu0
  %v1218 = vadd.f32 0.0, %v1217
  %v1219 = vpop.f32.mrb[0].mxu0
  %1220 = vdwg.mxu0
  %s1221 = scalar_lea.vmem %s8, 64
  %v1222 = vld [vmem:[%s1221] sm:$0xff]
  %v1223 = vld [vmem:[%s1221 + $0x8] sm:$0xff]
  %v1224 = vld [vmem:[%s1221 + $0x10] sm:$0xff]
  %v1225 = vld [vmem:[%s1221 + $0x18] sm:$0xff]
  %v1226 = vld [vmem:[%s1221 + $0x20] sm:$0xff]
  %v1227 = vld [vmem:[%s1221 + $0x28] sm:$0xff]
  %v1228 = vld [vmem:[%s1221 + $0x30] sm:$0xff]
  %v1229 = vld [vmem:[%s1221 + $0x38] sm:$0xff]
  %v1231 = vsel %vm745, %v1218, 0
  %1233 = vmatprep.subr.mxu0 0.0
  %1234 = vmatpush1.msra.mxu0 %v1222
  %1235 = vmatprep.subr.mxu0 0.0
  %1236 = vmatpush1.msra.mxu0 %v1223
  %1237 = vmatprep.subr.mxu0 0.0
  %1238 = vmatpush1.msra.mxu0 %v1224
  %1239 = vmatprep.subr.mxu0 0.0
  %1240 = vmatpush1.msra.mxu0 %v1225
  %1241 = vmatprep.subr.mxu0 0.0
  %1242 = vmatpush1.msra.mxu0 %v1226
  %1243 = vmatprep.subr.mxu0 0.0
  %1244 = vmatpush1.msra.mxu0 %v1227
  %1245 = vmatprep.subr.mxu0 0.0
  %1246 = vmatpush1.msra.mxu0 %v1228
  %1247 = vmatprep.subr.mxu0 0.0
  %1248 = vmatpush1.msra.mxu0 %v1229
  %1249 = vmatprep.subr.mxu0 0.0
  %1250 = vmatpush1.msra.mxu0 0.0
  %1251 = vmatprep.subr.mxu0 0.0
  %1252 = vmatpush1.msra.mxu0 0.0
  %1253 = vmatprep.subr.mxu0 0.0
  %1254 = vmatpush1.msra.mxu0 0.0
  %1255 = vmatprep.subr.mxu0 0.0
  %1256 = vmatpush1.msra.mxu0 0.0
  %1257 = vmatprep.subr.mxu0 0.0
  %1258 = vmatpush1.msra.mxu0 0.0
  %1259 = vmatprep.subr.mxu0 0.0
  %1260 = vmatpush1.msra.mxu0 0.0
  %1261 = vmatprep.subr.mxu0 0.0
  %1262 = vmatpush1.msra.mxu0 0.0
  %1263 = vmatprep.subr.mxu0 0.0
  %1264 = vmatpush1.msra.mxu0 0.0
  %1265 = vmatprep.subr.mxu0 0.0
  %1266 = vmatpush1.msra.mxu0 0.0
  %1267 = vmatprep.subr.mxu0 0.0
  %1268 = vmatpush1.msra.mxu0 0.0
  %1269 = vmatprep.subr.mxu0 0.0
  %1270 = vmatpush1.msra.mxu0 0.0
  %1271 = vmatprep.subr.mxu0 0.0
  %1272 = vmatpush1.msra.mxu0 0.0
  %1273 = vmatprep.subr.mxu0 0.0
  %1274 = vmatpush1.msra.mxu0 0.0
  %1275 = vmatprep.subr.mxu0 0.0
  %1276 = vmatpush1.msra.mxu0 0.0
  %1277 = vmatprep.subr.mxu0 0.0
  %1278 = vmatpush1.msra.mxu0 0.0
  %1279 = vmatprep.subr.mxu0 0.0
  %1280 = vmatpush1.msra.mxu0 0.0
  %1281 = vmatprep.subr.mxu0 0.0
  %1282 = vmatpush1.msra.mxu0 0.0
  %1283 = vmatprep.subr.mxu0 0.0
  %1284 = vmatpush1.msra.mxu0 0.0
  %1285 = vmatprep.subr.mxu0 0.0
  %1286 = vmatpush1.msra.mxu0 0.0
  %1287 = vmatprep.subr.mxu0 0.0
  %1288 = vmatpush1.msra.mxu0 0.0
  %1289 = vmatprep.subr.mxu0 0.0
  %1290 = vmatpush1.msra.mxu0 0.0
  %1291 = vmatprep.subr.mxu0 0.0
  %1292 = vmatpush1.msra.mxu0 0.0
  %1293 = vmatprep.subr.mxu0 0.0
  %1294 = vmatpush1.msra.mxu0 0.0
  %1295 = vmatprep.subr.mxu0 0.0
  %1296 = vmatpush1.msra.mxu0 0.0
  %1297 = vmatprep.mubr.f32.mxu0 0.0
  %1298 = vmatmul.mubr.f32.gmra.mrb[0].mxu0 %v1231
  %v1299 = vpop.f32.mrb[0].mxu0
  %v1300 = vadd.f32 0.0, %v1299
  %v1301 = vpop.f32.mrb[0].mxu0
  %1302 = vdwg.mxu0
  %v1304 = vsel %vm745, %v1135, 0
  %1306 = vmatprep.subr.mxu0 0.0
  %1307 = vmatpush1.msra.mxu0 %v1138
  %1308 = vmatprep.subr.mxu0 0.0
  %1309 = vmatpush1.msra.mxu0 %v1139
  %1310 = vmatprep.subr.mxu0 0.0
  %1311 = vmatpush1.msra.mxu0 %v1140
  %1312 = vmatprep.subr.mxu0 0.0
  %1313 = vmatpush1.msra.mxu0 %v1141
  %1314 = vmatprep.subr.mxu0 0.0
  %1315 = vmatpush1.msra.mxu0 %v1142
  %1316 = vmatprep.subr.mxu0 0.0
  %1317 = vmatpush1.msra.mxu0 %v1143
  %1318 = vmatprep.subr.mxu0 0.0
  %1319 = vmatpush1.msra.mxu0 %v1144
  %1320 = vmatprep.subr.mxu0 0.0
  %1321 = vmatpush1.msra.mxu0 %v1145
  %1322 = vmatprep.subr.mxu0 0.0
  %1323 = vmatpush1.msra.mxu0 0.0
  %1324 = vmatprep.subr.mxu0 0.0
  %1325 = vmatpush1.msra.mxu0 0.0
  %1326 = vmatprep.subr.mxu0 0.0
  %1327 = vmatpush1.msra.mxu0 0.0
  %1328 = vmatprep.subr.mxu0 0.0
  %1329 = vmatpush1.msra.mxu0 0.0
  %1330 = vmatprep.subr.mxu0 0.0
  %1331 = vmatpush1.msra.mxu0 0.0
  %1332 = vmatprep.subr.mxu0 0.0
  %1333 = vmatpush1.msra.mxu0 0.0
  %1334 = vmatprep.subr.mxu0 0.0
  %1335 = vmatpush1.msra.mxu0 0.0
  %1336 = vmatprep.subr.mxu0 0.0
  %1337 = vmatpush1.msra.mxu0 0.0
  %1338 = vmatprep.subr.mxu0 0.0
  %1339 = vmatpush1.msra.mxu0 0.0
  %1340 = vmatprep.subr.mxu0 0.0
  %1341 = vmatpush1.msra.mxu0 0.0
  %1342 = vmatprep.subr.mxu0 0.0
  %1343 = vmatpush1.msra.mxu0 0.0
  %1344 = vmatprep.subr.mxu0 0.0
  %1345 = vmatpush1.msra.mxu0 0.0
  %1346 = vmatprep.subr.mxu0 0.0
  %1347 = vmatpush1.msra.mxu0 0.0
  %1348 = vmatprep.subr.mxu0 0.0
  %1349 = vmatpush1.msra.mxu0 0.0
  %1350 = vmatprep.subr.mxu0 0.0
  %1351 = vmatpush1.msra.mxu0 0.0
  %1352 = vmatprep.subr.mxu0 0.0
  %1353 = vmatpush1.msra.mxu0 0.0
  %1354 = vmatprep.subr.mxu0 0.0
  %1355 = vmatpush1.msra.mxu0 0.0
  %1356 = vmatprep.subr.mxu0 0.0
  %1357 = vmatpush1.msra.mxu0 0.0
  %1358 = vmatprep.subr.mxu0 0.0
  %1359 = vmatpush1.msra.mxu0 0.0
  %1360 = vmatprep.subr.mxu0 0.0
  %1361 = vmatpush1.msra.mxu0 0.0
  %1362 = vmatprep.subr.mxu0 0.0
  %1363 = vmatpush1.msra.mxu0 0.0
  %1364 = vmatprep.subr.mxu0 0.0
  %1365 = vmatpush1.msra.mxu0 0.0
  %1366 = vmatprep.subr.mxu0 0.0
  %1367 = vmatpush1.msra.mxu0 0.0
  %1368 = vmatprep.subr.mxu0 0.0
  %1369 = vmatpush1.msra.mxu0 0.0
  %1370 = vmatprep.mubr.f32.mxu0 0.0
  %1371 = vmatmul.mubr.f32.gmra.mrb[0].mxu0 %v1304
  %v1372 = vpop.f32.mrb[0].mxu0
  %v1373 = vadd.f32 %v1300, %v1372
  %v1374 = vpop.f32.mrb[0].mxu0
  %1375 = vdwg.mxu0
  %s1376 = scalar_lea.vmem %s7, 16
  %v1377 = vld [vmem:[%s1376] sm:$0x1f]
  %v1379 = vsel %vm1060, %v1377, 0
  %1381 = vmatprep.subr.mxu0 0.0
  %1382 = vmatpush1.msra.mxu0 %v1066
  %1383 = vmatprep.subr.mxu0 0.0
  %1384 = vmatpush1.msra.mxu0 0.0
  %1385 = vmatprep.subr.mxu0 0.0
  %1386 = vmatpush1.msra.mxu0 0.0
  %1387 = vmatprep.subr.mxu0 0.0
  %1388 = vmatpush1.msra.mxu0 0.0
  %1389 = vmatprep.subr.mxu0 0.0
  %1390 = vmatpush1.msra.mxu0 0.0
  %1391 = vmatprep.subr.mxu0 0.0
  %1392 = vmatpush1.msra.mxu0 0.0
  %1393 = vmatprep.subr.mxu0 0.0
  %1394 = vmatpush1.msra.mxu0 0.0
  %1395 = vmatprep.subr.mxu0 0.0
  %1396 = vmatpush1.msra.mxu0 0.0
  %1397 = vmatprep.subr.mxu0 0.0
  %1398 = vmatpush1.msra.mxu0 0.0
  %1399 = vmatprep.subr.mxu0 0.0
  %1400 = vmatpush1.msra.mxu0 0.0
  %1401 = vmatprep.subr.mxu0 0.0
  %1402 = vmatpush1.msra.mxu0 0.0
  %1403 = vmatprep.subr.mxu0 0.0
  %1404 = vmatpush1.msra.mxu0 0.0
  %1405 = vmatprep.subr.mxu0 0.0
  %1406 = vmatpush1.msra.mxu0 0.0
  %1407 = vmatprep.subr.mxu0 0.0
  %1408 = vmatpush1.msra.mxu0 0.0
  %1409 = vmatprep.subr.mxu0 0.0
  %1410 = vmatpush1.msra.mxu0 0.0
  %1411 = vmatprep.subr.mxu0 0.0
  %1412 = vmatpush1.msra.mxu0 0.0
  %1413 = vmatprep.subr.mxu0 0.0
  %1414 = vmatpush1.msra.mxu0 0.0
  %1415 = vmatprep.subr.mxu0 0.0
  %1416 = vmatpush1.msra.mxu0 0.0
  %1417 = vmatprep.subr.mxu0 0.0
  %1418 = vmatpush1.msra.mxu0 0.0
  %1419 = vmatprep.subr.mxu0 0.0
  %1420 = vmatpush1.msra.mxu0 0.0
  %1421 = vmatprep.subr.mxu0 0.0
  %1422 = vmatpush1.msra.mxu0 0.0
  %1423 = vmatprep.subr.mxu0 0.0
  %1424 = vmatpush1.msra.mxu0 0.0
  %1425 = vmatprep.subr.mxu0 0.0
  %1426 = vmatpush1.msra.mxu0 0.0
  %1427 = vmatprep.subr.mxu0 0.0
  %1428 = vmatpush1.msra.mxu0 0.0
  %1429 = vmatprep.subr.mxu0 0.0
  %1430 = vmatpush1.msra.mxu0 0.0
  %1431 = vmatprep.subr.mxu0 0.0
  %1432 = vmatpush1.msra.mxu0 0.0
  %1433 = vmatprep.subr.mxu0 0.0
  %1434 = vmatpush1.msra.mxu0 0.0
  %1435 = vmatprep.subr.mxu0 0.0
  %1436 = vmatpush1.msra.mxu0 0.0
  %1437 = vmatprep.subr.mxu0 0.0
  %1438 = vmatpush1.msra.mxu0 0.0
  %1439 = vmatprep.subr.mxu0 0.0
  %1440 = vmatpush1.msra.mxu0 0.0
  %1441 = vmatprep.subr.mxu0 0.0
  %1442 = vmatpush1.msra.mxu0 0.0
  %1443 = vmatprep.subr.mxu0 0.0
  %1444 = vmatpush1.msra.mxu0 0.0
  %1445 = vmatprep.mubr.f32.mxu0 0.0
  %1446 = vmatmul.mubr.f32.gmra.mrb[0].mxu0 %v1379
  %v1447 = vpop.f32.mrb[0].mxu0
  %v1448 = vadd.f32 0.0, %v1447
  %v1449 = vpop.f32.mrb[0].mxu0
  %1450 = vdwg.mxu0
  %s1451 = scalar_lea.vmem %s8, 128
  %v1452 = vld [vmem:[%s1451] sm:$0xff]
  %v1453 = vld [vmem:[%s1451 + $0x8] sm:$0xff]
  %v1454 = vld [vmem:[%s1451 + $0x10] sm:$0xff]
  %v1455 = vld [vmem:[%s1451 + $0x18] sm:$0xff]
  %v1456 = vld [vmem:[%s1451 + $0x20] sm:$0xff]
  %v1457 = vld [vmem:[%s1451 + $0x28] sm:$0xff]
  %v1458 = vld [vmem:[%s1451 + $0x30] sm:$0xff]
  %v1459 = vld [vmem:[%s1451 + $0x38] sm:$0xff]
  %v1461 = vsel %vm745, %v1448, 0
  %1463 = vmatprep.subr.mxu0 0.0
  %1464 = vmatpush1.msra.mxu0 %v1452
  %1465 = vmatprep.subr.mxu0 0.0
  %1466 = vmatpush1.msra.mxu0 %v1453
  %1467 = vmatprep.subr.mxu0 0.0
  %1468 = vmatpush1.msra.mxu0 %v1454
  %1469 = vmatprep.subr.mxu0 0.0
  %1470 = vmatpush1.msra.mxu0 %v1455
  %1471 = vmatprep.subr.mxu0 0.0
  %1472 = vmatpush1.msra.mxu0 %v1456
  %1473 = vmatprep.subr.mxu0 0.0
  %1474 = vmatpush1.msra.mxu0 %v1457
  %1475 = vmatprep.subr.mxu0 0.0
  %1476 = vmatpush1.msra.mxu0 %v1458
  %1477 = vmatprep.subr.mxu0 0.0
  %1478 = vmatpush1.msra.mxu0 %v1459
  %1479 = vmatprep.subr.mxu0 0.0
  %1480 = vmatpush1.msra.mxu0 0.0
  %1481 = vmatprep.subr.mxu0 0.0
  %1482 = vmatpush1.msra.mxu0 0.0
  %1483 = vmatprep.subr.mxu0 0.0
  %1484 = vmatpush1.msra.mxu0 0.0
  %1485 = vmatprep.subr.mxu0 0.0
  %1486 = vmatpush1.msra.mxu0 0.0
  %1487 = vmatprep.subr.mxu0 0.0
  %1488 = vmatpush1.msra.mxu0 0.0
  %1489 = vmatprep.subr.mxu0 0.0
  %1490 = vmatpush1.msra.mxu0 0.0
  %1491 = vmatprep.subr.mxu0 0.0
  %1492 = vmatpush1.msra.mxu0 0.0
  %1493 = vmatprep.subr.mxu0 0.0
  %1494 = vmatpush1.msra.mxu0 0.0
  %1495 = vmatprep.subr.mxu0 0.0
  %1496 = vmatpush1.msra.mxu0 0.0
  %1497 = vmatprep.subr.mxu0 0.0
  %1498 = vmatpush1.msra.mxu0 0.0
  %1499 = vmatprep.subr.mxu0 0.0
  %1500 = vmatpush1.msra.mxu0 0.0
  %1501 = vmatprep.subr.mxu0 0.0
  %1502 = vmatpush1.msra.mxu0 0.0
  %1503 = vmatprep.subr.mxu0 0.0
  %1504 = vmatpush1.msra.mxu0 0.0
  %1505 = vmatprep.subr.mxu0 0.0
  %1506 = vmatpush1.msra.mxu0 0.0
  %1507 = vmatprep.subr.mxu0 0.0
  %1508 = vmatpush1.msra.mxu0 0.0
  %1509 = vmatprep.subr.mxu0 0.0
  %1510 = vmatpush1.msra.mxu0 0.0
  %1511 = vmatprep.subr.mxu0 0.0
  %1512 = vmatpush1.msra.mxu0 0.0
  %1513 = vmatprep.subr.mxu0 0.0
  %1514 = vmatpush1.msra.mxu0 0.0
  %1515 = vmatprep.subr.mxu0 0.0
  %1516 = vmatpush1.msra.mxu0 0.0
  %1517 = vmatprep.subr.mxu0 0.0
  %1518 = vmatpush1.msra.mxu0 0.0
  %1519 = vmatprep.subr.mxu0 0.0
  %1520 = vmatpush1.msra.mxu0 0.0
  %1521 = vmatprep.subr.mxu0 0.0
  %1522 = vmatpush1.msra.mxu0 0.0
  %1523 = vmatprep.subr.mxu0 0.0
  %1524 = vmatpush1.msra.mxu0 0.0
  %1525 = vmatprep.subr.mxu0 0.0
  %1526 = vmatpush1.msra.mxu0 0.0
  %1527 = vmatprep.mubr.f32.mxu0 0.0
  %1528 = vmatmul.mubr.f32.gmra.mrb[0].mxu0 %v1461
  %v1529 = vpop.f32.mrb[0].mxu0
  %v1530 = vadd.f32 0.0, %v1529
  %v1531 = vpop.f32.mrb[0].mxu0
  %1532 = vdwg.mxu0
  %v1533 = vadd.f32 %v1373, %v1530
  %v1534 = vld [vmem:[%s9] sm:$0x1]
  %v1536 = vlaneseq
  %v1537 = vshrl.u32 %v1536, 7
  %v1538 = vsub.s32 0, %v1537
  %v1539 = vrot.slane %v1534, %v1538
  %v1541 = vadd.f32 %v1533, %v1539
  %v1542 = vmax.f32 %v1541, 0.0
  %v1543 = vld [vmem:[%s11] sm:$0x1]
  %v1544 = vld [vmem:[%s10] sm:$0xff]
  %v1545 = vld [vmem:[%s10 + $0x8] sm:$0xff]
  %v1546 = vld [vmem:[%s10 + $0x10] sm:$0xff]
  %v1547 = vld [vmem:[%s10 + $0x18] sm:$0xff]
  %v1548 = vld [vmem:[%s10 + $0x20] sm:$0xff]
  %v1549 = vld [vmem:[%s10 + $0x28] sm:$0xff]
  %v1550 = vld [vmem:[%s10 + $0x30] sm:$0xff]
  %v1551 = vld [vmem:[%s10 + $0x38] sm:$0xff]
  %v1553 = vsel %vm745, %v1542, 0
  %1555 = vmatprep.subr.mxu0 0.0
  %1556 = vmatpush1.msra.mxu0 %v1544
  %1557 = vmatprep.subr.mxu0 0.0
  %1558 = vmatpush1.msra.mxu0 %v1545
  %1559 = vmatprep.subr.mxu0 0.0
  %1560 = vmatpush1.msra.mxu0 %v1546
  %1561 = vmatprep.subr.mxu0 0.0
  %1562 = vmatpush1.msra.mxu0 %v1547
  %1563 = vmatprep.subr.mxu0 0.0
  %1564 = vmatpush1.msra.mxu0 %v1548
  %1565 = vmatprep.subr.mxu0 0.0
  %1566 = vmatpush1.msra.mxu0 %v1549
  %1567 = vmatprep.subr.mxu0 0.0
  %1568 = vmatpush1.msra.mxu0 %v1550
  %1569 = vmatprep.subr.mxu0 0.0
  %1570 = vmatpush1.msra.mxu0 %v1551
  %1571 = vmatprep.subr.mxu0 0.0
  %1572 = vmatpush1.msra.mxu0 0.0
  %1573 = vmatprep.subr.mxu0 0.0
  %1574 = vmatpush1.msra.mxu0 0.0
  %1575 = vmatprep.subr.mxu0 0.0
  %1576 = vmatpush1.msra.mxu0 0.0
  %1577 = vmatprep.subr.mxu0 0.0
  %1578 = vmatpush1.msra.mxu0 0.0
  %1579 = vmatprep.subr.mxu0 0.0
  %1580 = vmatpush1.msra.mxu0 0.0
  %1581 = vmatprep.subr.mxu0 0.0
  %1582 = vmatpush1.msra.mxu0 0.0
  %1583 = vmatprep.subr.mxu0 0.0
  %1584 = vmatpush1.msra.mxu0 0.0
  %1585 = vmatprep.subr.mxu0 0.0
  %1586 = vmatpush1.msra.mxu0 0.0
  %1587 = vmatprep.subr.mxu0 0.0
  %1588 = vmatpush1.msra.mxu0 0.0
  %1589 = vmatprep.subr.mxu0 0.0
  %1590 = vmatpush1.msra.mxu0 0.0
  %1591 = vmatprep.subr.mxu0 0.0
  %1592 = vmatpush1.msra.mxu0 0.0
  %1593 = vmatprep.subr.mxu0 0.0
  %1594 = vmatpush1.msra.mxu0 0.0
  %1595 = vmatprep.subr.mxu0 0.0
  %1596 = vmatpush1.msra.mxu0 0.0
  %1597 = vmatprep.subr.mxu0 0.0
  %1598 = vmatpush1.msra.mxu0 0.0
  %1599 = vmatprep.subr.mxu0 0.0
  %1600 = vmatpush1.msra.mxu0 0.0
  %1601 = vmatprep.subr.mxu0 0.0
  %1602 = vmatpush1.msra.mxu0 0.0
  %1603 = vmatprep.subr.mxu0 0.0
  %1604 = vmatpush1.msra.mxu0 0.0
  %1605 = vmatprep.subr.mxu0 0.0
  %1606 = vmatpush1.msra.mxu0 0.0
  %1607 = vmatprep.subr.mxu0 0.0
  %1608 = vmatpush1.msra.mxu0 0.0
  %1609 = vmatprep.subr.mxu0 0.0
  %1610 = vmatpush1.msra.mxu0 0.0
  %1611 = vmatprep.subr.mxu0 0.0
  %1612 = vmatpush1.msra.mxu0 0.0
  %1613 = vmatprep.subr.mxu0 0.0
  %1614 = vmatpush1.msra.mxu0 0.0
  %1615 = vmatprep.subr.mxu0 0.0
  %1616 = vmatpush1.msra.mxu0 0.0
  %1617 = vmatprep.subr.mxu0 0.0
  %1618 = vmatpush1.msra.mxu0 0.0
  %1619 = vmatprep.mubr.f32.mxu0 0.0
  %1620 = vmatmul.mubr.f32.gmra.mrb[0].mxu0 %v1553
  %v1621 = vpop.f32.mrb[0].mxu0
  %v1622 = vadd.f32 0.0, %v1621
  %v1623 = vpop.f32.mrb[0].mxu0
  %1624 = vdwg.mxu0
  %v1625 = vadd.f32 %v1543, %v1622
  %v1626 = vld [vmem:[%s10 + $0x40] sm:$0xff]
  %v1627 = vld [vmem:[%s10 + $0x48] sm:$0xff]
  %v1628 = vld [vmem:[%s10 + $0x50] sm:$0xff]
  %v1629 = vld [vmem:[%s10 + $0x58] sm:$0xff]
  %v1630 = vld [vmem:[%s10 + $0x60] sm:$0xff]
  %v1631 = vld [vmem:[%s10 + $0x68] sm:$0xff]
  %v1632 = vld [vmem:[%s10 + $0x70] sm:$0xff]
  %v1633 = vld [vmem:[%s10 + $0x78] sm:$0xff]
  %v1634 = vrot.slane %v1542, 1
  %v1635 = vsel %vm745, %v1634, 0
  %1637 = vmatprep.subr.mxu0 0.0
  %1638 = vmatpush1.msra.mxu0 %v1626
  %1639 = vmatprep.subr.mxu0 0.0
  %1640 = vmatpush1.msra.mxu0 %v1627
  %1641 = vmatprep.subr.mxu0 0.0
  %1642 = vmatpush1.msra.mxu0 %v1628
  %1643 = vmatprep.subr.mxu0 0.0
  %1644 = vmatpush1.msra.mxu0 %v1629
  %1645 = vmatprep.subr.mxu0 0.0
  %1646 = vmatpush1.msra.mxu0 %v1630
  %1647 = vmatprep.subr.mxu0 0.0
  %1648 = vmatpush1.msra.mxu0 %v1631
  %1649 = vmatprep.subr.mxu0 0.0
  %1650 = vmatpush1.msra.mxu0 %v1632
  %1651 = vmatprep.subr.mxu0 0.0
  %1652 = vmatpush1.msra.mxu0 %v1633
  %1653 = vmatprep.subr.mxu0 0.0
  %1654 = vmatpush1.msra.mxu0 0.0
  %1655 = vmatprep.subr.mxu0 0.0
  %1656 = vmatpush1.msra.mxu0 0.0
  %1657 = vmatprep.subr.mxu0 0.0
  %1658 = vmatpush1.msra.mxu0 0.0
  %1659 = vmatprep.subr.mxu0 0.0
  %1660 = vmatpush1.msra.mxu0 0.0
  %1661 = vmatprep.subr.mxu0 0.0
  %1662 = vmatpush1.msra.mxu0 0.0
  %1663 = vmatprep.subr.mxu0 0.0
  %1664 = vmatpush1.msra.mxu0 0.0
  %1665 = vmatprep.subr.mxu0 0.0
  %1666 = vmatpush1.msra.mxu0 0.0
  %1667 = vmatprep.subr.mxu0 0.0
  %1668 = vmatpush1.msra.mxu0 0.0
  %1669 = vmatprep.subr.mxu0 0.0
  %1670 = vmatpush1.msra.mxu0 0.0
  %1671 = vmatprep.subr.mxu0 0.0
  %1672 = vmatpush1.msra.mxu0 0.0
  %1673 = vmatprep.subr.mxu0 0.0
  %1674 = vmatpush1.msra.mxu0 0.0
  %1675 = vmatprep.subr.mxu0 0.0
  %1676 = vmatpush1.msra.mxu0 0.0
  %1677 = vmatprep.subr.mxu0 0.0
  %1678 = vmatpush1.msra.mxu0 0.0
  %1679 = vmatprep.subr.mxu0 0.0
  %1680 = vmatpush1.msra.mxu0 0.0
  %1681 = vmatprep.subr.mxu0 0.0
  %1682 = vmatpush1.msra.mxu0 0.0
  %1683 = vmatprep.subr.mxu0 0.0
  %1684 = vmatpush1.msra.mxu0 0.0
  %1685 = vmatprep.subr.mxu0 0.0
  %1686 = vmatpush1.msra.mxu0 0.0
  %1687 = vmatprep.subr.mxu0 0.0
  %1688 = vmatpush1.msra.mxu0 0.0
  %1689 = vmatprep.subr.mxu0 0.0
  %1690 = vmatpush1.msra.mxu0 0.0
  %1691 = vmatprep.subr.mxu0 0.0
  %1692 = vmatpush1.msra.mxu0 0.0
  %1693 = vmatprep.subr.mxu0 0.0
  %1694 = vmatpush1.msra.mxu0 0.0
  %1695 = vmatprep.subr.mxu0 0.0
  %1696 = vmatpush1.msra.mxu0 0.0
  %1697 = vmatprep.subr.mxu0 0.0
  %1698 = vmatpush1.msra.mxu0 0.0
  %1699 = vmatprep.subr.mxu0 0.0
  %1700 = vmatpush1.msra.mxu0 0.0
  %1701 = vmatprep.mubr.f32.mxu0 0.0
  %1702 = vmatmul.mubr.f32.gmra.mrb[0].mxu0 %v1635
  %v1703 = vpop.f32.mrb[0].mxu0
  %v1704 = vadd.f32 0.0, %v1703
  %v1705 = vpop.f32.mrb[0].mxu0
  %1706 = vdwg.mxu0
  %v1707 = vadd.f32 %v1625, %v1704
  %v1708 = vld [vmem:[%s10 + $0x80] sm:$0xff]
  %v1709 = vld [vmem:[%s10 + $0x88] sm:$0xff]
  %v1710 = vld [vmem:[%s10 + $0x90] sm:$0xff]
  %v1711 = vld [vmem:[%s10 + $0x98] sm:$0xff]
  %v1712 = vld [vmem:[%s10 + $0xa0] sm:$0xff]
  %v1713 = vld [vmem:[%s10 + $0xa8] sm:$0xff]
  %v1714 = vld [vmem:[%s10 + $0xb0] sm:$0xff]
  %v1715 = vld [vmem:[%s10 + $0xb8] sm:$0xff]
  %v1716 = vrot.slane %v1542, 2
  %v1717 = vsel %vm745, %v1716, 0
  %1719 = vmatprep.subr.mxu0 0.0
  %1720 = vmatpush1.msra.mxu0 %v1708
  %1721 = vmatprep.subr.mxu0 0.0
  %1722 = vmatpush1.msra.mxu0 %v1709
  %1723 = vmatprep.subr.mxu0 0.0
  %1724 = vmatpush1.msra.mxu0 %v1710
  %1725 = vmatprep.subr.mxu0 0.0
  %1726 = vmatpush1.msra.mxu0 %v1711
  %1727 = vmatprep.subr.mxu0 0.0
  %1728 = vmatpush1.msra.mxu0 %v1712
  %1729 = vmatprep.subr.mxu0 0.0
  %1730 = vmatpush1.msra.mxu0 %v1713
  %1731 = vmatprep.subr.mxu0 0.0
  %1732 = vmatpush1.msra.mxu0 %v1714
  %1733 = vmatprep.subr.mxu0 0.0
  %1734 = vmatpush1.msra.mxu0 %v1715
  %1735 = vmatprep.subr.mxu0 0.0
  %1736 = vmatpush1.msra.mxu0 0.0
  %1737 = vmatprep.subr.mxu0 0.0
  %1738 = vmatpush1.msra.mxu0 0.0
  %1739 = vmatprep.subr.mxu0 0.0
  %1740 = vmatpush1.msra.mxu0 0.0
  %1741 = vmatprep.subr.mxu0 0.0
  %1742 = vmatpush1.msra.mxu0 0.0
  %1743 = vmatprep.subr.mxu0 0.0
  %1744 = vmatpush1.msra.mxu0 0.0
  %1745 = vmatprep.subr.mxu0 0.0
  %1746 = vmatpush1.msra.mxu0 0.0
  %1747 = vmatprep.subr.mxu0 0.0
  %1748 = vmatpush1.msra.mxu0 0.0
  %1749 = vmatprep.subr.mxu0 0.0
  %1750 = vmatpush1.msra.mxu0 0.0
  %1751 = vmatprep.subr.mxu0 0.0
  %1752 = vmatpush1.msra.mxu0 0.0
  %1753 = vmatprep.subr.mxu0 0.0
  %1754 = vmatpush1.msra.mxu0 0.0
  %1755 = vmatprep.subr.mxu0 0.0
  %1756 = vmatpush1.msra.mxu0 0.0
  %1757 = vmatprep.subr.mxu0 0.0
  %1758 = vmatpush1.msra.mxu0 0.0
  %1759 = vmatprep.subr.mxu0 0.0
  %1760 = vmatpush1.msra.mxu0 0.0
  %1761 = vmatprep.subr.mxu0 0.0
  %1762 = vmatpush1.msra.mxu0 0.0
  %1763 = vmatprep.subr.mxu0 0.0
  %1764 = vmatpush1.msra.mxu0 0.0
  %1765 = vmatprep.subr.mxu0 0.0
  %1766 = vmatpush1.msra.mxu0 0.0
  %1767 = vmatprep.subr.mxu0 0.0
  %1768 = vmatpush1.msra.mxu0 0.0
  %1769 = vmatprep.subr.mxu0 0.0
  %1770 = vmatpush1.msra.mxu0 0.0
  %1771 = vmatprep.subr.mxu0 0.0
  %1772 = vmatpush1.msra.mxu0 0.0
  %1773 = vmatprep.subr.mxu0 0.0
  %1774 = vmatpush1.msra.mxu0 0.0
  %1775 = vmatprep.subr.mxu0 0.0
  %1776 = vmatpush1.msra.mxu0 0.0
  %1777 = vmatprep.subr.mxu0 0.0
  %1778 = vmatpush1.msra.mxu0 0.0
  %1779 = vmatprep.subr.mxu0 0.0
  %1780 = vmatpush1.msra.mxu0 0.0
  %1781 = vmatprep.subr.mxu0 0.0
  %1782 = vmatpush1.msra.mxu0 0.0
  %1783 = vmatprep.mubr.f32.mxu0 0.0
  %1784 = vmatmul.mubr.f32.gmra.mrb[0].mxu0 %v1717
  %v1785 = vpop.f32.mrb[0].mxu0
  %v1786 = vadd.f32 0.0, %v1785
  %v1787 = vpop.f32.mrb[0].mxu0
  %1788 = vdwg.mxu0
  %v1789 = vadd.f32 %v1707, %v1786
  %v1790 = vld [vmem:[%s10 + $0xc0] sm:$0xff]
  %v1791 = vld [vmem:[%s10 + $0xc8] sm:$0xff]
  %v1792 = vld [vmem:[%s10 + $0xd0] sm:$0xff]
  %v1793 = vld [vmem:[%s10 + $0xd8] sm:$0xff]
  %v1794 = vld [vmem:[%s10 + $0xe0] sm:$0xff]
  %v1795 = vld [vmem:[%s10 + $0xe8] sm:$0xff]
  %v1796 = vld [vmem:[%s10 + $0xf0] sm:$0xff]
  %v1797 = vld [vmem:[%s10 + $0xf8] sm:$0xff]
  %v1798 = vrot.slane %v1542, 3
  %v1799 = vsel %vm745, %v1798, 0
  %1801 = vmatprep.subr.mxu0 0.0
  %1802 = vmatpush1.msra.mxu0 %v1790
  %1803 = vmatprep.subr.mxu0 0.0
  %1804 = vmatpush1.msra.mxu0 %v1791
  %1805 = vmatprep.subr.mxu0 0.0
  %1806 = vmatpush1.msra.mxu0 %v1792
  %1807 = vmatprep.subr.mxu0 0.0
  %1808 = vmatpush1.msra.mxu0 %v1793
  %1809 = vmatprep.subr.mxu0 0.0
  %1810 = vmatpush1.msra.mxu0 %v1794
  %1811 = vmatprep.subr.mxu0 0.0
  %1812 = vmatpush1.msra.mxu0 %v1795
  %1813 = vmatprep.subr.mxu0 0.0
  %1814 = vmatpush1.msra.mxu0 %v1796
  %1815 = vmatprep.subr.mxu0 0.0
  %1816 = vmatpush1.msra.mxu0 %v1797
  %1817 = vmatprep.subr.mxu0 0.0
  %1818 = vmatpush1.msra.mxu0 0.0
  %1819 = vmatprep.subr.mxu0 0.0
  %1820 = vmatpush1.msra.mxu0 0.0
  %1821 = vmatprep.subr.mxu0 0.0
  %1822 = vmatpush1.msra.mxu0 0.0
  %1823 = vmatprep.subr.mxu0 0.0
  %1824 = vmatpush1.msra.mxu0 0.0
  %1825 = vmatprep.subr.mxu0 0.0
  %1826 = vmatpush1.msra.mxu0 0.0
  %1827 = vmatprep.subr.mxu0 0.0
  %1828 = vmatpush1.msra.mxu0 0.0
  %1829 = vmatprep.subr.mxu0 0.0
  %1830 = vmatpush1.msra.mxu0 0.0
  %1831 = vmatprep.subr.mxu0 0.0
  %1832 = vmatpush1.msra.mxu0 0.0
  %1833 = vmatprep.subr.mxu0 0.0
  %1834 = vmatpush1.msra.mxu0 0.0
  %1835 = vmatprep.subr.mxu0 0.0
  %1836 = vmatpush1.msra.mxu0 0.0
  %1837 = vmatprep.subr.mxu0 0.0
  %1838 = vmatpush1.msra.mxu0 0.0
  %1839 = vmatprep.subr.mxu0 0.0
  %1840 = vmatpush1.msra.mxu0 0.0
  %1841 = vmatprep.subr.mxu0 0.0
  %1842 = vmatpush1.msra.mxu0 0.0
  %1843 = vmatprep.subr.mxu0 0.0
  %1844 = vmatpush1.msra.mxu0 0.0
  %1845 = vmatprep.subr.mxu0 0.0
  %1846 = vmatpush1.msra.mxu0 0.0
  %1847 = vmatprep.subr.mxu0 0.0
  %1848 = vmatpush1.msra.mxu0 0.0
  %1849 = vmatprep.subr.mxu0 0.0
  %1850 = vmatpush1.msra.mxu0 0.0
  %1851 = vmatprep.subr.mxu0 0.0
  %1852 = vmatpush1.msra.mxu0 0.0
  %1853 = vmatprep.subr.mxu0 0.0
  %1854 = vmatpush1.msra.mxu0 0.0
  %1855 = vmatprep.subr.mxu0 0.0
  %1856 = vmatpush1.msra.mxu0 0.0
  %1857 = vmatprep.subr.mxu0 0.0
  %1858 = vmatpush1.msra.mxu0 0.0
  %1859 = vmatprep.subr.mxu0 0.0
  %1860 = vmatpush1.msra.mxu0 0.0
  %1861 = vmatprep.subr.mxu0 0.0
  %1862 = vmatpush1.msra.mxu0 0.0
  %1863 = vmatprep.subr.mxu0 0.0
  %1864 = vmatpush1.msra.mxu0 0.0
  %1865 = vmatprep.mubr.f32.mxu0 0.0
  %1866 = vmatmul.mubr.f32.gmra.mrb[0].mxu0 %v1799
  %v1867 = vpop.f32.mrb[0].mxu0
  %v1868 = vadd.f32 0.0, %v1867
  %v1869 = vpop.f32.mrb[0].mxu0
  %1870 = vdwg.mxu0
  %v1871 = vadd.f32 %v1789, %v1868
  %v1872 = vld [vmem:[%s10 + $0x100] sm:$0xff]
  %v1873 = vld [vmem:[%s10 + $0x108] sm:$0xff]
  %v1874 = vld [vmem:[%s10 + $0x110] sm:$0xff]
  %v1875 = vld [vmem:[%s10 + $0x118] sm:$0xff]
  %v1876 = vld [vmem:[%s10 + $0x120] sm:$0xff]
  %v1877 = vld [vmem:[%s10 + $0x128] sm:$0xff]
  %v1878 = vld [vmem:[%s10 + $0x130] sm:$0xff]
  %v1879 = vld [vmem:[%s10 + $0x138] sm:$0xff]
  %v1880 = vrot.slane %v1542, 4
  %v1881 = vsel %vm745, %v1880, 0
  %1883 = vmatprep.subr.mxu0 0.0
  %1884 = vmatpush1.msra.mxu0 %v1872
  %1885 = vmatprep.subr.mxu0 0.0
  %1886 = vmatpush1.msra.mxu0 %v1873
  %1887 = vmatprep.subr.mxu0 0.0
  %1888 = vmatpush1.msra.mxu0 %v1874
  %1889 = vmatprep.subr.mxu0 0.0
  %1890 = vmatpush1.msra.mxu0 %v1875
  %1891 = vmatprep.subr.mxu0 0.0
  %1892 = vmatpush1.msra.mxu0 %v1876
  %1893 = vmatprep.subr.mxu0 0.0
  %1894 = vmatpush1.msra.mxu0 %v1877
  %1895 = vmatprep.subr.mxu0 0.0
  %1896 = vmatpush1.msra.mxu0 %v1878
  %1897 = vmatprep.subr.mxu0 0.0
  %1898 = vmatpush1.msra.mxu0 %v1879
  %1899 = vmatprep.subr.mxu0 0.0
  %1900 = vmatpush1.msra.mxu0 0.0
  %1901 = vmatprep.subr.mxu0 0.0
  %1902 = vmatpush1.msra.mxu0 0.0
  %1903 = vmatprep.subr.mxu0 0.0
  %1904 = vmatpush1.msra.mxu0 0.0
  %1905 = vmatprep.subr.mxu0 0.0
  %1906 = vmatpush1.msra.mxu0 0.0
  %1907 = vmatprep.subr.mxu0 0.0
  %1908 = vmatpush1.msra.mxu0 0.0
  %1909 = vmatprep.subr.mxu0 0.0
  %1910 = vmatpush1.msra.mxu0 0.0
  %1911 = vmatprep.subr.mxu0 0.0
  %1912 = vmatpush1.msra.mxu0 0.0
  %1913 = vmatprep.subr.mxu0 0.0
  %1914 = vmatpush1.msra.mxu0 0.0
  %1915 = vmatprep.subr.mxu0 0.0
  %1916 = vmatpush1.msra.mxu0 0.0
  %1917 = vmatprep.subr.mxu0 0.0
  %1918 = vmatpush1.msra.mxu0 0.0
  %1919 = vmatprep.subr.mxu0 0.0
  %1920 = vmatpush1.msra.mxu0 0.0
  %1921 = vmatprep.subr.mxu0 0.0
  %1922 = vmatpush1.msra.mxu0 0.0
  %1923 = vmatprep.subr.mxu0 0.0
  %1924 = vmatpush1.msra.mxu0 0.0
  %1925 = vmatprep.subr.mxu0 0.0
  %1926 = vmatpush1.msra.mxu0 0.0
  %1927 = vmatprep.subr.mxu0 0.0
  %1928 = vmatpush1.msra.mxu0 0.0
  %1929 = vmatprep.subr.mxu0 0.0
  %1930 = vmatpush1.msra.mxu0 0.0
  %1931 = vmatprep.subr.mxu0 0.0
  %1932 = vmatpush1.msra.mxu0 0.0
  %1933 = vmatprep.subr.mxu0 0.0
  %1934 = vmatpush1.msra.mxu0 0.0
  %1935 = vmatprep.subr.mxu0 0.0
  %1936 = vmatpush1.msra.mxu0 0.0
  %1937 = vmatprep.subr.mxu0 0.0
  %1938 = vmatpush1.msra.mxu0 0.0
  %1939 = vmatprep.subr.mxu0 0.0
  %1940 = vmatpush1.msra.mxu0 0.0
  %1941 = vmatprep.subr.mxu0 0.0
  %1942 = vmatpush1.msra.mxu0 0.0
  %1943 = vmatprep.subr.mxu0 0.0
  %1944 = vmatpush1.msra.mxu0 0.0
  %1945 = vmatprep.subr.mxu0 0.0
  %1946 = vmatpush1.msra.mxu0 0.0
  %1947 = vmatprep.mubr.f32.mxu0 0.0
  %1948 = vmatmul.mubr.f32.gmra.mrb[0].mxu0 %v1881
  %v1949 = vpop.f32.mrb[0].mxu0
  %v1950 = vadd.f32 0.0, %v1949
  %v1951 = vpop.f32.mrb[0].mxu0
  %1952 = vdwg.mxu0
  %v1953 = vadd.f32 %v1871, %v1950
  %v1954 = vld [vmem:[%s12] sm:$0xff]
  %v1955 = vld [vmem:[%s12 + $0x8] sm:$0xff]
  %v1956 = vld [vmem:[%s12 + $0x10] sm:$0xff]
  %v1957 = vld [vmem:[%s12 + $0x18] sm:$0xff]
  %v1958 = vld [vmem:[%s12 + $0x20] sm:$0xff]
  %v1959 = vld [vmem:[%s12 + $0x28] sm:$0xff]
  %v1960 = vld [vmem:[%s12 + $0x30] sm:$0xff]
  %v1961 = vld [vmem:[%s12 + $0x38] sm:$0xff]
  %v1962 = vld [vmem:[%s12 + $0x40] sm:$0xff]
  %v1963 = vld [vmem:[%s12 + $0x48] sm:$0xff]
  %v1964 = vld [vmem:[%s12 + $0x50] sm:$0xff]
  %v1965 = vld [vmem:[%s12 + $0x58] sm:$0xff]
  %v1966 = vld [vmem:[%s13] sm:$0x7]
  %v1968 = vlaneseq
  %v1969 = vshrl.u32 %v1968, 7
  %v1970 = vsub.s32 0, %v1969
  %v1971 = vrot.slane %v1966, %v1970
  %v1972 = vlaneseq
  %v1973 = vshrl.u32 %v1972, 7
  %v1974 = vsub.s32 1, %v1973
  %v1975 = vrot.slane %v1966, %v1974
  %v1976 = vlaneseq
  %v1977 = vshrl.u32 %v1976, 7
  %v1978 = vsub.s32 2, %v1977
  %v1979 = vrot.slane %v1966, %v1978
  %vm1983 = vcmask 261120
  %v1985 = vsel %vm1983, %v1953, 0
  %1987 = vmatprep.subr.mxu0 %v1955
  %1988 = vmatpush1.msra.mxu0 %v1954
  %1989 = vmatprep.subr.mxu0 %v1958
  %1990 = vmatpush1.msra.mxu0 %v1957
  %1991 = vmatprep.subr.mxu0 %v1961
  %1992 = vmatpush1.msra.mxu0 %v1960
  %1993 = vmatprep.subr.mxu0 %v1964
  %1994 = vmatpush1.msra.mxu0 %v1963
  %1995 = vmatprep.subr.mxu0 0.0
  %1996 = vmatpush1.msra.mxu0 0.0
  %1997 = vmatprep.subr.mxu0 0.0
  %1998 = vmatpush1.msra.mxu0 0.0
  %1999 = vmatprep.subr.mxu0 0.0
  %2000 = vmatpush1.msra.mxu0 0.0
  %2001 = vmatprep.subr.mxu0 0.0
  %2002 = vmatpush1.msra.mxu0 0.0
  %2003 = vmatprep.subr.mxu0 0.0
  %2004 = vmatpush1.msra.mxu0 0.0
  %2005 = vmatprep.subr.mxu0 0.0
  %2006 = vmatpush1.msra.mxu0 0.0
  %2007 = vmatprep.subr.mxu0 0.0
  %2008 = vmatpush1.msra.mxu0 0.0
  %2009 = vmatprep.subr.mxu0 0.0
  %2010 = vmatpush1.msra.mxu0 0.0
  %2011 = vmatprep.subr.mxu0 0.0
  %2012 = vmatpush1.msra.mxu0 0.0
  %2013 = vmatprep.subr.mxu0 0.0
  %2014 = vmatpush1.msra.mxu0 0.0
  %2015 = vmatprep.subr.mxu0 0.0
  %2016 = vmatpush1.msra.mxu0 0.0
  %2017 = vmatprep.subr.mxu0 0.0
  %2018 = vmatpush1.msra.mxu0 0.0
  %2019 = vmatprep.subr.mxu0 0.0
  %2020 = vmatpush1.msra.mxu0 0.0
  %2021 = vmatprep.subr.mxu0 0.0
  %2022 = vmatpush1.msra.mxu0 0.0
  %2023 = vmatprep.subr.mxu0 0.0
  %2024 = vmatpush1.msra.mxu0 0.0
  %2025 = vmatprep.subr.mxu0 0.0
  %2026 = vmatpush1.msra.mxu0 0.0
  %2027 = vmatprep.subr.mxu0 0.0
  %2028 = vmatpush1.msra.mxu0 0.0
  %2029 = vmatprep.subr.mxu0 0.0
  %2030 = vmatpush1.msra.mxu0 0.0
  %2031 = vmatprep.subr.mxu0 0.0
  %2032 = vmatpush1.msra.mxu0 0.0
  %2033 = vmatprep.subr.mxu0 0.0
  %2034 = vmatpush1.msra.mxu0 0.0
  %2035 = vmatprep.subr.mxu0 0.0
  %2036 = vmatpush1.msra.mxu0 0.0
  %2037 = vmatprep.subr.mxu0 0.0
  %2038 = vmatpush1.msra.mxu0 0.0
  %2039 = vmatprep.subr.mxu0 0.0
  %2040 = vmatpush1.msra.mxu0 0.0
  %2041 = vmatprep.subr.mxu0 0.0
  %2042 = vmatpush1.msra.mxu0 0.0
  %2043 = vmatprep.subr.mxu0 0.0
  %2044 = vmatpush1.msra.mxu0 0.0
  %2045 = vmatprep.subr.mxu0 0.0
  %2046 = vmatpush1.msra.mxu0 0.0
  %2047 = vmatprep.subr.mxu0 0.0
  %2048 = vmatpush1.msra.mxu0 0.0
  %2049 = vmatprep.subr.mxu0 0.0
  %2050 = vmatpush1.msra.mxu0 0.0
  %2051 = vmatprep.mubr.f32.mxu0 0.0
  %2052 = vmatmul.mubr.f32.gmra.mrb[0].mxu0 %v1985
  %v2053 = vpop.f32.mrb[0].mxu0
  %v2054 = vadd.f32 %v1971, %v2053
  %v2055 = vpop.f32.mrb[0].mxu0
  %v2056 = vadd.f32 %v1975, %v2055
  %2057 = vdwg.mxu0
  %2058 = vmatprep.subr.mxu0 0.0
  %2059 = vmatpush1.msra.mxu0 %v1956
  %2060 = vmatprep.subr.mxu0 0.0
  %2061 = vmatpush1.msra.mxu0 %v1959
  %2062 = vmatprep.subr.mxu0 0.0
  %2063 = vmatpush1.msra.mxu0 %v1962
  %2064 = vmatprep.subr.mxu0 0.0
  %2065 = vmatpush1.msra.mxu0 %v1965
  %2066 = vmatprep.subr.mxu0 0.0
  %2067 = vmatpush1.msra.mxu0 0.0
  %2068 = vmatprep.subr.mxu0 0.0
  %2069 = vmatpush1.msra.mxu0 0.0
  %2070 = vmatprep.subr.mxu0 0.0
  %2071 = vmatpush1.msra.mxu0 0.0
  %2072 = vmatprep.subr.mxu0 0.0
  %2073 = vmatpush1.msra.mxu0 0.0
  %2074 = vmatprep.subr.mxu0 0.0
  %2075 = vmatpush1.msra.mxu0 0.0
  %2076 = vmatprep.subr.mxu0 0.0
  %2077 = vmatpush1.msra.mxu0 0.0
  %2078 = vmatprep.subr.mxu0 0.0
  %2079 = vmatpush1.msra.mxu0 0.0
  %2080 = vmatprep.subr.mxu0 0.0
  %2081 = vmatpush1.msra.mxu0 0.0
  %2082 = vmatprep.subr.mxu0 0.0
  %2083 = vmatpush1.msra.mxu0 0.0
  %2084 = vmatprep.subr.mxu0 0.0
  %2085 = vmatpush1.msra.mxu0 0.0
  %2086 = vmatprep.subr.mxu0 0.0
  %2087 = vmatpush1.msra.mxu0 0.0
  %2088 = vmatprep.subr.mxu0 0.0
  %2089 = vmatpush1.msra.mxu0 0.0
  %2090 = vmatprep.subr.mxu0 0.0
  %2091 = vmatpush1.msra.mxu0 0.0
  %2092 = vmatprep.subr.mxu0 0.0
  %2093 = vmatpush1.msra.mxu0 0.0
  %2094 = vmatprep.subr.mxu0 0.0
  %2095 = vmatpush1.msra.mxu0 0.0
  %2096 = vmatprep.subr.mxu0 0.0
  %2097 = vmatpush1.msra.mxu0 0.0
  %2098 = vmatprep.subr.mxu0 0.0
  %2099 = vmatpush1.msra.mxu0 0.0
  %2100 = vmatprep.subr.mxu0 0.0
  %2101 = vmatpush1.msra.mxu0 0.0
  %2102 = vmatprep.subr.mxu0 0.0
  %2103 = vmatpush1.msra.mxu0 0.0
  %2104 = vmatprep.subr.mxu0 0.0
  %2105 = vmatpush1.msra.mxu0 0.0
  %2106 = vmatprep.subr.mxu0 0.0
  %2107 = vmatpush1.msra.mxu0 0.0
  %2108 = vmatprep.subr.mxu0 0.0
  %2109 = vmatpush1.msra.mxu0 0.0
  %2110 = vmatprep.subr.mxu0 0.0
  %2111 = vmatpush1.msra.mxu0 0.0
  %2112 = vmatprep.subr.mxu0 0.0
  %2113 = vmatpush1.msra.mxu0 0.0
  %2114 = vmatprep.subr.mxu0 0.0
  %2115 = vmatpush1.msra.mxu0 0.0
  %2116 = vmatprep.subr.mxu0 0.0
  %2117 = vmatpush1.msra.mxu0 0.0
  %2118 = vmatprep.subr.mxu0 0.0
  %2119 = vmatpush1.msra.mxu0 0.0
  %2120 = vmatprep.subr.mxu0 0.0
  %2121 = vmatpush1.msra.mxu0 0.0
  %2122 = vmatprep.mubr.f32.mxu0 0.0
  %2123 = vmatmul.mubr.f32.gmra.mrb[0].mxu0 %v1985
  %v2124 = vpop.f32.mrb[0].mxu0
  %v2125 = vadd.f32 %v1979, %v2124
  %v2126 = vpop.f32.mrb[0].mxu0
  %2127 = vdwg.mxu0
  %v2131 = vcombine.low %v2054, %v2056
  %v2133 = vunpack.c.l.s4 1966171168
  %v2134 = vunpack.c.0.s8 %v2133
  %v2135 = vlaneseq
  %v2136 = vshrl.u32 %v2135, 7
  %v2137 = vsub.s32 %v2134, %v2136
  %v2138 = vrot.slane %v2131, %v2137
  %v2140 = vunpack.c.l.s4 1966171168
  %v2141 = vunpack.c.0.s8 %v2140
  %v2142 = vlaneseq
  %v2143 = vshrl.u32 %v2142, 7
  %v2144 = vsub.s32 %v2141, %v2143
  %v2145 = vrot.slane %v2125, %v2144
  %v2146 = vcombine.low %v2138, %v2145
  %v2148 = vunpack.c.l.s4 1966171168
  %v2149 = vunpack.c.0.s8 %v2148
  %v2150 = vlaneseq
  %v2151 = vshrl.u32 %v2150, 7
  %v2152 = vsub.s32 %v2149, %v2151
  %v2153 = vrot.slane %v2146, %v2152
  %v2155 = vlaneseq
  %vm2156 = vcmp.ge.s32.totalorder %v2155, 0
  %vm2157 = vcmp.lt.s32.totalorder %v2155, 384
  %vm2158 = vmand %vm2156, %vm2157
  %2159 = vst.msk [vmem:[%s14] ss:$8 sm:$0x7] %vm2158, %v2153
  %2160 = vst.msk [vmem:[%s14] ss:$8 sm:$0x0] %vm2158, %v2153
  %v2161 = vld [vmem:[%s0 + $0x14] sm:$0xff]
  %v2162 = vld [vmem:[%s0 + $0x1c] sm:$0xff]
  %v2163 = vld [vmem:[%s0 + $0x24] sm:$0xf]
  %v2164 = vld [vmem:[%s1] sm:$0xff]
  %v2165 = vld [vmem:[%s1 + $0x8] sm:$0x3]
  %v2167 = vsel %vm55, %v2164, 0
  %v2170 = vsel %vm55, %v2165, 0
  %v2173 = vsel %vm62, %v2163, 0
  %2175 = vmatprep.subr.mxu0 0.0
  %2176 = vmatpush1.msra.mxu0 %v2161
  %2177 = vmatprep.subr.mxu0 0.0
  %2178 = vmatpush1.msra.mxu0 %v2162
  %2179 = vmatprep.subr.mxu0 0.0
  %2180 = vmatpush1.msra.mxu0 %v2173
  %2181 = vmatprep.subr.mxu0 0.0
  %2182 = vmatpush1.msra.mxu0 0.0
  %2183 = vmatprep.subr.mxu0 0.0
  %2184 = vmatpush1.msra.mxu0 0.0
  %2185 = vmatprep.subr.mxu0 0.0
  %2186 = vmatpush1.msra.mxu0 0.0
  %2187 = vmatprep.subr.mxu0 0.0
  %2188 = vmatpush1.msra.mxu0 0.0
  %2189 = vmatprep.subr.mxu0 0.0
  %2190 = vmatpush1.msra.mxu0 0.0
  %2191 = vmatprep.subr.mxu0 0.0
  %2192 = vmatpush1.msra.mxu0 0.0
  %2193 = vmatprep.subr.mxu0 0.0
  %2194 = vmatpush1.msra.mxu0 0.0
  %2195 = vmatprep.subr.mxu0 0.0
  %2196 = vmatpush1.msra.mxu0 0.0
  %2197 = vmatprep.subr.mxu0 0.0
  %2198 = vmatpush1.msra.mxu0 0.0
  %2199 = vmatprep.subr.mxu0 0.0
  %2200 = vmatpush1.msra.mxu0 0.0
  %2201 = vmatprep.subr.mxu0 0.0
  %2202 = vmatpush1.msra.mxu0 0.0
  %2203 = vmatprep.subr.mxu0 0.0
  %2204 = vmatpush1.msra.mxu0 0.0
  %2205 = vmatprep.subr.mxu0 0.0
  %2206 = vmatpush1.msra.mxu0 0.0
  %2207 = vmatprep.subr.mxu0 0.0
  %2208 = vmatpush1.msra.mxu0 0.0
  %2209 = vmatprep.subr.mxu0 0.0
  %2210 = vmatpush1.msra.mxu0 0.0
  %2211 = vmatprep.subr.mxu0 0.0
  %2212 = vmatpush1.msra.mxu0 0.0
  %2213 = vmatprep.subr.mxu0 0.0
  %2214 = vmatpush1.msra.mxu0 0.0
  %2215 = vmatprep.subr.mxu0 0.0
  %2216 = vmatpush1.msra.mxu0 0.0
  %2217 = vmatprep.subr.mxu0 0.0
  %2218 = vmatpush1.msra.mxu0 0.0
  %2219 = vmatprep.subr.mxu0 0.0
  %2220 = vmatpush1.msra.mxu0 0.0
  %2221 = vmatprep.subr.mxu0 0.0
  %2222 = vmatpush1.msra.mxu0 0.0
  %2223 = vmatprep.subr.mxu0 0.0
  %2224 = vmatpush1.msra.mxu0 0.0
  %2225 = vmatprep.subr.mxu0 0.0
  %2226 = vmatpush1.msra.mxu0 0.0
  %2227 = vmatprep.subr.mxu0 0.0
  %2228 = vmatpush1.msra.mxu0 0.0
  %2229 = vmatprep.subr.mxu0 0.0
  %2230 = vmatpush1.msra.mxu0 0.0
  %2231 = vmatprep.subr.mxu0 0.0
  %2232 = vmatpush1.msra.mxu0 0.0
  %2233 = vmatprep.subr.mxu0 0.0
  %2234 = vmatpush1.msra.mxu0 0.0
  %2235 = vmatprep.subr.mxu0 0.0
  %2236 = vmatpush1.msra.mxu0 0.0
  %2237 = vmatprep.subr.mxu0 0.0
  %2238 = vmatpush1.msra.mxu0 0.0
  %2239 = vmatprep.mubr.f32.mxu0 0.0
  %2240 = vmatmul.mubr.f32.gmra.mrb[0].mxu0 %v2167
  %v2241 = vpop.f32.mrb[0].mxu0
  %v2242 = vadd.f32 0.0, %v2241
  %v2243 = vpop.f32.mrb[0].mxu0
  %2244 = vmatprep.mubr.f32.mxu0 0.0
  %2245 = vmatmul.mubr.f32.gmra.mrb[0].mxu0 %v2170
  %v2246 = vpop.f32.mrb[0].mxu0
  %v2247 = vadd.f32 0.0, %v2246
  %v2248 = vpop.f32.mrb[0].mxu0
  %2249 = vdwg.mxu0
  %v2250 = vld [vmem:[%s2] sm:$0xff]
  %v2251 = vld [vmem:[%s2 + $0x8] sm:$0xff]
  %v2252 = vld [vmem:[%s143] sm:$0xff]
  %v2253 = vld [vmem:[%s143 + $0x8] sm:$0x3]
  %v2255 = vsel %vm55, %v2252, 0
  %v2258 = vsel %vm55, %v2253, 0
  %2260 = vmatprep.subr.mxu0 0.0
  %2261 = vmatpush1.msra.mxu0 %v2161
  %2262 = vmatprep.subr.mxu0 0.0
  %2263 = vmatpush1.msra.mxu0 %v2162
  %2264 = vmatprep.subr.mxu0 0.0
  %2265 = vmatpush1.msra.mxu0 %v2173
  %2266 = vmatprep.subr.mxu0 0.0
  %2267 = vmatpush1.msra.mxu0 0.0
  %2268 = vmatprep.subr.mxu0 0.0
  %2269 = vmatpush1.msra.mxu0 0.0
  %2270 = vmatprep.subr.mxu0 0.0
  %2271 = vmatpush1.msra.mxu0 0.0
  %2272 = vmatprep.subr.mxu0 0.0
  %2273 = vmatpush1.msra.mxu0 0.0
  %2274 = vmatprep.subr.mxu0 0.0
  %2275 = vmatpush1.msra.mxu0 0.0
  %2276 = vmatprep.subr.mxu0 0.0
  %2277 = vmatpush1.msra.mxu0 0.0
  %2278 = vmatprep.subr.mxu0 0.0
  %2279 = vmatpush1.msra.mxu0 0.0
  %2280 = vmatprep.subr.mxu0 0.0
  %2281 = vmatpush1.msra.mxu0 0.0
  %2282 = vmatprep.subr.mxu0 0.0
  %2283 = vmatpush1.msra.mxu0 0.0
  %2284 = vmatprep.subr.mxu0 0.0
  %2285 = vmatpush1.msra.mxu0 0.0
  %2286 = vmatprep.subr.mxu0 0.0
  %2287 = vmatpush1.msra.mxu0 0.0
  %2288 = vmatprep.subr.mxu0 0.0
  %2289 = vmatpush1.msra.mxu0 0.0
  %2290 = vmatprep.subr.mxu0 0.0
  %2291 = vmatpush1.msra.mxu0 0.0
  %2292 = vmatprep.subr.mxu0 0.0
  %2293 = vmatpush1.msra.mxu0 0.0
  %2294 = vmatprep.subr.mxu0 0.0
  %2295 = vmatpush1.msra.mxu0 0.0
  %2296 = vmatprep.subr.mxu0 0.0
  %2297 = vmatpush1.msra.mxu0 0.0
  %2298 = vmatprep.subr.mxu0 0.0
  %2299 = vmatpush1.msra.mxu0 0.0
  %2300 = vmatprep.subr.mxu0 0.0
  %2301 = vmatpush1.msra.mxu0 0.0
  %2302 = vmatprep.subr.mxu0 0.0
  %2303 = vmatpush1.msra.mxu0 0.0
  %2304 = vmatprep.subr.mxu0 0.0
  %2305 = vmatpush1.msra.mxu0 0.0
  %2306 = vmatprep.subr.mxu0 0.0
  %2307 = vmatpush1.msra.mxu0 0.0
  %2308 = vmatprep.subr.mxu0 0.0
  %2309 = vmatpush1.msra.mxu0 0.0
  %2310 = vmatprep.subr.mxu0 0.0
  %2311 = vmatpush1.msra.mxu0 0.0
  %2312 = vmatprep.subr.mxu0 0.0
  %2313 = vmatpush1.msra.mxu0 0.0
  %2314 = vmatprep.subr.mxu0 0.0
  %2315 = vmatpush1.msra.mxu0 0.0
  %2316 = vmatprep.subr.mxu0 0.0
  %2317 = vmatpush1.msra.mxu0 0.0
  %2318 = vmatprep.subr.mxu0 0.0
  %2319 = vmatpush1.msra.mxu0 0.0
  %2320 = vmatprep.subr.mxu0 0.0
  %2321 = vmatpush1.msra.mxu0 0.0
  %2322 = vmatprep.subr.mxu0 0.0
  %2323 = vmatpush1.msra.mxu0 0.0
  %2324 = vmatprep.mubr.f32.mxu0 0.0
  %2325 = vmatmul.mubr.f32.gmra.mrb[0].mxu0 %v2255
  %v2326 = vpop.f32.mrb[0].mxu0
  %v2327 = vadd.f32 0.0, %v2326
  %v2328 = vpop.f32.mrb[0].mxu0
  %2329 = vmatprep.mubr.f32.mxu0 0.0
  %2330 = vmatmul.mubr.f32.gmra.mrb[0].mxu0 %v2258
  %v2331 = vpop.f32.mrb[0].mxu0
  %v2332 = vadd.f32 0.0, %v2331
  %v2333 = vpop.f32.mrb[0].mxu0
  %2334 = vdwg.mxu0
  %v2335 = vld [vmem:[%s227] sm:$0xff]
  %v2336 = vld [vmem:[%s227 + $0x8] sm:$0xff]
  %v2338 = vsel %vm230, %v2327, 0
  %v2341 = vsel %vm230, %v2332, 0
  %2343 = vmatprep.subr.mxu0 0.0
  %2344 = vmatpush1.msra.mxu0 %v2335
  %2345 = vmatprep.subr.mxu0 0.0
  %2346 = vmatpush1.msra.mxu0 %v2336
  %2347 = vmatprep.subr.mxu0 0.0
  %2348 = vmatpush1.msra.mxu0 0.0
  %2349 = vmatprep.subr.mxu0 0.0
  %2350 = vmatpush1.msra.mxu0 0.0
  %2351 = vmatprep.subr.mxu0 0.0
  %2352 = vmatpush1.msra.mxu0 0.0
  %2353 = vmatprep.subr.mxu0 0.0
  %2354 = vmatpush1.msra.mxu0 0.0
  %2355 = vmatprep.subr.mxu0 0.0
  %2356 = vmatpush1.msra.mxu0 0.0
  %2357 = vmatprep.subr.mxu0 0.0
  %2358 = vmatpush1.msra.mxu0 0.0
  %2359 = vmatprep.subr.mxu0 0.0
  %2360 = vmatpush1.msra.mxu0 0.0
  %2361 = vmatprep.subr.mxu0 0.0
  %2362 = vmatpush1.msra.mxu0 0.0
  %2363 = vmatprep.subr.mxu0 0.0
  %2364 = vmatpush1.msra.mxu0 0.0
  %2365 = vmatprep.subr.mxu0 0.0
  %2366 = vmatpush1.msra.mxu0 0.0
  %2367 = vmatprep.subr.mxu0 0.0
  %2368 = vmatpush1.msra.mxu0 0.0
  %2369 = vmatprep.subr.mxu0 0.0
  %2370 = vmatpush1.msra.mxu0 0.0
  %2371 = vmatprep.subr.mxu0 0.0
  %2372 = vmatpush1.msra.mxu0 0.0
  %2373 = vmatprep.subr.mxu0 0.0
  %2374 = vmatpush1.msra.mxu0 0.0
  %2375 = vmatprep.subr.mxu0 0.0
  %2376 = vmatpush1.msra.mxu0 0.0
  %2377 = vmatprep.subr.mxu0 0.0
  %2378 = vmatpush1.msra.mxu0 0.0
  %2379 = vmatprep.subr.mxu0 0.0
  %2380 = vmatpush1.msra.mxu0 0.0
  %2381 = vmatprep.subr.mxu0 0.0
  %2382 = vmatpush1.msra.mxu0 0.0
  %2383 = vmatprep.subr.mxu0 0.0
  %2384 = vmatpush1.msra.mxu0 0.0
  %2385 = vmatprep.subr.mxu0 0.0
  %2386 = vmatpush1.msra.mxu0 0.0
  %2387 = vmatprep.subr.mxu0 0.0
  %2388 = vmatpush1.msra.mxu0 0.0
  %2389 = vmatprep.subr.mxu0 0.0
  %2390 = vmatpush1.msra.mxu0 0.0
  %2391 = vmatprep.subr.mxu0 0.0
  %2392 = vmatpush1.msra.mxu0 0.0
  %2393 = vmatprep.subr.mxu0 0.0
  %2394 = vmatpush1.msra.mxu0 0.0
  %2395 = vmatprep.subr.mxu0 0.0
  %2396 = vmatpush1.msra.mxu0 0.0
  %2397 = vmatprep.subr.mxu0 0.0
  %2398 = vmatpush1.msra.mxu0 0.0
  %2399 = vmatprep.subr.mxu0 0.0
  %2400 = vmatpush1.msra.mxu0 0.0
  %2401 = vmatprep.subr.mxu0 0.0
  %2402 = vmatpush1.msra.mxu0 0.0
  %2403 = vmatprep.subr.mxu0 0.0
  %2404 = vmatpush1.msra.mxu0 0.0
  %2405 = vmatprep.subr.mxu0 0.0
  %2406 = vmatpush1.msra.mxu0 0.0
  %2407 = vmatprep.mubr.f32.mxu0 0.0
  %2408 = vmatmul.mubr.f32.gmra.mrb[0].mxu0 %v2338
  %v2409 = vpop.f32.mrb[0].mxu0
  %v2410 = vadd.f32 0.0, %v2409
  %v2411 = vpop.f32.mrb[0].mxu0
  %2412 = vmatprep.mubr.f32.mxu0 0.0
  %2413 = vmatmul.mubr.f32.gmra.mrb[0].mxu0 %v2341
  %v2414 = vpop.f32.mrb[0].mxu0
  %v2415 = vadd.f32 0.0, %v2414
  %v2416 = vpop.f32.mrb[0].mxu0
  %2417 = vdwg.mxu0
  %v2419 = vsel %vm230, %v2242, 0
  %v2422 = vsel %vm230, %v2247, 0
  %2424 = vmatprep.subr.mxu0 0.0
  %2425 = vmatpush1.msra.mxu0 %v2250
  %2426 = vmatprep.subr.mxu0 0.0
  %2427 = vmatpush1.msra.mxu0 %v2251
  %2428 = vmatprep.subr.mxu0 0.0
  %2429 = vmatpush1.msra.mxu0 0.0
  %2430 = vmatprep.subr.mxu0 0.0
  %2431 = vmatpush1.msra.mxu0 0.0
  %2432 = vmatprep.subr.mxu0 0.0
  %2433 = vmatpush1.msra.mxu0 0.0
  %2434 = vmatprep.subr.mxu0 0.0
  %2435 = vmatpush1.msra.mxu0 0.0
  %2436 = vmatprep.subr.mxu0 0.0
  %2437 = vmatpush1.msra.mxu0 0.0
  %2438 = vmatprep.subr.mxu0 0.0
  %2439 = vmatpush1.msra.mxu0 0.0
  %2440 = vmatprep.subr.mxu0 0.0
  %2441 = vmatpush1.msra.mxu0 0.0
  %2442 = vmatprep.subr.mxu0 0.0
  %2443 = vmatpush1.msra.mxu0 0.0
  %2444 = vmatprep.subr.mxu0 0.0
  %2445 = vmatpush1.msra.mxu0 0.0
  %2446 = vmatprep.subr.mxu0 0.0
  %2447 = vmatpush1.msra.mxu0 0.0
  %2448 = vmatprep.subr.mxu0 0.0
  %2449 = vmatpush1.msra.mxu0 0.0
  %2450 = vmatprep.subr.mxu0 0.0
  %2451 = vmatpush1.msra.mxu0 0.0
  %2452 = vmatprep.subr.mxu0 0.0
  %2453 = vmatpush1.msra.mxu0 0.0
  %2454 = vmatprep.subr.mxu0 0.0
  %2455 = vmatpush1.msra.mxu0 0.0
  %2456 = vmatprep.subr.mxu0 0.0
  %2457 = vmatpush1.msra.mxu0 0.0
  %2458 = vmatprep.subr.mxu0 0.0
  %2459 = vmatpush1.msra.mxu0 0.0
  %2460 = vmatprep.subr.mxu0 0.0
  %2461 = vmatpush1.msra.mxu0 0.0
  %2462 = vmatprep.subr.mxu0 0.0
  %2463 = vmatpush1.msra.mxu0 0.0
  %2464 = vmatprep.subr.mxu0 0.0
  %2465 = vmatpush1.msra.mxu0 0.0
  %2466 = vmatprep.subr.mxu0 0.0
  %2467 = vmatpush1.msra.mxu0 0.0
  %2468 = vmatprep.subr.mxu0 0.0
  %2469 = vmatpush1.msra.mxu0 0.0
  %2470 = vmatprep.subr.mxu0 0.0
  %2471 = vmatpush1.msra.mxu0 0.0
  %2472 = vmatprep.subr.mxu0 0.0
  %2473 = vmatpush1.msra.mxu0 0.0
  %2474 = vmatprep.subr.mxu0 0.0
  %2475 = vmatpush1.msra.mxu0 0.0
  %2476 = vmatprep.subr.mxu0 0.0
  %2477 = vmatpush1.msra.mxu0 0.0
  %2478 = vmatprep.subr.mxu0 0.0
  %2479 = vmatpush1.msra.mxu0 0.0
  %2480 = vmatprep.subr.mxu0 0.0
  %2481 = vmatpush1.msra.mxu0 0.0
  %2482 = vmatprep.subr.mxu0 0.0
  %2483 = vmatpush1.msra.mxu0 0.0
  %2484 = vmatprep.subr.mxu0 0.0
  %2485 = vmatpush1.msra.mxu0 0.0
  %2486 = vmatprep.subr.mxu0 0.0
  %2487 = vmatpush1.msra.mxu0 0.0
  %2488 = vmatprep.mubr.f32.mxu0 0.0
  %2489 = vmatmul.mubr.f32.gmra.mrb[0].mxu0 %v2419
  %v2490 = vpop.f32.mrb[0].mxu0
  %v2491 = vadd.f32 %v2410, %v2490
  %v2492 = vpop.f32.mrb[0].mxu0
  %2493 = vmatprep.mubr.f32.mxu0 0.0
  %2494 = vmatmul.mubr.f32.gmra.mrb[0].mxu0 %v2422
  %v2495 = vpop.f32.mrb[0].mxu0
  %v2496 = vadd.f32 %v2415, %v2495
  %v2497 = vpop.f32.mrb[0].mxu0
  %2498 = vdwg.mxu0
  %v2499 = vld [vmem:[%s393] sm:$0xff]
  %v2500 = vld [vmem:[%s393 + $0x8] sm:$0x3]
  %v2502 = vsel %vm55, %v2499, 0
  %v2505 = vsel %vm55, %v2500, 0
  %2507 = vmatprep.subr.mxu0 0.0
  %2508 = vmatpush1.msra.mxu0 %v2161
  %2509 = vmatprep.subr.mxu0 0.0
  %2510 = vmatpush1.msra.mxu0 %v2162
  %2511 = vmatprep.subr.mxu0 0.0
  %2512 = vmatpush1.msra.mxu0 %v2173
  %2513 = vmatprep.subr.mxu0 0.0
  %2514 = vmatpush1.msra.mxu0 0.0
  %2515 = vmatprep.subr.mxu0 0.0
  %2516 = vmatpush1.msra.mxu0 0.0
  %2517 = vmatprep.subr.mxu0 0.0
  %2518 = vmatpush1.msra.mxu0 0.0
  %2519 = vmatprep.subr.mxu0 0.0
  %2520 = vmatpush1.msra.mxu0 0.0
  %2521 = vmatprep.subr.mxu0 0.0
  %2522 = vmatpush1.msra.mxu0 0.0
  %2523 = vmatprep.subr.mxu0 0.0
  %2524 = vmatpush1.msra.mxu0 0.0
  %2525 = vmatprep.subr.mxu0 0.0
  %2526 = vmatpush1.msra.mxu0 0.0
  %2527 = vmatprep.subr.mxu0 0.0
  %2528 = vmatpush1.msra.mxu0 0.0
  %2529 = vmatprep.subr.mxu0 0.0
  %2530 = vmatpush1.msra.mxu0 0.0
  %2531 = vmatprep.subr.mxu0 0.0
  %2532 = vmatpush1.msra.mxu0 0.0
  %2533 = vmatprep.subr.mxu0 0.0
  %2534 = vmatpush1.msra.mxu0 0.0
  %2535 = vmatprep.subr.mxu0 0.0
  %2536 = vmatpush1.msra.mxu0 0.0
  %2537 = vmatprep.subr.mxu0 0.0
  %2538 = vmatpush1.msra.mxu0 0.0
  %2539 = vmatprep.subr.mxu0 0.0
  %2540 = vmatpush1.msra.mxu0 0.0
  %2541 = vmatprep.subr.mxu0 0.0
  %2542 = vmatpush1.msra.mxu0 0.0
  %2543 = vmatprep.subr.mxu0 0.0
  %2544 = vmatpush1.msra.mxu0 0.0
  %2545 = vmatprep.subr.mxu0 0.0
  %2546 = vmatpush1.msra.mxu0 0.0
  %2547 = vmatprep.subr.mxu0 0.0
  %2548 = vmatpush1.msra.mxu0 0.0
  %2549 = vmatprep.subr.mxu0 0.0
  %2550 = vmatpush1.msra.mxu0 0.0
  %2551 = vmatprep.subr.mxu0 0.0
  %2552 = vmatpush1.msra.mxu0 0.0
  %2553 = vmatprep.subr.mxu0 0.0
  %2554 = vmatpush1.msra.mxu0 0.0
  %2555 = vmatprep.subr.mxu0 0.0
  %2556 = vmatpush1.msra.mxu0 0.0
  %2557 = vmatprep.subr.mxu0 0.0
  %2558 = vmatpush1.msra.mxu0 0.0
  %2559 = vmatprep.subr.mxu0 0.0
  %2560 = vmatpush1.msra.mxu0 0.0
  %2561 = vmatprep.subr.mxu0 0.0
  %2562 = vmatpush1.msra.mxu0 0.0
  %2563 = vmatprep.subr.mxu0 0.0
  %2564 = vmatpush1.msra.mxu0 0.0
  %2565 = vmatprep.subr.mxu0 0.0
  %2566 = vmatpush1.msra.mxu0 0.0
  %2567 = vmatprep.subr.mxu0 0.0
  %2568 = vmatpush1.msra.mxu0 0.0
  %2569 = vmatprep.subr.mxu0 0.0
  %2570 = vmatpush1.msra.mxu0 0.0
  %2571 = vmatprep.mubr.f32.mxu0 0.0
  %2572 = vmatmul.mubr.f32.gmra.mrb[0].mxu0 %v2502
  %v2573 = vpop.f32.mrb[0].mxu0
  %v2574 = vadd.f32 0.0, %v2573
  %v2575 = vpop.f32.mrb[0].mxu0
  %2576 = vmatprep.mubr.f32.mxu0 0.0
  %2577 = vmatmul.mubr.f32.gmra.mrb[0].mxu0 %v2505
  %v2578 = vpop.f32.mrb[0].mxu0
  %v2579 = vadd.f32 0.0, %v2578
  %v2580 = vpop.f32.mrb[0].mxu0
  %2581 = vdwg.mxu0
  %v2582 = vld [vmem:[%s477] sm:$0xff]
  %v2583 = vld [vmem:[%s477 + $0x8] sm:$0xff]
  %v2585 = vsel %vm230, %v2574, 0
  %v2588 = vsel %vm230, %v2579, 0
  %2590 = vmatprep.subr.mxu0 0.0
  %2591 = vmatpush1.msra.mxu0 %v2582
  %2592 = vmatprep.subr.mxu0 0.0
  %2593 = vmatpush1.msra.mxu0 %v2583
  %2594 = vmatprep.subr.mxu0 0.0
  %2595 = vmatpush1.msra.mxu0 0.0
  %2596 = vmatprep.subr.mxu0 0.0
  %2597 = vmatpush1.msra.mxu0 0.0
  %2598 = vmatprep.subr.mxu0 0.0
  %2599 = vmatpush1.msra.mxu0 0.0
  %2600 = vmatprep.subr.mxu0 0.0
  %2601 = vmatpush1.msra.mxu0 0.0
  %2602 = vmatprep.subr.mxu0 0.0
  %2603 = vmatpush1.msra.mxu0 0.0
  %2604 = vmatprep.subr.mxu0 0.0
  %2605 = vmatpush1.msra.mxu0 0.0
  %2606 = vmatprep.subr.mxu0 0.0
  %2607 = vmatpush1.msra.mxu0 0.0
  %2608 = vmatprep.subr.mxu0 0.0
  %2609 = vmatpush1.msra.mxu0 0.0
  %2610 = vmatprep.subr.mxu0 0.0
  %2611 = vmatpush1.msra.mxu0 0.0
  %2612 = vmatprep.subr.mxu0 0.0
  %2613 = vmatpush1.msra.mxu0 0.0
  %2614 = vmatprep.subr.mxu0 0.0
  %2615 = vmatpush1.msra.mxu0 0.0
  %2616 = vmatprep.subr.mxu0 0.0
  %2617 = vmatpush1.msra.mxu0 0.0
  %2618 = vmatprep.subr.mxu0 0.0
  %2619 = vmatpush1.msra.mxu0 0.0
  %2620 = vmatprep.subr.mxu0 0.0
  %2621 = vmatpush1.msra.mxu0 0.0
  %2622 = vmatprep.subr.mxu0 0.0
  %2623 = vmatpush1.msra.mxu0 0.0
  %2624 = vmatprep.subr.mxu0 0.0
  %2625 = vmatpush1.msra.mxu0 0.0
  %2626 = vmatprep.subr.mxu0 0.0
  %2627 = vmatpush1.msra.mxu0 0.0
  %2628 = vmatprep.subr.mxu0 0.0
  %2629 = vmatpush1.msra.mxu0 0.0
  %2630 = vmatprep.subr.mxu0 0.0
  %2631 = vmatpush1.msra.mxu0 0.0
  %2632 = vmatprep.subr.mxu0 0.0
  %2633 = vmatpush1.msra.mxu0 0.0
  %2634 = vmatprep.subr.mxu0 0.0
  %2635 = vmatpush1.msra.mxu0 0.0
  %2636 = vmatprep.subr.mxu0 0.0
  %2637 = vmatpush1.msra.mxu0 0.0
  %2638 = vmatprep.subr.mxu0 0.0
  %2639 = vmatpush1.msra.mxu0 0.0
  %2640 = vmatprep.subr.mxu0 0.0
  %2641 = vmatpush1.msra.mxu0 0.0
  %2642 = vmatprep.subr.mxu0 0.0
  %2643 = vmatpush1.msra.mxu0 0.0
  %2644 = vmatprep.subr.mxu0 0.0
  %2645 = vmatpush1.msra.mxu0 0.0
  %2646 = vmatprep.subr.mxu0 0.0
  %2647 = vmatpush1.msra.mxu0 0.0
  %2648 = vmatprep.subr.mxu0 0.0
  %2649 = vmatpush1.msra.mxu0 0.0
  %2650 = vmatprep.subr.mxu0 0.0
  %2651 = vmatpush1.msra.mxu0 0.0
  %2652 = vmatprep.subr.mxu0 0.0
  %2653 = vmatpush1.msra.mxu0 0.0
  %2654 = vmatprep.mubr.f32.mxu0 0.0
  %2655 = vmatmul.mubr.f32.gmra.mrb[0].mxu0 %v2585
  %v2656 = vpop.f32.mrb[0].mxu0
  %v2657 = vadd.f32 0.0, %v2656
  %v2658 = vpop.f32.mrb[0].mxu0
  %2659 = vmatprep.mubr.f32.mxu0 0.0
  %2660 = vmatmul.mubr.f32.gmra.mrb[0].mxu0 %v2588
  %v2661 = vpop.f32.mrb[0].mxu0
  %v2662 = vadd.f32 0.0, %v2661
  %v2663 = vpop.f32.mrb[0].mxu0
  %2664 = vdwg.mxu0
  %v2665 = vadd.f32 %v2491, %v2657
  %v2666 = vadd.f32 %v2496, %v2662
  %v2667 = vld [vmem:[%s3] sm:$0x1]
  %v2669 = vlaneseq
  %v2670 = vshrl.u32 %v2669, 7
  %v2671 = vsub.s32 0, %v2670
  %v2672 = vrot.slane %v2667, %v2671
  %v2674 = vadd.f32 %v2665, %v2672
  %v2675 = vadd.f32 %v2666, %v2672
  %v2676 = vmax.f32 %v2674, 0.0
  %v2677 = vmax.f32 %v2675, 0.0
  %v2678 = vld [vmem:[%s4] sm:$0x1f]
  %v2680 = vsel %vm575, %v2678, 0
  %v2683 = vsel %vm579, %v2677, 0
  %2685 = vmatprep.subr.mxu0 0.0
  %2686 = vmatpush1.msra.mxu0 %v2676
  %2687 = vmatprep.subr.mxu0 0.0
  %2688 = vmatpush1.msra.mxu0 %v2683
  %2689 = vmatprep.subr.mxu0 0.0
  %2690 = vmatpush1.msra.mxu0 0.0
  %2691 = vmatprep.subr.mxu0 0.0
  %2692 = vmatpush1.msra.mxu0 0.0
  %2693 = vmatprep.subr.mxu0 0.0
  %2694 = vmatpush1.msra.mxu0 0.0
  %2695 = vmatprep.subr.mxu0 0.0
  %2696 = vmatpush1.msra.mxu0 0.0
  %2697 = vmatprep.subr.mxu0 0.0
  %2698 = vmatpush1.msra.mxu0 0.0
  %2699 = vmatprep.subr.mxu0 0.0
  %2700 = vmatpush1.msra.mxu0 0.0
  %2701 = vmatprep.subr.mxu0 0.0
  %2702 = vmatpush1.msra.mxu0 0.0
  %2703 = vmatprep.subr.mxu0 0.0
  %2704 = vmatpush1.msra.mxu0 0.0
  %2705 = vmatprep.subr.mxu0 0.0
  %2706 = vmatpush1.msra.mxu0 0.0
  %2707 = vmatprep.subr.mxu0 0.0
  %2708 = vmatpush1.msra.mxu0 0.0
  %2709 = vmatprep.subr.mxu0 0.0
  %2710 = vmatpush1.msra.mxu0 0.0
  %2711 = vmatprep.subr.mxu0 0.0
  %2712 = vmatpush1.msra.mxu0 0.0
  %2713 = vmatprep.subr.mxu0 0.0
  %2714 = vmatpush1.msra.mxu0 0.0
  %2715 = vmatprep.subr.mxu0 0.0
  %2716 = vmatpush1.msra.mxu0 0.0
  %2717 = vmatprep.subr.mxu0 0.0
  %2718 = vmatpush1.msra.mxu0 0.0
  %2719 = vmatprep.subr.mxu0 0.0
  %2720 = vmatpush1.msra.mxu0 0.0
  %2721 = vmatprep.subr.mxu0 0.0
  %2722 = vmatpush1.msra.mxu0 0.0
  %2723 = vmatprep.subr.mxu0 0.0
  %2724 = vmatpush1.msra.mxu0 0.0
  %2725 = vmatprep.subr.mxu0 0.0
  %2726 = vmatpush1.msra.mxu0 0.0
  %2727 = vmatprep.subr.mxu0 0.0
  %2728 = vmatpush1.msra.mxu0 0.0
  %2729 = vmatprep.subr.mxu0 0.0
  %2730 = vmatpush1.msra.mxu0 0.0
  %2731 = vmatprep.subr.mxu0 0.0
  %2732 = vmatpush1.msra.mxu0 0.0
  %2733 = vmatprep.subr.mxu0 0.0
  %2734 = vmatpush1.msra.mxu0 0.0
  %2735 = vmatprep.subr.mxu0 0.0
  %2736 = vmatpush1.msra.mxu0 0.0
  %2737 = vmatprep.subr.mxu0 0.0
  %2738 = vmatpush1.msra.mxu0 0.0
  %2739 = vmatprep.subr.mxu0 0.0
  %2740 = vmatpush1.msra.mxu0 0.0
  %2741 = vmatprep.subr.mxu0 0.0
  %2742 = vmatpush1.msra.mxu0 0.0
  %2743 = vmatprep.subr.mxu0 0.0
  %2744 = vmatpush1.msra.mxu0 0.0
  %2745 = vmatprep.subr.mxu0 0.0
  %2746 = vmatpush1.msra.mxu0 0.0
  %2747 = vmatprep.subr.mxu0 0.0
  %2748 = vmatpush1.msra.mxu0 0.0
  %2749 = vmatprep.mubr.f32.mxu0 0.0
  %2750 = vmatmul.mubr.f32.gmra.mrb[0].mxu0 %v2680
  %v2751 = vpop.f32.mrb[0].mxu0
  %v2752 = vadd.f32 0.0, %v2751
  %v2753 = vpop.f32.mrb[0].mxu0
  %2754 = vdwg.mxu0
  %v2755 = vld [vmem:[%s5] sm:$0xff]
  %v2756 = vld [vmem:[%s5 + $0x8] sm:$0xff]
  %v2757 = vld [vmem:[%s5 + $0x10] sm:$0xff]
  %v2758 = vld [vmem:[%s5 + $0x18] sm:$0xff]
  %v2759 = vld [vmem:[%s5 + $0x20] sm:$0xff]
  %v2760 = vld [vmem:[%s5 + $0x28] sm:$0xff]
  %v2761 = vld [vmem:[%s5 + $0x30] sm:$0xff]
  %v2762 = vld [vmem:[%s5 + $0x38] sm:$0xff]
  %v2763 = vld [vmem:[%s661] sm:$0x1f]
  %v2765 = vsel %vm575, %v2763, 0
  %2767 = vmatprep.subr.mxu0 0.0
  %2768 = vmatpush1.msra.mxu0 %v2676
  %2769 = vmatprep.subr.mxu0 0.0
  %2770 = vmatpush1.msra.mxu0 %v2683
  %2771 = vmatprep.subr.mxu0 0.0
  %2772 = vmatpush1.msra.mxu0 0.0
  %2773 = vmatprep.subr.mxu0 0.0
  %2774 = vmatpush1.msra.mxu0 0.0
  %2775 = vmatprep.subr.mxu0 0.0
  %2776 = vmatpush1.msra.mxu0 0.0
  %2777 = vmatprep.subr.mxu0 0.0
  %2778 = vmatpush1.msra.mxu0 0.0
  %2779 = vmatprep.subr.mxu0 0.0
  %2780 = vmatpush1.msra.mxu0 0.0
  %2781 = vmatprep.subr.mxu0 0.0
  %2782 = vmatpush1.msra.mxu0 0.0
  %2783 = vmatprep.subr.mxu0 0.0
  %2784 = vmatpush1.msra.mxu0 0.0
  %2785 = vmatprep.subr.mxu0 0.0
  %2786 = vmatpush1.msra.mxu0 0.0
  %2787 = vmatprep.subr.mxu0 0.0
  %2788 = vmatpush1.msra.mxu0 0.0
  %2789 = vmatprep.subr.mxu0 0.0
  %2790 = vmatpush1.msra.mxu0 0.0
  %2791 = vmatprep.subr.mxu0 0.0
  %2792 = vmatpush1.msra.mxu0 0.0
  %2793 = vmatprep.subr.mxu0 0.0
  %2794 = vmatpush1.msra.mxu0 0.0
  %2795 = vmatprep.subr.mxu0 0.0
  %2796 = vmatpush1.msra.mxu0 0.0
  %2797 = vmatprep.subr.mxu0 0.0
  %2798 = vmatpush1.msra.mxu0 0.0
  %2799 = vmatprep.subr.mxu0 0.0
  %2800 = vmatpush1.msra.mxu0 0.0
  %2801 = vmatprep.subr.mxu0 0.0
  %2802 = vmatpush1.msra.mxu0 0.0
  %2803 = vmatprep.subr.mxu0 0.0
  %2804 = vmatpush1.msra.mxu0 0.0
  %2805 = vmatprep.subr.mxu0 0.0
  %2806 = vmatpush1.msra.mxu0 0.0
  %2807 = vmatprep.subr.mxu0 0.0
  %2808 = vmatpush1.msra.mxu0 0.0
  %2809 = vmatprep.subr.mxu0 0.0
  %2810 = vmatpush1.msra.mxu0 0.0
  %2811 = vmatprep.subr.mxu0 0.0
  %2812 = vmatpush1.msra.mxu0 0.0
  %2813 = vmatprep.subr.mxu0 0.0
  %2814 = vmatpush1.msra.mxu0 0.0
  %2815 = vmatprep.subr.mxu0 0.0
  %2816 = vmatpush1.msra.mxu0 0.0
  %2817 = vmatprep.subr.mxu0 0.0
  %2818 = vmatpush1.msra.mxu0 0.0
  %2819 = vmatprep.subr.mxu0 0.0
  %2820 = vmatpush1.msra.mxu0 0.0
  %2821 = vmatprep.subr.mxu0 0.0
  %2822 = vmatpush1.msra.mxu0 0.0
  %2823 = vmatprep.subr.mxu0 0.0
  %2824 = vmatpush1.msra.mxu0 0.0
  %2825 = vmatprep.subr.mxu0 0.0
  %2826 = vmatpush1.msra.mxu0 0.0
  %2827 = vmatprep.subr.mxu0 0.0
  %2828 = vmatpush1.msra.mxu0 0.0
  %2829 = vmatprep.subr.mxu0 0.0
  %2830 = vmatpush1.msra.mxu0 0.0
  %2831 = vmatprep.mubr.f32.mxu0 0.0
  %2832 = vmatmul.mubr.f32.gmra.mrb[0].mxu0 %v2765
  %v2833 = vpop.f32.mrb[0].mxu0
  %v2834 = vadd.f32 0.0, %v2833
  %v2835 = vpop.f32.mrb[0].mxu0
  %2836 = vdwg.mxu0
  %v2837 = vld [vmem:[%s736] sm:$0xff]
  %v2838 = vld [vmem:[%s736 + $0x8] sm:$0xff]
  %v2839 = vld [vmem:[%s736 + $0x10] sm:$0xff]
  %v2840 = vld [vmem:[%s736 + $0x18] sm:$0xff]
  %v2841 = vld [vmem:[%s736 + $0x20] sm:$0xff]
  %v2842 = vld [vmem:[%s736 + $0x28] sm:$0xff]
  %v2843 = vld [vmem:[%s736 + $0x30] sm:$0xff]
  %v2844 = vld [vmem:[%s736 + $0x38] sm:$0xff]
  %v2846 = vsel %vm745, %v2834, 0
  %2848 = vmatprep.subr.mxu0 0.0
  %2849 = vmatpush1.msra.mxu0 %v2837
  %2850 = vmatprep.subr.mxu0 0.0
  %2851 = vmatpush1.msra.mxu0 %v2838
  %2852 = vmatprep.subr.mxu0 0.0
  %2853 = vmatpush1.msra.mxu0 %v2839
  %2854 = vmatprep.subr.mxu0 0.0
  %2855 = vmatpush1.msra.mxu0 %v2840
  %2856 = vmatprep.subr.mxu0 0.0
  %2857 = vmatpush1.msra.mxu0 %v2841
  %2858 = vmatprep.subr.mxu0 0.0
  %2859 = vmatpush1.msra.mxu0 %v2842
  %2860 = vmatprep.subr.mxu0 0.0
  %2861 = vmatpush1.msra.mxu0 %v2843
  %2862 = vmatprep.subr.mxu0 0.0
  %2863 = vmatpush1.msra.mxu0 %v2844
  %2864 = vmatprep.subr.mxu0 0.0
  %2865 = vmatpush1.msra.mxu0 0.0
  %2866 = vmatprep.subr.mxu0 0.0
  %2867 = vmatpush1.msra.mxu0 0.0
  %2868 = vmatprep.subr.mxu0 0.0
  %2869 = vmatpush1.msra.mxu0 0.0
  %2870 = vmatprep.subr.mxu0 0.0
  %2871 = vmatpush1.msra.mxu0 0.0
  %2872 = vmatprep.subr.mxu0 0.0
  %2873 = vmatpush1.msra.mxu0 0.0
  %2874 = vmatprep.subr.mxu0 0.0
  %2875 = vmatpush1.msra.mxu0 0.0
  %2876 = vmatprep.subr.mxu0 0.0
  %2877 = vmatpush1.msra.mxu0 0.0
  %2878 = vmatprep.subr.mxu0 0.0
  %2879 = vmatpush1.msra.mxu0 0.0
  %2880 = vmatprep.subr.mxu0 0.0
  %2881 = vmatpush1.msra.mxu0 0.0
  %2882 = vmatprep.subr.mxu0 0.0
  %2883 = vmatpush1.msra.mxu0 0.0
  %2884 = vmatprep.subr.mxu0 0.0
  %2885 = vmatpush1.msra.mxu0 0.0
  %2886 = vmatprep.subr.mxu0 0.0
  %2887 = vmatpush1.msra.mxu0 0.0
  %2888 = vmatprep.subr.mxu0 0.0
  %2889 = vmatpush1.msra.mxu0 0.0
  %2890 = vmatprep.subr.mxu0 0.0
  %2891 = vmatpush1.msra.mxu0 0.0
  %2892 = vmatprep.subr.mxu0 0.0
  %2893 = vmatpush1.msra.mxu0 0.0
  %2894 = vmatprep.subr.mxu0 0.0
  %2895 = vmatpush1.msra.mxu0 0.0
  %2896 = vmatprep.subr.mxu0 0.0
  %2897 = vmatpush1.msra.mxu0 0.0
  %2898 = vmatprep.subr.mxu0 0.0
  %2899 = vmatpush1.msra.mxu0 0.0
  %2900 = vmatprep.subr.mxu0 0.0
  %2901 = vmatpush1.msra.mxu0 0.0
  %2902 = vmatprep.subr.mxu0 0.0
  %2903 = vmatpush1.msra.mxu0 0.0
  %2904 = vmatprep.subr.mxu0 0.0
  %2905 = vmatpush1.msra.mxu0 0.0
  %2906 = vmatprep.subr.mxu0 0.0
  %2907 = vmatpush1.msra.mxu0 0.0
  %2908 = vmatprep.subr.mxu0 0.0
  %2909 = vmatpush1.msra.mxu0 0.0
  %2910 = vmatprep.subr.mxu0 0.0
  %2911 = vmatpush1.msra.mxu0 0.0
  %2912 = vmatprep.mubr.f32.mxu0 0.0
  %2913 = vmatmul.mubr.f32.gmra.mrb[0].mxu0 %v2846
  %v2914 = vpop.f32.mrb[0].mxu0
  %v2915 = vadd.f32 0.0, %v2914
  %v2916 = vpop.f32.mrb[0].mxu0
  %2917 = vdwg.mxu0
  %v2919 = vsel %vm745, %v2752, 0
  %2921 = vmatprep.subr.mxu0 0.0
  %2922 = vmatpush1.msra.mxu0 %v2755
  %2923 = vmatprep.subr.mxu0 0.0
  %2924 = vmatpush1.msra.mxu0 %v2756
  %2925 = vmatprep.subr.mxu0 0.0
  %2926 = vmatpush1.msra.mxu0 %v2757
  %2927 = vmatprep.subr.mxu0 0.0
  %2928 = vmatpush1.msra.mxu0 %v2758
  %2929 = vmatprep.subr.mxu0 0.0
  %2930 = vmatpush1.msra.mxu0 %v2759
  %2931 = vmatprep.subr.mxu0 0.0
  %2932 = vmatpush1.msra.mxu0 %v2760
  %2933 = vmatprep.subr.mxu0 0.0
  %2934 = vmatpush1.msra.mxu0 %v2761
  %2935 = vmatprep.subr.mxu0 0.0
  %2936 = vmatpush1.msra.mxu0 %v2762
  %2937 = vmatprep.subr.mxu0 0.0
  %2938 = vmatpush1.msra.mxu0 0.0
  %2939 = vmatprep.subr.mxu0 0.0
  %2940 = vmatpush1.msra.mxu0 0.0
  %2941 = vmatprep.subr.mxu0 0.0
  %2942 = vmatpush1.msra.mxu0 0.0
  %2943 = vmatprep.subr.mxu0 0.0
  %2944 = vmatpush1.msra.mxu0 0.0
  %2945 = vmatprep.subr.mxu0 0.0
  %2946 = vmatpush1.msra.mxu0 0.0
  %2947 = vmatprep.subr.mxu0 0.0
  %2948 = vmatpush1.msra.mxu0 0.0
  %2949 = vmatprep.subr.mxu0 0.0
  %2950 = vmatpush1.msra.mxu0 0.0
  %2951 = vmatprep.subr.mxu0 0.0
  %2952 = vmatpush1.msra.mxu0 0.0
  %2953 = vmatprep.subr.mxu0 0.0
  %2954 = vmatpush1.msra.mxu0 0.0
  %2955 = vmatprep.subr.mxu0 0.0
  %2956 = vmatpush1.msra.mxu0 0.0
  %2957 = vmatprep.subr.mxu0 0.0
  %2958 = vmatpush1.msra.mxu0 0.0
  %2959 = vmatprep.subr.mxu0 0.0
  %2960 = vmatpush1.msra.mxu0 0.0
  %2961 = vmatprep.subr.mxu0 0.0
  %2962 = vmatpush1.msra.mxu0 0.0
  %2963 = vmatprep.subr.mxu0 0.0
  %2964 = vmatpush1.msra.mxu0 0.0
  %2965 = vmatprep.subr.mxu0 0.0
  %2966 = vmatpush1.msra.mxu0 0.0
  %2967 = vmatprep.subr.mxu0 0.0
  %2968 = vmatpush1.msra.mxu0 0.0
  %2969 = vmatprep.subr.mxu0 0.0
  %2970 = vmatpush1.msra.mxu0 0.0
  %2971 = vmatprep.subr.mxu0 0.0
  %2972 = vmatpush1.msra.mxu0 0.0
  %2973 = vmatprep.subr.mxu0 0.0
  %2974 = vmatpush1.msra.mxu0 0.0
  %2975 = vmatprep.subr.mxu0 0.0
  %2976 = vmatpush1.msra.mxu0 0.0
  %2977 = vmatprep.subr.mxu0 0.0
  %2978 = vmatpush1.msra.mxu0 0.0
  %2979 = vmatprep.subr.mxu0 0.0
  %2980 = vmatpush1.msra.mxu0 0.0
  %2981 = vmatprep.subr.mxu0 0.0
  %2982 = vmatpush1.msra.mxu0 0.0
  %2983 = vmatprep.subr.mxu0 0.0
  %2984 = vmatpush1.msra.mxu0 0.0
  %2985 = vmatprep.mubr.f32.mxu0 0.0
  %2986 = vmatmul.mubr.f32.gmra.mrb[0].mxu0 %v2919
  %v2987 = vpop.f32.mrb[0].mxu0
  %v2988 = vadd.f32 %v2915, %v2987
  %v2989 = vpop.f32.mrb[0].mxu0
  %2990 = vdwg.mxu0
  %v2991 = vld [vmem:[%s892] sm:$0x1f]
  %v2993 = vsel %vm575, %v2991, 0
  %2995 = vmatprep.subr.mxu0 0.0
  %2996 = vmatpush1.msra.mxu0 %v2676
  %2997 = vmatprep.subr.mxu0 0.0
  %2998 = vmatpush1.msra.mxu0 %v2683
  %2999 = vmatprep.subr.mxu0 0.0
  %3000 = vmatpush1.msra.mxu0 0.0
  %3001 = vmatprep.subr.mxu0 0.0
  %3002 = vmatpush1.msra.mxu0 0.0
  %3003 = vmatprep.subr.mxu0 0.0
  %3004 = vmatpush1.msra.mxu0 0.0
  %3005 = vmatprep.subr.mxu0 0.0
  %3006 = vmatpush1.msra.mxu0 0.0
  %3007 = vmatprep.subr.mxu0 0.0
  %3008 = vmatpush1.msra.mxu0 0.0
  %3009 = vmatprep.subr.mxu0 0.0
  %3010 = vmatpush1.msra.mxu0 0.0
  %3011 = vmatprep.subr.mxu0 0.0
  %3012 = vmatpush1.msra.mxu0 0.0
  %3013 = vmatprep.subr.mxu0 0.0
  %3014 = vmatpush1.msra.mxu0 0.0
  %3015 = vmatprep.subr.mxu0 0.0
  %3016 = vmatpush1.msra.mxu0 0.0
  %3017 = vmatprep.subr.mxu0 0.0
  %3018 = vmatpush1.msra.mxu0 0.0
  %3019 = vmatprep.subr.mxu0 0.0
  %3020 = vmatpush1.msra.mxu0 0.0
  %3021 = vmatprep.subr.mxu0 0.0
  %3022 = vmatpush1.msra.mxu0 0.0
  %3023 = vmatprep.subr.mxu0 0.0
  %3024 = vmatpush1.msra.mxu0 0.0
  %3025 = vmatprep.subr.mxu0 0.0
  %3026 = vmatpush1.msra.mxu0 0.0
  %3027 = vmatprep.subr.mxu0 0.0
  %3028 = vmatpush1.msra.mxu0 0.0
  %3029 = vmatprep.subr.mxu0 0.0
  %3030 = vmatpush1.msra.mxu0 0.0
  %3031 = vmatprep.subr.mxu0 0.0
  %3032 = vmatpush1.msra.mxu0 0.0
  %3033 = vmatprep.subr.mxu0 0.0
  %3034 = vmatpush1.msra.mxu0 0.0
  %3035 = vmatprep.subr.mxu0 0.0
  %3036 = vmatpush1.msra.mxu0 0.0
  %3037 = vmatprep.subr.mxu0 0.0
  %3038 = vmatpush1.msra.mxu0 0.0
  %3039 = vmatprep.subr.mxu0 0.0
  %3040 = vmatpush1.msra.mxu0 0.0
  %3041 = vmatprep.subr.mxu0 0.0
  %3042 = vmatpush1.msra.mxu0 0.0
  %3043 = vmatprep.subr.mxu0 0.0
  %3044 = vmatpush1.msra.mxu0 0.0
  %3045 = vmatprep.subr.mxu0 0.0
  %3046 = vmatpush1.msra.mxu0 0.0
  %3047 = vmatprep.subr.mxu0 0.0
  %3048 = vmatpush1.msra.mxu0 0.0
  %3049 = vmatprep.subr.mxu0 0.0
  %3050 = vmatpush1.msra.mxu0 0.0
  %3051 = vmatprep.subr.mxu0 0.0
  %3052 = vmatpush1.msra.mxu0 0.0
  %3053 = vmatprep.subr.mxu0 0.0
  %3054 = vmatpush1.msra.mxu0 0.0
  %3055 = vmatprep.subr.mxu0 0.0
  %3056 = vmatpush1.msra.mxu0 0.0
  %3057 = vmatprep.subr.mxu0 0.0
  %3058 = vmatpush1.msra.mxu0 0.0
  %3059 = vmatprep.mubr.f32.mxu0 0.0
  %3060 = vmatmul.mubr.f32.gmra.mrb[0].mxu0 %v2993
  %v3061 = vpop.f32.mrb[0].mxu0
  %v3062 = vadd.f32 0.0, %v3061
  %v3063 = vpop.f32.mrb[0].mxu0
  %3064 = vdwg.mxu0
  %v3065 = vld [vmem:[%s967] sm:$0xff]
  %v3066 = vld [vmem:[%s967 + $0x8] sm:$0xff]
  %v3067 = vld [vmem:[%s967 + $0x10] sm:$0xff]
  %v3068 = vld [vmem:[%s967 + $0x18] sm:$0xff]
  %v3069 = vld [vmem:[%s967 + $0x20] sm:$0xff]
  %v3070 = vld [vmem:[%s967 + $0x28] sm:$0xff]
  %v3071 = vld [vmem:[%s967 + $0x30] sm:$0xff]
  %v3072 = vld [vmem:[%s967 + $0x38] sm:$0xff]
  %v3074 = vsel %vm745, %v3062, 0
  %3076 = vmatprep.subr.mxu0 0.0
  %3077 = vmatpush1.msra.mxu0 %v3065
  %3078 = vmatprep.subr.mxu0 0.0
  %3079 = vmatpush1.msra.mxu0 %v3066
  %3080 = vmatprep.subr.mxu0 0.0
  %3081 = vmatpush1.msra.mxu0 %v3067
  %3082 = vmatprep.subr.mxu0 0.0
  %3083 = vmatpush1.msra.mxu0 %v3068
  %3084 = vmatprep.subr.mxu0 0.0
  %3085 = vmatpush1.msra.mxu0 %v3069
  %3086 = vmatprep.subr.mxu0 0.0
  %3087 = vmatpush1.msra.mxu0 %v3070
  %3088 = vmatprep.subr.mxu0 0.0
  %3089 = vmatpush1.msra.mxu0 %v3071
  %3090 = vmatprep.subr.mxu0 0.0
  %3091 = vmatpush1.msra.mxu0 %v3072
  %3092 = vmatprep.subr.mxu0 0.0
  %3093 = vmatpush1.msra.mxu0 0.0
  %3094 = vmatprep.subr.mxu0 0.0
  %3095 = vmatpush1.msra.mxu0 0.0
  %3096 = vmatprep.subr.mxu0 0.0
  %3097 = vmatpush1.msra.mxu0 0.0
  %3098 = vmatprep.subr.mxu0 0.0
  %3099 = vmatpush1.msra.mxu0 0.0
  %3100 = vmatprep.subr.mxu0 0.0
  %3101 = vmatpush1.msra.mxu0 0.0
  %3102 = vmatprep.subr.mxu0 0.0
  %3103 = vmatpush1.msra.mxu0 0.0
  %3104 = vmatprep.subr.mxu0 0.0
  %3105 = vmatpush1.msra.mxu0 0.0
  %3106 = vmatprep.subr.mxu0 0.0
  %3107 = vmatpush1.msra.mxu0 0.0
  %3108 = vmatprep.subr.mxu0 0.0
  %3109 = vmatpush1.msra.mxu0 0.0
  %3110 = vmatprep.subr.mxu0 0.0
  %3111 = vmatpush1.msra.mxu0 0.0
  %3112 = vmatprep.subr.mxu0 0.0
  %3113 = vmatpush1.msra.mxu0 0.0
  %3114 = vmatprep.subr.mxu0 0.0
  %3115 = vmatpush1.msra.mxu0 0.0
  %3116 = vmatprep.subr.mxu0 0.0
  %3117 = vmatpush1.msra.mxu0 0.0
  %3118 = vmatprep.subr.mxu0 0.0
  %3119 = vmatpush1.msra.mxu0 0.0
  %3120 = vmatprep.subr.mxu0 0.0
  %3121 = vmatpush1.msra.mxu0 0.0
  %3122 = vmatprep.subr.mxu0 0.0
  %3123 = vmatpush1.msra.mxu0 0.0
  %3124 = vmatprep.subr.mxu0 0.0
  %3125 = vmatpush1.msra.mxu0 0.0
  %3126 = vmatprep.subr.mxu0 0.0
  %3127 = vmatpush1.msra.mxu0 0.0
  %3128 = vmatprep.subr.mxu0 0.0
  %3129 = vmatpush1.msra.mxu0 0.0
  %3130 = vmatprep.subr.mxu0 0.0
  %3131 = vmatpush1.msra.mxu0 0.0
  %3132 = vmatprep.subr.mxu0 0.0
  %3133 = vmatpush1.msra.mxu0 0.0
  %3134 = vmatprep.subr.mxu0 0.0
  %3135 = vmatpush1.msra.mxu0 0.0
  %3136 = vmatprep.subr.mxu0 0.0
  %3137 = vmatpush1.msra.mxu0 0.0
  %3138 = vmatprep.subr.mxu0 0.0
  %3139 = vmatpush1.msra.mxu0 0.0
  %3140 = vmatprep.mubr.f32.mxu0 0.0
  %3141 = vmatmul.mubr.f32.gmra.mrb[0].mxu0 %v3074
  %v3142 = vpop.f32.mrb[0].mxu0
  %v3143 = vadd.f32 0.0, %v3142
  %v3144 = vpop.f32.mrb[0].mxu0
  %3145 = vdwg.mxu0
  %v3146 = vadd.f32 %v2988, %v3143
  %v3147 = vld [vmem:[%s6] sm:$0x1]
  %v3149 = vlaneseq
  %v3150 = vshrl.u32 %v3149, 7
  %v3151 = vsub.s32 0, %v3150
  %v3152 = vrot.slane %v3147, %v3151
  %v3154 = vadd.f32 %v3146, %v3152
  %v3155 = vmax.f32 %v3154, 0.0
  %v3156 = vld [vmem:[%s7] sm:$0x1f]
  %v3158 = vsel %vm1060, %v3156, 0
  %v3161 = vsel %vm1064, %v3155, 0
  %3163 = vmatprep.subr.mxu0 0.0
  %3164 = vmatpush1.msra.mxu0 %v3161
  %3165 = vmatprep.subr.mxu0 0.0
  %3166 = vmatpush1.msra.mxu0 0.0
  %3167 = vmatprep.subr.mxu0 0.0
  %3168 = vmatpush1.msra.mxu0 0.0
  %3169 = vmatprep.subr.mxu0 0.0
  %3170 = vmatpush1.msra.mxu0 0.0
  %3171 = vmatprep.subr.mxu0 0.0
  %3172 = vmatpush1.msra.mxu0 0.0
  %3173 = vmatprep.subr.mxu0 0.0
  %3174 = vmatpush1.msra.mxu0 0.0
  %3175 = vmatprep.subr.mxu0 0.0
  %3176 = vmatpush1.msra.mxu0 0.0
  %3177 = vmatprep.subr.mxu0 0.0
  %3178 = vmatpush1.msra.mxu0 0.0
  %3179 = vmatprep.subr.mxu0 0.0
  %3180 = vmatpush1.msra.mxu0 0.0
  %3181 = vmatprep.subr.mxu0 0.0
  %3182 = vmatpush1.msra.mxu0 0.0
  %3183 = vmatprep.subr.mxu0 0.0
  %3184 = vmatpush1.msra.mxu0 0.0
  %3185 = vmatprep.subr.mxu0 0.0
  %3186 = vmatpush1.msra.mxu0 0.0
  %3187 = vmatprep.subr.mxu0 0.0
  %3188 = vmatpush1.msra.mxu0 0.0
  %3189 = vmatprep.subr.mxu0 0.0
  %3190 = vmatpush1.msra.mxu0 0.0
  %3191 = vmatprep.subr.mxu0 0.0
  %3192 = vmatpush1.msra.mxu0 0.0
  %3193 = vmatprep.subr.mxu0 0.0
  %3194 = vmatpush1.msra.mxu0 0.0
  %3195 = vmatprep.subr.mxu0 0.0
  %3196 = vmatpush1.msra.mxu0 0.0
  %3197 = vmatprep.subr.mxu0 0.0
  %3198 = vmatpush1.msra.mxu0 0.0
  %3199 = vmatprep.subr.mxu0 0.0
  %3200 = vmatpush1.msra.mxu0 0.0
  %3201 = vmatprep.subr.mxu0 0.0
  %3202 = vmatpush1.msra.mxu0 0.0
  %3203 = vmatprep.subr.mxu0 0.0
  %3204 = vmatpush1.msra.mxu0 0.0
  %3205 = vmatprep.subr.mxu0 0.0
  %3206 = vmatpush1.msra.mxu0 0.0
  %3207 = vmatprep.subr.mxu0 0.0
  %3208 = vmatpush1.msra.mxu0 0.0
  %3209 = vmatprep.subr.mxu0 0.0
  %3210 = vmatpush1.msra.mxu0 0.0
  %3211 = vmatprep.subr.mxu0 0.0
  %3212 = vmatpush1.msra.mxu0 0.0
  %3213 = vmatprep.subr.mxu0 0.0
  %3214 = vmatpush1.msra.mxu0 0.0
  %3215 = vmatprep.subr.mxu0 0.0
  %3216 = vmatpush1.msra.mxu0 0.0
  %3217 = vmatprep.subr.mxu0 0.0
  %3218 = vmatpush1.msra.mxu0 0.0
  %3219 = vmatprep.subr.mxu0 0.0
  %3220 = vmatpush1.msra.mxu0 0.0
  %3221 = vmatprep.subr.mxu0 0.0
  %3222 = vmatpush1.msra.mxu0 0.0
  %3223 = vmatprep.subr.mxu0 0.0
  %3224 = vmatpush1.msra.mxu0 0.0
  %3225 = vmatprep.subr.mxu0 0.0
  %3226 = vmatpush1.msra.mxu0 0.0
  %3227 = vmatprep.mubr.f32.mxu0 0.0
  %3228 = vmatmul.mubr.f32.gmra.mrb[0].mxu0 %v3158
  %v3229 = vpop.f32.mrb[0].mxu0
  %v3230 = vadd.f32 0.0, %v3229
  %v3231 = vpop.f32.mrb[0].mxu0
  %3232 = vdwg.mxu0
  %v3233 = vld [vmem:[%s8] sm:$0xff]
  %v3234 = vld [vmem:[%s8 + $0x8] sm:$0xff]
  %v3235 = vld [vmem:[%s8 + $0x10] sm:$0xff]
  %v3236 = vld [vmem:[%s8 + $0x18] sm:$0xff]
  %v3237 = vld [vmem:[%s8 + $0x20] sm:$0xff]
  %v3238 = vld [vmem:[%s8 + $0x28] sm:$0xff]
  %v3239 = vld [vmem:[%s8 + $0x30] sm:$0xff]
  %v3240 = vld [vmem:[%s8 + $0x38] sm:$0xff]
  %v3241 = vld [vmem:[%s1146] sm:$0x1f]
  %v3243 = vsel %vm1060, %v3241, 0
  %3245 = vmatprep.subr.mxu0 0.0
  %3246 = vmatpush1.msra.mxu0 %v3161
  %3247 = vmatprep.subr.mxu0 0.0
  %3248 = vmatpush1.msra.mxu0 0.0
  %3249 = vmatprep.subr.mxu0 0.0
  %3250 = vmatpush1.msra.mxu0 0.0
  %3251 = vmatprep.subr.mxu0 0.0
  %3252 = vmatpush1.msra.mxu0 0.0
  %3253 = vmatprep.subr.mxu0 0.0
  %3254 = vmatpush1.msra.mxu0 0.0
  %3255 = vmatprep.subr.mxu0 0.0
  %3256 = vmatpush1.msra.mxu0 0.0
  %3257 = vmatprep.subr.mxu0 0.0
  %3258 = vmatpush1.msra.mxu0 0.0
  %3259 = vmatprep.subr.mxu0 0.0
  %3260 = vmatpush1.msra.mxu0 0.0
  %3261 = vmatprep.subr.mxu0 0.0
  %3262 = vmatpush1.msra.mxu0 0.0
  %3263 = vmatprep.subr.mxu0 0.0
  %3264 = vmatpush1.msra.mxu0 0.0
  %3265 = vmatprep.subr.mxu0 0.0
  %3266 = vmatpush1.msra.mxu0 0.0
  %3267 = vmatprep.subr.mxu0 0.0
  %3268 = vmatpush1.msra.mxu0 0.0
  %3269 = vmatprep.subr.mxu0 0.0
  %3270 = vmatpush1.msra.mxu0 0.0
  %3271 = vmatprep.subr.mxu0 0.0
  %3272 = vmatpush1.msra.mxu0 0.0
  %3273 = vmatprep.subr.mxu0 0.0
  %3274 = vmatpush1.msra.mxu0 0.0
  %3275 = vmatprep.subr.mxu0 0.0
  %3276 = vmatpush1.msra.mxu0 0.0
  %3277 = vmatprep.subr.mxu0 0.0
  %3278 = vmatpush1.msra.mxu0 0.0
  %3279 = vmatprep.subr.mxu0 0.0
  %3280 = vmatpush1.msra.mxu0 0.0
  %3281 = vmatprep.subr.mxu0 0.0
  %3282 = vmatpush1.msra.mxu0 0.0
  %3283 = vmatprep.subr.mxu0 0.0
  %3284 = vmatpush1.msra.mxu0 0.0
  %3285 = vmatprep.subr.mxu0 0.0
  %3286 = vmatpush1.msra.mxu0 0.0
  %3287 = vmatprep.subr.mxu0 0.0
  %3288 = vmatpush1.msra.mxu0 0.0
  %3289 = vmatprep.subr.mxu0 0.0
  %3290 = vmatpush1.msra.mxu0 0.0
  %3291 = vmatprep.subr.mxu0 0.0
  %3292 = vmatpush1.msra.mxu0 0.0
  %3293 = vmatprep.subr.mxu0 0.0
  %3294 = vmatpush1.msra.mxu0 0.0
  %3295 = vmatprep.subr.mxu0 0.0
  %3296 = vmatpush1.msra.mxu0 0.0
  %3297 = vmatprep.subr.mxu0 0.0
  %3298 = vmatpush1.msra.mxu0 0.0
  %3299 = vmatprep.subr.mxu0 0.0
  %3300 = vmatpush1.msra.mxu0 0.0
  %3301 = vmatprep.subr.mxu0 0.0
  %3302 = vmatpush1.msra.mxu0 0.0
  %3303 = vmatprep.subr.mxu0 0.0
  %3304 = vmatpush1.msra.mxu0 0.0
  %3305 = vmatprep.subr.mxu0 0.0
  %3306 = vmatpush1.msra.mxu0 0.0
  %3307 = vmatprep.subr.mxu0 0.0
  %3308 = vmatpush1.msra.mxu0 0.0
  %3309 = vmatprep.mubr.f32.mxu0 0.0
  %3310 = vmatmul.mubr.f32.gmra.mrb[0].mxu0 %v3243
  %v3311 = vpop.f32.mrb[0].mxu0
  %v3312 = vadd.f32 0.0, %v3311
  %v3313 = vpop.f32.mrb[0].mxu0
  %3314 = vdwg.mxu0
  %v3315 = vld [vmem:[%s1221] sm:$0xff]
  %v3316 = vld [vmem:[%s1221 + $0x8] sm:$0xff]
  %v3317 = vld [vmem:[%s1221 + $0x10] sm:$0xff]
  %v3318 = vld [vmem:[%s1221 + $0x18] sm:$0xff]
  %v3319 = vld [vmem:[%s1221 + $0x20] sm:$0xff]
  %v3320 = vld [vmem:[%s1221 + $0x28] sm:$0xff]
  %v3321 = vld [vmem:[%s1221 + $0x30] sm:$0xff]
  %v3322 = vld [vmem:[%s1221 + $0x38] sm:$0xff]
  %v3324 = vsel %vm745, %v3312, 0
  %3326 = vmatprep.subr.mxu0 0.0
  %3327 = vmatpush1.msra.mxu0 %v3315
  %3328 = vmatprep.subr.mxu0 0.0
  %3329 = vmatpush1.msra.mxu0 %v3316
  %3330 = vmatprep.subr.mxu0 0.0
  %3331 = vmatpush1.msra.mxu0 %v3317
  %3332 = vmatprep.subr.mxu0 0.0
  %3333 = vmatpush1.msra.mxu0 %v3318
  %3334 = vmatprep.subr.mxu0 0.0
  %3335 = vmatpush1.msra.mxu0 %v3319
  %3336 = vmatprep.subr.mxu0 0.0
  %3337 = vmatpush1.msra.mxu0 %v3320
  %3338 = vmatprep.subr.mxu0 0.0
  %3339 = vmatpush1.msra.mxu0 %v3321
  %3340 = vmatprep.subr.mxu0 0.0
  %3341 = vmatpush1.msra.mxu0 %v3322
  %3342 = vmatprep.subr.mxu0 0.0
  %3343 = vmatpush1.msra.mxu0 0.0
  %3344 = vmatprep.subr.mxu0 0.0
  %3345 = vmatpush1.msra.mxu0 0.0
  %3346 = vmatprep.subr.mxu0 0.0
  %3347 = vmatpush1.msra.mxu0 0.0
  %3348 = vmatprep.subr.mxu0 0.0
  %3349 = vmatpush1.msra.mxu0 0.0
  %3350 = vmatprep.subr.mxu0 0.0
  %3351 = vmatpush1.msra.mxu0 0.0
  %3352 = vmatprep.subr.mxu0 0.0
  %3353 = vmatpush1.msra.mxu0 0.0
  %3354 = vmatprep.subr.mxu0 0.0
  %3355 = vmatpush1.msra.mxu0 0.0
  %3356 = vmatprep.subr.mxu0 0.0
  %3357 = vmatpush1.msra.mxu0 0.0
  %3358 = vmatprep.subr.mxu0 0.0
  %3359 = vmatpush1.msra.mxu0 0.0
  %3360 = vmatprep.subr.mxu0 0.0
  %3361 = vmatpush1.msra.mxu0 0.0
  %3362 = vmatprep.subr.mxu0 0.0
  %3363 = vmatpush1.msra.mxu0 0.0
  %3364 = vmatprep.subr.mxu0 0.0
  %3365 = vmatpush1.msra.mxu0 0.0
  %3366 = vmatprep.subr.mxu0 0.0
  %3367 = vmatpush1.msra.mxu0 0.0
  %3368 = vmatprep.subr.mxu0 0.0
  %3369 = vmatpush1.msra.mxu0 0.0
  %3370 = vmatprep.subr.mxu0 0.0
  %3371 = vmatpush1.msra.mxu0 0.0
  %3372 = vmatprep.subr.mxu0 0.0
  %3373 = vmatpush1.msra.mxu0 0.0
  %3374 = vmatprep.subr.mxu0 0.0
  %3375 = vmatpush1.msra.mxu0 0.0
  %3376 = vmatprep.subr.mxu0 0.0
  %3377 = vmatpush1.msra.mxu0 0.0
  %3378 = vmatprep.subr.mxu0 0.0
  %3379 = vmatpush1.msra.mxu0 0.0
  %3380 = vmatprep.subr.mxu0 0.0
  %3381 = vmatpush1.msra.mxu0 0.0
  %3382 = vmatprep.subr.mxu0 0.0
  %3383 = vmatpush1.msra.mxu0 0.0
  %3384 = vmatprep.subr.mxu0 0.0
  %3385 = vmatpush1.msra.mxu0 0.0
  %3386 = vmatprep.subr.mxu0 0.0
  %3387 = vmatpush1.msra.mxu0 0.0
  %3388 = vmatprep.subr.mxu0 0.0
  %3389 = vmatpush1.msra.mxu0 0.0
  %3390 = vmatprep.mubr.f32.mxu0 0.0
  %3391 = vmatmul.mubr.f32.gmra.mrb[0].mxu0 %v3324
  %v3392 = vpop.f32.mrb[0].mxu0
  %v3393 = vadd.f32 0.0, %v3392
  %v3394 = vpop.f32.mrb[0].mxu0
  %3395 = vdwg.mxu0
  %v3397 = vsel %vm745, %v3230, 0
  %3399 = vmatprep.subr.mxu0 0.0
  %3400 = vmatpush1.msra.mxu0 %v3233
  %3401 = vmatprep.subr.mxu0 0.0
  %3402 = vmatpush1.msra.mxu0 %v3234
  %3403 = vmatprep.subr.mxu0 0.0
  %3404 = vmatpush1.msra.mxu0 %v3235
  %3405 = vmatprep.subr.mxu0 0.0
  %3406 = vmatpush1.msra.mxu0 %v3236
  %3407 = vmatprep.subr.mxu0 0.0
  %3408 = vmatpush1.msra.mxu0 %v3237
  %3409 = vmatprep.subr.mxu0 0.0
  %3410 = vmatpush1.msra.mxu0 %v3238
  %3411 = vmatprep.subr.mxu0 0.0
  %3412 = vmatpush1.msra.mxu0 %v3239
  %3413 = vmatprep.subr.mxu0 0.0
  %3414 = vmatpush1.msra.mxu0 %v3240
  %3415 = vmatprep.subr.mxu0 0.0
  %3416 = vmatpush1.msra.mxu0 0.0
  %3417 = vmatprep.subr.mxu0 0.0
  %3418 = vmatpush1.msra.mxu0 0.0
  %3419 = vmatprep.subr.mxu0 0.0
  %3420 = vmatpush1.msra.mxu0 0.0
  %3421 = vmatprep.subr.mxu0 0.0
  %3422 = vmatpush1.msra.mxu0 0.0
  %3423 = vmatprep.subr.mxu0 0.0
  %3424 = vmatpush1.msra.mxu0 0.0
  %3425 = vmatprep.subr.mxu0 0.0
  %3426 = vmatpush1.msra.mxu0 0.0
  %3427 = vmatprep.subr.mxu0 0.0
  %3428 = vmatpush1.msra.mxu0 0.0
  %3429 = vmatprep.subr.mxu0 0.0
  %3430 = vmatpush1.msra.mxu0 0.0
  %3431 = vmatprep.subr.mxu0 0.0
  %3432 = vmatpush1.msra.mxu0 0.0
  %3433 = vmatprep.subr.mxu0 0.0
  %3434 = vmatpush1.msra.mxu0 0.0
  %3435 = vmatprep.subr.mxu0 0.0
  %3436 = vmatpush1.msra.mxu0 0.0
  %3437 = vmatprep.subr.mxu0 0.0
  %3438 = vmatpush1.msra.mxu0 0.0
  %3439 = vmatprep.subr.mxu0 0.0
  %3440 = vmatpush1.msra.mxu0 0.0
  %3441 = vmatprep.subr.mxu0 0.0
  %3442 = vmatpush1.msra.mxu0 0.0
  %3443 = vmatprep.subr.mxu0 0.0
  %3444 = vmatpush1.msra.mxu0 0.0
  %3445 = vmatprep.subr.mxu0 0.0
  %3446 = vmatpush1.msra.mxu0 0.0
  %3447 = vmatprep.subr.mxu0 0.0
  %3448 = vmatpush1.msra.mxu0 0.0
  %3449 = vmatprep.subr.mxu0 0.0
  %3450 = vmatpush1.msra.mxu0 0.0
  %3451 = vmatprep.subr.mxu0 0.0
  %3452 = vmatpush1.msra.mxu0 0.0
  %3453 = vmatprep.subr.mxu0 0.0
  %3454 = vmatpush1.msra.mxu0 0.0
  %3455 = vmatprep.subr.mxu0 0.0
  %3456 = vmatpush1.msra.mxu0 0.0
  %3457 = vmatprep.subr.mxu0 0.0
  %3458 = vmatpush1.msra.mxu0 0.0
  %3459 = vmatprep.subr.mxu0 0.0
  %3460 = vmatpush1.msra.mxu0 0.0
  %3461 = vmatprep.subr.mxu0 0.0
  %3462 = vmatpush1.msra.mxu0 0.0
  %3463 = vmatprep.mubr.f32.mxu0 0.0
  %3464 = vmatmul.mubr.f32.gmra.mrb[0].mxu0 %v3397
  %v3465 = vpop.f32.mrb[0].mxu0
  %v3466 = vadd.f32 %v3393, %v3465
  %v3467 = vpop.f32.mrb[0].mxu0
  %3468 = vdwg.mxu0
  %v3469 = vld [vmem:[%s1376] sm:$0x1f]
  %v3471 = vsel %vm1060, %v3469, 0
  %3473 = vmatprep.subr.mxu0 0.0
  %3474 = vmatpush1.msra.mxu0 %v3161
  %3475 = vmatprep.subr.mxu0 0.0
  %3476 = vmatpush1.msra.mxu0 0.0
  %3477 = vmatprep.subr.mxu0 0.0
  %3478 = vmatpush1.msra.mxu0 0.0
  %3479 = vmatprep.subr.mxu0 0.0
  %3480 = vmatpush1.msra.mxu0 0.0
  %3481 = vmatprep.subr.mxu0 0.0
  %3482 = vmatpush1.msra.mxu0 0.0
  %3483 = vmatprep.subr.mxu0 0.0
  %3484 = vmatpush1.msra.mxu0 0.0
  %3485 = vmatprep.subr.mxu0 0.0
  %3486 = vmatpush1.msra.mxu0 0.0
  %3487 = vmatprep.subr.mxu0 0.0
  %3488 = vmatpush1.msra.mxu0 0.0
  %3489 = vmatprep.subr.mxu0 0.0
  %3490 = vmatpush1.msra.mxu0 0.0
  %3491 = vmatprep.subr.mxu0 0.0
  %3492 = vmatpush1.msra.mxu0 0.0
  %3493 = vmatprep.subr.mxu0 0.0
  %3494 = vmatpush1.msra.mxu0 0.0
  %3495 = vmatprep.subr.mxu0 0.0
  %3496 = vmatpush1.msra.mxu0 0.0
  %3497 = vmatprep.subr.mxu0 0.0
  %3498 = vmatpush1.msra.mxu0 0.0
  %3499 = vmatprep.subr.mxu0 0.0
  %3500 = vmatpush1.msra.mxu0 0.0
  %3501 = vmatprep.subr.mxu0 0.0
  %3502 = vmatpush1.msra.mxu0 0.0
  %3503 = vmatprep.subr.mxu0 0.0
  %3504 = vmatpush1.msra.mxu0 0.0
  %3505 = vmatprep.subr.mxu0 0.0
  %3506 = vmatpush1.msra.mxu0 0.0
  %3507 = vmatprep.subr.mxu0 0.0
  %3508 = vmatpush1.msra.mxu0 0.0
  %3509 = vmatprep.subr.mxu0 0.0
  %3510 = vmatpush1.msra.mxu0 0.0
  %3511 = vmatprep.subr.mxu0 0.0
  %3512 = vmatpush1.msra.mxu0 0.0
  %3513 = vmatprep.subr.mxu0 0.0
  %3514 = vmatpush1.msra.mxu0 0.0
  %3515 = vmatprep.subr.mxu0 0.0
  %3516 = vmatpush1.msra.mxu0 0.0
  %3517 = vmatprep.subr.mxu0 0.0
  %3518 = vmatpush1.msra.mxu0 0.0
  %3519 = vmatprep.subr.mxu0 0.0
  %3520 = vmatpush1.msra.mxu0 0.0
  %3521 = vmatprep.subr.mxu0 0.0
  %3522 = vmatpush1.msra.mxu0 0.0
  %3523 = vmatprep.subr.mxu0 0.0
  %3524 = vmatpush1.msra.mxu0 0.0
  %3525 = vmatprep.subr.mxu0 0.0
  %3526 = vmatpush1.msra.mxu0 0.0
  %3527 = vmatprep.subr.mxu0 0.0
  %3528 = vmatpush1.msra.mxu0 0.0
  %3529 = vmatprep.subr.mxu0 0.0
  %3530 = vmatpush1.msra.mxu0 0.0
  %3531 = vmatprep.subr.mxu0 0.0
  %3532 = vmatpush1.msra.mxu0 0.0
  %3533 = vmatprep.subr.mxu0 0.0
  %3534 = vmatpush1.msra.mxu0 0.0
  %3535 = vmatprep.subr.mxu0 0.0
  %3536 = vmatpush1.msra.mxu0 0.0
  %3537 = vmatprep.mubr.f32.mxu0 0.0
  %3538 = vmatmul.mubr.f32.gmra.mrb[0].mxu0 %v3471
  %v3539 = vpop.f32.mrb[0].mxu0
  %v3540 = vadd.f32 0.0, %v3539
  %v3541 = vpop.f32.mrb[0].mxu0
  %3542 = vdwg.mxu0
  %v3543 = vld [vmem:[%s1451] sm:$0xff]
  %v3544 = vld [vmem:[%s1451 + $0x8] sm:$0xff]
  %v3545 = vld [vmem:[%s1451 + $0x10] sm:$0xff]
  %v3546 = vld [vmem:[%s1451 + $0x18] sm:$0xff]
  %v3547 = vld [vmem:[%s1451 + $0x20] sm:$0xff]
  %v3548 = vld [vmem:[%s1451 + $0x28] sm:$0xff]
  %v3549 = vld [vmem:[%s1451 + $0x30] sm:$0xff]
  %v3550 = vld [vmem:[%s1451 + $0x38] sm:$0xff]
  %v3552 = vsel %vm745, %v3540, 0
  %3554 = vmatprep.subr.mxu0 0.0
  %3555 = vmatpush1.msra.mxu0 %v3543
  %3556 = vmatprep.subr.mxu0 0.0
  %3557 = vmatpush1.msra.mxu0 %v3544
  %3558 = vmatprep.subr.mxu0 0.0
  %3559 = vmatpush1.msra.mxu0 %v3545
  %3560 = vmatprep.subr.mxu0 0.0
  %3561 = vmatpush1.msra.mxu0 %v3546
  %3562 = vmatprep.subr.mxu0 0.0
  %3563 = vmatpush1.msra.mxu0 %v3547
  %3564 = vmatprep.subr.mxu0 0.0
  %3565 = vmatpush1.msra.mxu0 %v3548
  %3566 = vmatprep.subr.mxu0 0.0
  %3567 = vmatpush1.msra.mxu0 %v3549
  %3568 = vmatprep.subr.mxu0 0.0
  %3569 = vmatpush1.msra.mxu0 %v3550
  %3570 = vmatprep.subr.mxu0 0.0
  %3571 = vmatpush1.msra.mxu0 0.0
  %3572 = vmatprep.subr.mxu0 0.0
  %3573 = vmatpush1.msra.mxu0 0.0
  %3574 = vmatprep.subr.mxu0 0.0
  %3575 = vmatpush1.msra.mxu0 0.0
  %3576 = vmatprep.subr.mxu0 0.0
  %3577 = vmatpush1.msra.mxu0 0.0
  %3578 = vmatprep.subr.mxu0 0.0
  %3579 = vmatpush1.msra.mxu0 0.0
  %3580 = vmatprep.subr.mxu0 0.0
  %3581 = vmatpush1.msra.mxu0 0.0
  %3582 = vmatprep.subr.mxu0 0.0
  %3583 = vmatpush1.msra.mxu0 0.0
  %3584 = vmatprep.subr.mxu0 0.0
  %3585 = vmatpush1.msra.mxu0 0.0
  %3586 = vmatprep.subr.mxu0 0.0
  %3587 = vmatpush1.msra.mxu0 0.0
  %3588 = vmatprep.subr.mxu0 0.0
  %3589 = vmatpush1.msra.mxu0 0.0
  %3590 = vmatprep.subr.mxu0 0.0
  %3591 = vmatpush1.msra.mxu0 0.0
  %3592 = vmatprep.subr.mxu0 0.0
  %3593 = vmatpush1.msra.mxu0 0.0
  %3594 = vmatprep.subr.mxu0 0.0
  %3595 = vmatpush1.msra.mxu0 0.0
  %3596 = vmatprep.subr.mxu0 0.0
  %3597 = vmatpush1.msra.mxu0 0.0
  %3598 = vmatprep.subr.mxu0 0.0
  %3599 = vmatpush1.msra.mxu0 0.0
  %3600 = vmatprep.subr.mxu0 0.0
  %3601 = vmatpush1.msra.mxu0 0.0
  %3602 = vmatprep.subr.mxu0 0.0
  %3603 = vmatpush1.msra.mxu0 0.0
  %3604 = vmatprep.subr.mxu0 0.0
  %3605 = vmatpush1.msra.mxu0 0.0
  %3606 = vmatprep.subr.mxu0 0.0
  %3607 = vmatpush1.msra.mxu0 0.0
  %3608 = vmatprep.subr.mxu0 0.0
  %3609 = vmatpush1.msra.mxu0 0.0
  %3610 = vmatprep.subr.mxu0 0.0
  %3611 = vmatpush1.msra.mxu0 0.0
  %3612 = vmatprep.subr.mxu0 0.0
  %3613 = vmatpush1.msra.mxu0 0.0
  %3614 = vmatprep.subr.mxu0 0.0
  %3615 = vmatpush1.msra.mxu0 0.0
  %3616 = vmatprep.subr.mxu0 0.0
  %3617 = vmatpush1.msra.mxu0 0.0
  %3618 = vmatprep.mubr.f32.mxu0 0.0
  %3619 = vmatmul.mubr.f32.gmra.mrb[0].mxu0 %v3552
  %v3620 = vpop.f32.mrb[0].mxu0
  %v3621 = vadd.f32 0.0, %v3620
  %v3622 = vpop.f32.mrb[0].mxu0
  %3623 = vdwg.mxu0
  %v3624 = vadd.f32 %v3466, %v3621
  %v3625 = vld [vmem:[%s9] sm:$0x1]
  %v3627 = vlaneseq
  %v3628 = vshrl.u32 %v3627, 7
  %v3629 = vsub.s32 0, %v3628
  %v3630 = vrot.slane %v3625, %v3629
  %v3632 = vadd.f32 %v3624, %v3630
  %v3633 = vmax.f32 %v3632, 0.0
  %v3634 = vld [vmem:[%s11] sm:$0x1]
  %v3635 = vld [vmem:[%s10] sm:$0xff]
  %v3636 = vld [vmem:[%s10 + $0x8] sm:$0xff]
  %v3637 = vld [vmem:[%s10 + $0x10] sm:$0xff]
  %v3638 = vld [vmem:[%s10 + $0x18] sm:$0xff]
  %v3639 = vld [vmem:[%s10 + $0x20] sm:$0xff]
  %v3640 = vld [vmem:[%s10 + $0x28] sm:$0xff]
  %v3641 = vld [vmem:[%s10 + $0x30] sm:$0xff]
  %v3642 = vld [vmem:[%s10 + $0x38] sm:$0xff]
  %v3644 = vsel %vm745, %v3633, 0
  %3646 = vmatprep.subr.mxu0 0.0
  %3647 = vmatpush1.msra.mxu0 %v3635
  %3648 = vmatprep.subr.mxu0 0.0
  %3649 = vmatpush1.msra.mxu0 %v3636
  %3650 = vmatprep.subr.mxu0 0.0
  %3651 = vmatpush1.msra.mxu0 %v3637
  %3652 = vmatprep.subr.mxu0 0.0
  %3653 = vmatpush1.msra.mxu0 %v3638
  %3654 = vmatprep.subr.mxu0 0.0
  %3655 = vmatpush1.msra.mxu0 %v3639
  %3656 = vmatprep.subr.mxu0 0.0
  %3657 = vmatpush1.msra.mxu0 %v3640
  %3658 = vmatprep.subr.mxu0 0.0
  %3659 = vmatpush1.msra.mxu0 %v3641
  %3660 = vmatprep.subr.mxu0 0.0
  %3661 = vmatpush1.msra.mxu0 %v3642
  %3662 = vmatprep.subr.mxu0 0.0
  %3663 = vmatpush1.msra.mxu0 0.0
  %3664 = vmatprep.subr.mxu0 0.0
  %3665 = vmatpush1.msra.mxu0 0.0
  %3666 = vmatprep.subr.mxu0 0.0
  %3667 = vmatpush1.msra.mxu0 0.0
  %3668 = vmatprep.subr.mxu0 0.0
  %3669 = vmatpush1.msra.mxu0 0.0
  %3670 = vmatprep.subr.mxu0 0.0
  %3671 = vmatpush1.msra.mxu0 0.0
  %3672 = vmatprep.subr.mxu0 0.0
  %3673 = vmatpush1.msra.mxu0 0.0
  %3674 = vmatprep.subr.mxu0 0.0
  %3675 = vmatpush1.msra.mxu0 0.0
  %3676 = vmatprep.subr.mxu0 0.0
  %3677 = vmatpush1.msra.mxu0 0.0
  %3678 = vmatprep.subr.mxu0 0.0
  %3679 = vmatpush1.msra.mxu0 0.0
  %3680 = vmatprep.subr.mxu0 0.0
  %3681 = vmatpush1.msra.mxu0 0.0
  %3682 = vmatprep.subr.mxu0 0.0
  %3683 = vmatpush1.msra.mxu0 0.0
  %3684 = vmatprep.subr.mxu0 0.0
  %3685 = vmatpush1.msra.mxu0 0.0
  %3686 = vmatprep.subr.mxu0 0.0
  %3687 = vmatpush1.msra.mxu0 0.0
  %3688 = vmatprep.subr.mxu0 0.0
  %3689 = vmatpush1.msra.mxu0 0.0
  %3690 = vmatprep.subr.mxu0 0.0
  %3691 = vmatpush1.msra.mxu0 0.0
  %3692 = vmatprep.subr.mxu0 0.0
  %3693 = vmatpush1.msra.mxu0 0.0
  %3694 = vmatprep.subr.mxu0 0.0
  %3695 = vmatpush1.msra.mxu0 0.0
  %3696 = vmatprep.subr.mxu0 0.0
  %3697 = vmatpush1.msra.mxu0 0.0
  %3698 = vmatprep.subr.mxu0 0.0
  %3699 = vmatpush1.msra.mxu0 0.0
  %3700 = vmatprep.subr.mxu0 0.0
  %3701 = vmatpush1.msra.mxu0 0.0
  %3702 = vmatprep.subr.mxu0 0.0
  %3703 = vmatpush1.msra.mxu0 0.0
  %3704 = vmatprep.subr.mxu0 0.0
  %3705 = vmatpush1.msra.mxu0 0.0
  %3706 = vmatprep.subr.mxu0 0.0
  %3707 = vmatpush1.msra.mxu0 0.0
  %3708 = vmatprep.subr.mxu0 0.0
  %3709 = vmatpush1.msra.mxu0 0.0
  %3710 = vmatprep.mubr.f32.mxu0 0.0
  %3711 = vmatmul.mubr.f32.gmra.mrb[0].mxu0 %v3644
  %v3712 = vpop.f32.mrb[0].mxu0
  %v3713 = vadd.f32 0.0, %v3712
  %v3714 = vpop.f32.mrb[0].mxu0
  %3715 = vdwg.mxu0
  %v3716 = vadd.f32 %v3634, %v3713
  %v3717 = vld [vmem:[%s10 + $0x40] sm:$0xff]
  %v3718 = vld [vmem:[%s10 + $0x48] sm:$0xff]
  %v3719 = vld [vmem:[%s10 + $0x50] sm:$0xff]
  %v3720 = vld [vmem:[%s10 + $0x58] sm:$0xff]
  %v3721 = vld [vmem:[%s10 + $0x60] sm:$0xff]
  %v3722 = vld [vmem:[%s10 + $0x68] sm:$0xff]
  %v3723 = vld [vmem:[%s10 + $0x70] sm:$0xff]
  %v3724 = vld [vmem:[%s10 + $0x78] sm:$0xff]
  %v3725 = vrot.slane %v3633, 1
  %v3726 = vsel %vm745, %v3725, 0
  %3728 = vmatprep.subr.mxu0 0.0
  %3729 = vmatpush1.msra.mxu0 %v3717
  %3730 = vmatprep.subr.mxu0 0.0
  %3731 = vmatpush1.msra.mxu0 %v3718
  %3732 = vmatprep.subr.mxu0 0.0
  %3733 = vmatpush1.msra.mxu0 %v3719
  %3734 = vmatprep.subr.mxu0 0.0
  %3735 = vmatpush1.msra.mxu0 %v3720
  %3736 = vmatprep.subr.mxu0 0.0
  %3737 = vmatpush1.msra.mxu0 %v3721
  %3738 = vmatprep.subr.mxu0 0.0
  %3739 = vmatpush1.msra.mxu0 %v3722
  %3740 = vmatprep.subr.mxu0 0.0
  %3741 = vmatpush1.msra.mxu0 %v3723
  %3742 = vmatprep.subr.mxu0 0.0
  %3743 = vmatpush1.msra.mxu0 %v3724
  %3744 = vmatprep.subr.mxu0 0.0
  %3745 = vmatpush1.msra.mxu0 0.0
  %3746 = vmatprep.subr.mxu0 0.0
  %3747 = vmatpush1.msra.mxu0 0.0
  %3748 = vmatprep.subr.mxu0 0.0
  %3749 = vmatpush1.msra.mxu0 0.0
  %3750 = vmatprep.subr.mxu0 0.0
  %3751 = vmatpush1.msra.mxu0 0.0
  %3752 = vmatprep.subr.mxu0 0.0
  %3753 = vmatpush1.msra.mxu0 0.0
  %3754 = vmatprep.subr.mxu0 0.0
  %3755 = vmatpush1.msra.mxu0 0.0
  %3756 = vmatprep.subr.mxu0 0.0
  %3757 = vmatpush1.msra.mxu0 0.0
  %3758 = vmatprep.subr.mxu0 0.0
  %3759 = vmatpush1.msra.mxu0 0.0
  %3760 = vmatprep.subr.mxu0 0.0
  %3761 = vmatpush1.msra.mxu0 0.0
  %3762 = vmatprep.subr.mxu0 0.0
  %3763 = vmatpush1.msra.mxu0 0.0
  %3764 = vmatprep.subr.mxu0 0.0
  %3765 = vmatpush1.msra.mxu0 0.0
  %3766 = vmatprep.subr.mxu0 0.0
  %3767 = vmatpush1.msra.mxu0 0.0
  %3768 = vmatprep.subr.mxu0 0.0
  %3769 = vmatpush1.msra.mxu0 0.0
  %3770 = vmatprep.subr.mxu0 0.0
  %3771 = vmatpush1.msra.mxu0 0.0
  %3772 = vmatprep.subr.mxu0 0.0
  %3773 = vmatpush1.msra.mxu0 0.0
  %3774 = vmatprep.subr.mxu0 0.0
  %3775 = vmatpush1.msra.mxu0 0.0
  %3776 = vmatprep.subr.mxu0 0.0
  %3777 = vmatpush1.msra.mxu0 0.0
  %3778 = vmatprep.subr.mxu0 0.0
  %3779 = vmatpush1.msra.mxu0 0.0
  %3780 = vmatprep.subr.mxu0 0.0
  %3781 = vmatpush1.msra.mxu0 0.0
  %3782 = vmatprep.subr.mxu0 0.0
  %3783 = vmatpush1.msra.mxu0 0.0
  %3784 = vmatprep.subr.mxu0 0.0
  %3785 = vmatpush1.msra.mxu0 0.0
  %3786 = vmatprep.subr.mxu0 0.0
  %3787 = vmatpush1.msra.mxu0 0.0
  %3788 = vmatprep.subr.mxu0 0.0
  %3789 = vmatpush1.msra.mxu0 0.0
  %3790 = vmatprep.subr.mxu0 0.0
  %3791 = vmatpush1.msra.mxu0 0.0
  %3792 = vmatprep.mubr.f32.mxu0 0.0
  %3793 = vmatmul.mubr.f32.gmra.mrb[0].mxu0 %v3726
  %v3794 = vpop.f32.mrb[0].mxu0
  %v3795 = vadd.f32 0.0, %v3794
  %v3796 = vpop.f32.mrb[0].mxu0
  %3797 = vdwg.mxu0
  %v3798 = vadd.f32 %v3716, %v3795
  %v3799 = vld [vmem:[%s10 + $0x80] sm:$0xff]
  %v3800 = vld [vmem:[%s10 + $0x88] sm:$0xff]
  %v3801 = vld [vmem:[%s10 + $0x90] sm:$0xff]
  %v3802 = vld [vmem:[%s10 + $0x98] sm:$0xff]
  %v3803 = vld [vmem:[%s10 + $0xa0] sm:$0xff]
  %v3804 = vld [vmem:[%s10 + $0xa8] sm:$0xff]
  %v3805 = vld [vmem:[%s10 + $0xb0] sm:$0xff]
  %v3806 = vld [vmem:[%s10 + $0xb8] sm:$0xff]
  %v3807 = vrot.slane %v3633, 2
  %v3808 = vsel %vm745, %v3807, 0
  %3810 = vmatprep.subr.mxu0 0.0
  %3811 = vmatpush1.msra.mxu0 %v3799
  %3812 = vmatprep.subr.mxu0 0.0
  %3813 = vmatpush1.msra.mxu0 %v3800
  %3814 = vmatprep.subr.mxu0 0.0
  %3815 = vmatpush1.msra.mxu0 %v3801
  %3816 = vmatprep.subr.mxu0 0.0
  %3817 = vmatpush1.msra.mxu0 %v3802
  %3818 = vmatprep.subr.mxu0 0.0
  %3819 = vmatpush1.msra.mxu0 %v3803
  %3820 = vmatprep.subr.mxu0 0.0
  %3821 = vmatpush1.msra.mxu0 %v3804
  %3822 = vmatprep.subr.mxu0 0.0
  %3823 = vmatpush1.msra.mxu0 %v3805
  %3824 = vmatprep.subr.mxu0 0.0
  %3825 = vmatpush1.msra.mxu0 %v3806
  %3826 = vmatprep.subr.mxu0 0.0
  %3827 = vmatpush1.msra.mxu0 0.0
  %3828 = vmatprep.subr.mxu0 0.0
  %3829 = vmatpush1.msra.mxu0 0.0
  %3830 = vmatprep.subr.mxu0 0.0
  %3831 = vmatpush1.msra.mxu0 0.0
  %3832 = vmatprep.subr.mxu0 0.0
  %3833 = vmatpush1.msra.mxu0 0.0
  %3834 = vmatprep.subr.mxu0 0.0
  %3835 = vmatpush1.msra.mxu0 0.0
  %3836 = vmatprep.subr.mxu0 0.0
  %3837 = vmatpush1.msra.mxu0 0.0
  %3838 = vmatprep.subr.mxu0 0.0
  %3839 = vmatpush1.msra.mxu0 0.0
  %3840 = vmatprep.subr.mxu0 0.0
  %3841 = vmatpush1.msra.mxu0 0.0
  %3842 = vmatprep.subr.mxu0 0.0
  %3843 = vmatpush1.msra.mxu0 0.0
  %3844 = vmatprep.subr.mxu0 0.0
  %3845 = vmatpush1.msra.mxu0 0.0
  %3846 = vmatprep.subr.mxu0 0.0
  %3847 = vmatpush1.msra.mxu0 0.0
  %3848 = vmatprep.subr.mxu0 0.0
  %3849 = vmatpush1.msra.mxu0 0.0
  %3850 = vmatprep.subr.mxu0 0.0
  %3851 = vmatpush1.msra.mxu0 0.0
  %3852 = vmatprep.subr.mxu0 0.0
  %3853 = vmatpush1.msra.mxu0 0.0
  %3854 = vmatprep.subr.mxu0 0.0
  %3855 = vmatpush1.msra.mxu0 0.0
  %3856 = vmatprep.subr.mxu0 0.0
  %3857 = vmatpush1.msra.mxu0 0.0
  %3858 = vmatprep.subr.mxu0 0.0
  %3859 = vmatpush1.msra.mxu0 0.0
  %3860 = vmatprep.subr.mxu0 0.0
  %3861 = vmatpush1.msra.mxu0 0.0
  %3862 = vmatprep.subr.mxu0 0.0
  %3863 = vmatpush1.msra.mxu0 0.0
  %3864 = vmatprep.subr.mxu0 0.0
  %3865 = vmatpush1.msra.mxu0 0.0
  %3866 = vmatprep.subr.mxu0 0.0
  %3867 = vmatpush1.msra.mxu0 0.0
  %3868 = vmatprep.subr.mxu0 0.0
  %3869 = vmatpush1.msra.mxu0 0.0
  %3870 = vmatprep.subr.mxu0 0.0
  %3871 = vmatpush1.msra.mxu0 0.0
  %3872 = vmatprep.subr.mxu0 0.0
  %3873 = vmatpush1.msra.mxu0 0.0
  %3874 = vmatprep.mubr.f32.mxu0 0.0
  %3875 = vmatmul.mubr.f32.gmra.mrb[0].mxu0 %v3808
  %v3876 = vpop.f32.mrb[0].mxu0
  %v3877 = vadd.f32 0.0, %v3876
  %v3878 = vpop.f32.mrb[0].mxu0
  %3879 = vdwg.mxu0
  %v3880 = vadd.f32 %v3798, %v3877
  %v3881 = vld [vmem:[%s10 + $0xc0] sm:$0xff]
  %v3882 = vld [vmem:[%s10 + $0xc8] sm:$0xff]
  %v3883 = vld [vmem:[%s10 + $0xd0] sm:$0xff]
  %v3884 = vld [vmem:[%s10 + $0xd8] sm:$0xff]
  %v3885 = vld [vmem:[%s10 + $0xe0] sm:$0xff]
  %v3886 = vld [vmem:[%s10 + $0xe8] sm:$0xff]
  %v3887 = vld [vmem:[%s10 + $0xf0] sm:$0xff]
  %v3888 = vld [vmem:[%s10 + $0xf8] sm:$0xff]
  %v3889 = vrot.slane %v3633, 3
  %v3890 = vsel %vm745, %v3889, 0
  %3892 = vmatprep.subr.mxu0 0.0
  %3893 = vmatpush1.msra.mxu0 %v3881
  %3894 = vmatprep.subr.mxu0 0.0
  %3895 = vmatpush1.msra.mxu0 %v3882
  %3896 = vmatprep.subr.mxu0 0.0
  %3897 = vmatpush1.msra.mxu0 %v3883
  %3898 = vmatprep.subr.mxu0 0.0
  %3899 = vmatpush1.msra.mxu0 %v3884
  %3900 = vmatprep.subr.mxu0 0.0
  %3901 = vmatpush1.msra.mxu0 %v3885
  %3902 = vmatprep.subr.mxu0 0.0
  %3903 = vmatpush1.msra.mxu0 %v3886
  %3904 = vmatprep.subr.mxu0 0.0
  %3905 = vmatpush1.msra.mxu0 %v3887
  %3906 = vmatprep.subr.mxu0 0.0
  %3907 = vmatpush1.msra.mxu0 %v3888
  %3908 = vmatprep.subr.mxu0 0.0
  %3909 = vmatpush1.msra.mxu0 0.0
  %3910 = vmatprep.subr.mxu0 0.0
  %3911 = vmatpush1.msra.mxu0 0.0
  %3912 = vmatprep.subr.mxu0 0.0
  %3913 = vmatpush1.msra.mxu0 0.0
  %3914 = vmatprep.subr.mxu0 0.0
  %3915 = vmatpush1.msra.mxu0 0.0
  %3916 = vmatprep.subr.mxu0 0.0
  %3917 = vmatpush1.msra.mxu0 0.0
  %3918 = vmatprep.subr.mxu0 0.0
  %3919 = vmatpush1.msra.mxu0 0.0
  %3920 = vmatprep.subr.mxu0 0.0
  %3921 = vmatpush1.msra.mxu0 0.0
  %3922 = vmatprep.subr.mxu0 0.0
  %3923 = vmatpush1.msra.mxu0 0.0
  %3924 = vmatprep.subr.mxu0 0.0
  %3925 = vmatpush1.msra.mxu0 0.0
  %3926 = vmatprep.subr.mxu0 0.0
  %3927 = vmatpush1.msra.mxu0 0.0
  %3928 = vmatprep.subr.mxu0 0.0
  %3929 = vmatpush1.msra.mxu0 0.0
  %3930 = vmatprep.subr.mxu0 0.0
  %3931 = vmatpush1.msra.mxu0 0.0
  %3932 = vmatprep.subr.mxu0 0.0
  %3933 = vmatpush1.msra.mxu0 0.0
  %3934 = vmatprep.subr.mxu0 0.0
  %3935 = vmatpush1.msra.mxu0 0.0
  %3936 = vmatprep.subr.mxu0 0.0
  %3937 = vmatpush1.msra.mxu0 0.0
  %3938 = vmatprep.subr.mxu0 0.0
  %3939 = vmatpush1.msra.mxu0 0.0
  %3940 = vmatprep.subr.mxu0 0.0
  %3941 = vmatpush1.msra.mxu0 0.0
  %3942 = vmatprep.subr.mxu0 0.0
  %3943 = vmatpush1.msra.mxu0 0.0
  %3944 = vmatprep.subr.mxu0 0.0
  %3945 = vmatpush1.msra.mxu0 0.0
  %3946 = vmatprep.subr.mxu0 0.0
  %3947 = vmatpush1.msra.mxu0 0.0
  %3948 = vmatprep.subr.mxu0 0.0
  %3949 = vmatpush1.msra.mxu0 0.0
  %3950 = vmatprep.subr.mxu0 0.0
  %3951 = vmatpush1.msra.mxu0 0.0
  %3952 = vmatprep.subr.mxu0 0.0
  %3953 = vmatpush1.msra.mxu0 0.0
  %3954 = vmatprep.subr.mxu0 0.0
  %3955 = vmatpush1.msra.mxu0 0.0
  %3956 = vmatprep.mubr.f32.mxu0 0.0
  %3957 = vmatmul.mubr.f32.gmra.mrb[0].mxu0 %v3890
  %v3958 = vpop.f32.mrb[0].mxu0
  %v3959 = vadd.f32 0.0, %v3958
  %v3960 = vpop.f32.mrb[0].mxu0
  %3961 = vdwg.mxu0
  %v3962 = vadd.f32 %v3880, %v3959
  %v3963 = vld [vmem:[%s10 + $0x100] sm:$0xff]
  %v3964 = vld [vmem:[%s10 + $0x108] sm:$0xff]
  %v3965 = vld [vmem:[%s10 + $0x110] sm:$0xff]
  %v3966 = vld [vmem:[%s10 + $0x118] sm:$0xff]
  %v3967 = vld [vmem:[%s10 + $0x120] sm:$0xff]
  %v3968 = vld [vmem:[%s10 + $0x128] sm:$0xff]
  %v3969 = vld [vmem:[%s10 + $0x130] sm:$0xff]
  %v3970 = vld [vmem:[%s10 + $0x138] sm:$0xff]
  %v3971 = vrot.slane %v3633, 4
  %v3972 = vsel %vm745, %v3971, 0
  %3974 = vmatprep.subr.mxu0 0.0
  %3975 = vmatpush1.msra.mxu0 %v3963
  %3976 = vmatprep.subr.mxu0 0.0
  %3977 = vmatpush1.msra.mxu0 %v3964
  %3978 = vmatprep.subr.mxu0 0.0
  %3979 = vmatpush1.msra.mxu0 %v3965
  %3980 = vmatprep.subr.mxu0 0.0
  %3981 = vmatpush1.msra.mxu0 %v3966
  %3982 = vmatprep.subr.mxu0 0.0
  %3983 = vmatpush1.msra.mxu0 %v3967
  %3984 = vmatprep.subr.mxu0 0.0
  %3985 = vmatpush1.msra.mxu0 %v3968
  %3986 = vmatprep.subr.mxu0 0.0
  %3987 = vmatpush1.msra.mxu0 %v3969
  %3988 = vmatprep.subr.mxu0 0.0
  %3989 = vmatpush1.msra.mxu0 %v3970
  %3990 = vmatprep.subr.mxu0 0.0
  %3991 = vmatpush1.msra.mxu0 0.0
  %3992 = vmatprep.subr.mxu0 0.0
  %3993 = vmatpush1.msra.mxu0 0.0
  %3994 = vmatprep.subr.mxu0 0.0
  %3995 = vmatpush1.msra.mxu0 0.0
  %3996 = vmatprep.subr.mxu0 0.0
  %3997 = vmatpush1.msra.mxu0 0.0
  %3998 = vmatprep.subr.mxu0 0.0
  %3999 = vmatpush1.msra.mxu0 0.0
  %4000 = vmatprep.subr.mxu0 0.0
  %4001 = vmatpush1.msra.mxu0 0.0
  %4002 = vmatprep.subr.mxu0 0.0
  %4003 = vmatpush1.msra.mxu0 0.0
  %4004 = vmatprep.subr.mxu0 0.0
  %4005 = vmatpush1.msra.mxu0 0.0
  %4006 = vmatprep.subr.mxu0 0.0
  %4007 = vmatpush1.msra.mxu0 0.0
  %4008 = vmatprep.subr.mxu0 0.0
  %4009 = vmatpush1.msra.mxu0 0.0
  %4010 = vmatprep.subr.mxu0 0.0
  %4011 = vmatpush1.msra.mxu0 0.0
  %4012 = vmatprep.subr.mxu0 0.0
  %4013 = vmatpush1.msra.mxu0 0.0
  %4014 = vmatprep.subr.mxu0 0.0
  %4015 = vmatpush1.msra.mxu0 0.0
  %4016 = vmatprep.subr.mxu0 0.0
  %4017 = vmatpush1.msra.mxu0 0.0
  %4018 = vmatprep.subr.mxu0 0.0
  %4019 = vmatpush1.msra.mxu0 0.0
  %4020 = vmatprep.subr.mxu0 0.0
  %4021 = vmatpush1.msra.mxu0 0.0
  %4022 = vmatprep.subr.mxu0 0.0
  %4023 = vmatpush1.msra.mxu0 0.0
  %4024 = vmatprep.subr.mxu0 0.0
  %4025 = vmatpush1.msra.mxu0 0.0
  %4026 = vmatprep.subr.mxu0 0.0
  %4027 = vmatpush1.msra.mxu0 0.0
  %4028 = vmatprep.subr.mxu0 0.0
  %4029 = vmatpush1.msra.mxu0 0.0
  %4030 = vmatprep.subr.mxu0 0.0
  %4031 = vmatpush1.msra.mxu0 0.0
  %4032 = vmatprep.subr.mxu0 0.0
  %4033 = vmatpush1.msra.mxu0 0.0
  %4034 = vmatprep.subr.mxu0 0.0
  %4035 = vmatpush1.msra.mxu0 0.0
  %4036 = vmatprep.subr.mxu0 0.0
  %4037 = vmatpush1.msra.mxu0 0.0
  %4038 = vmatprep.mubr.f32.mxu0 0.0
  %4039 = vmatmul.mubr.f32.gmra.mrb[0].mxu0 %v3972
  %v4040 = vpop.f32.mrb[0].mxu0
  %v4041 = vadd.f32 0.0, %v4040
  %v4042 = vpop.f32.mrb[0].mxu0
  %4043 = vdwg.mxu0
  %v4044 = vadd.f32 %v3962, %v4041
  %v4045 = vld [vmem:[%s12] sm:$0xff]
  %v4046 = vld [vmem:[%s12 + $0x8] sm:$0xff]
  %v4047 = vld [vmem:[%s12 + $0x10] sm:$0xff]
  %v4048 = vld [vmem:[%s12 + $0x18] sm:$0xff]
  %v4049 = vld [vmem:[%s12 + $0x20] sm:$0xff]
  %v4050 = vld [vmem:[%s12 + $0x28] sm:$0xff]
  %v4051 = vld [vmem:[%s12 + $0x30] sm:$0xff]
  %v4052 = vld [vmem:[%s12 + $0x38] sm:$0xff]
  %v4053 = vld [vmem:[%s12 + $0x40] sm:$0xff]
  %v4054 = vld [vmem:[%s12 + $0x48] sm:$0xff]
  %v4055 = vld [vmem:[%s12 + $0x50] sm:$0xff]
  %v4056 = vld [vmem:[%s12 + $0x58] sm:$0xff]
  %v4057 = vld [vmem:[%s13] sm:$0x7]
  %v4059 = vlaneseq
  %v4060 = vshrl.u32 %v4059, 7
  %v4061 = vsub.s32 0, %v4060
  %v4062 = vrot.slane %v4057, %v4061
  %v4063 = vlaneseq
  %v4064 = vshrl.u32 %v4063, 7
  %v4065 = vsub.s32 1, %v4064
  %v4066 = vrot.slane %v4057, %v4065
  %v4067 = vlaneseq
  %v4068 = vshrl.u32 %v4067, 7
  %v4069 = vsub.s32 2, %v4068
  %v4070 = vrot.slane %v4057, %v4069
  %v4075 = vsel %vm1983, %v4044, 0
  %4077 = vmatprep.subr.mxu0 %v4046
  %4078 = vmatpush1.msra.mxu0 %v4045
  %4079 = vmatprep.subr.mxu0 %v4049
  %4080 = vmatpush1.msra.mxu0 %v4048
  %4081 = vmatprep.subr.mxu0 %v4052
  %4082 = vmatpush1.msra.mxu0 %v4051
  %4083 = vmatprep.subr.mxu0 %v4055
  %4084 = vmatpush1.msra.mxu0 %v4054
  %4085 = vmatprep.subr.mxu0 0.0
  %4086 = vmatpush1.msra.mxu0 0.0
  %4087 = vmatprep.subr.mxu0 0.0
  %4088 = vmatpush1.msra.mxu0 0.0
  %4089 = vmatprep.subr.mxu0 0.0
  %4090 = vmatpush1.msra.mxu0 0.0
  %4091 = vmatprep.subr.mxu0 0.0
  %4092 = vmatpush1.msra.mxu0 0.0
  %4093 = vmatprep.subr.mxu0 0.0
  %4094 = vmatpush1.msra.mxu0 0.0
  %4095 = vmatprep.subr.mxu0 0.0
  %4096 = vmatpush1.msra.mxu0 0.0
  %4097 = vmatprep.subr.mxu0 0.0
  %4098 = vmatpush1.msra.mxu0 0.0
  %4099 = vmatprep.subr.mxu0 0.0
  %4100 = vmatpush1.msra.mxu0 0.0
  %4101 = vmatprep.subr.mxu0 0.0
  %4102 = vmatpush1.msra.mxu0 0.0
  %4103 = vmatprep.subr.mxu0 0.0
  %4104 = vmatpush1.msra.mxu0 0.0
  %4105 = vmatprep.subr.mxu0 0.0
  %4106 = vmatpush1.msra.mxu0 0.0
  %4107 = vmatprep.subr.mxu0 0.0
  %4108 = vmatpush1.msra.mxu0 0.0
  %4109 = vmatprep.subr.mxu0 0.0
  %4110 = vmatpush1.msra.mxu0 0.0
  %4111 = vmatprep.subr.mxu0 0.0
  %4112 = vmatpush1.msra.mxu0 0.0
  %4113 = vmatprep.subr.mxu0 0.0
  %4114 = vmatpush1.msra.mxu0 0.0
  %4115 = vmatprep.subr.mxu0 0.0
  %4116 = vmatpush1.msra.mxu0 0.0
  %4117 = vmatprep.subr.mxu0 0.0
  %4118 = vmatpush1.msra.mxu0 0.0
  %4119 = vmatprep.subr.mxu0 0.0
  %4120 = vmatpush1.msra.mxu0 0.0
  %4121 = vmatprep.subr.mxu0 0.0
  %4122 = vmatpush1.msra.mxu0 0.0
  %4123 = vmatprep.subr.mxu0 0.0
  %4124 = vmatpush1.msra.mxu0 0.0
  %4125 = vmatprep.subr.mxu0 0.0
  %4126 = vmatpush1.msra.mxu0 0.0
  %4127 = vmatprep.subr.mxu0 0.0
  %4128 = vmatpush1.msra.mxu0 0.0
  %4129 = vmatprep.subr.mxu0 0.0
  %4130 = vmatpush1.msra.mxu0 0.0
  %4131 = vmatprep.subr.mxu0 0.0
  %4132 = vmatpush1.msra.mxu0 0.0
  %4133 = vmatprep.subr.mxu0 0.0
  %4134 = vmatpush1.msra.mxu0 0.0
  %4135 = vmatprep.subr.mxu0 0.0
  %4136 = vmatpush1.msra.mxu0 0.0
  %4137 = vmatprep.subr.mxu0 0.0
  %4138 = vmatpush1.msra.mxu0 0.0
  %4139 = vmatprep.subr.mxu0 0.0
  %4140 = vmatpush1.msra.mxu0 0.0
  %4141 = vmatprep.mubr.f32.mxu0 0.0
  %4142 = vmatmul.mubr.f32.gmra.mrb[0].mxu0 %v4075
  %v4143 = vpop.f32.mrb[0].mxu0
  %v4144 = vadd.f32 %v4062, %v4143
  %v4145 = vpop.f32.mrb[0].mxu0
  %v4146 = vadd.f32 %v4066, %v4145
  %4147 = vdwg.mxu0
  %4148 = vmatprep.subr.mxu0 0.0
  %4149 = vmatpush1.msra.mxu0 %v4047
  %4150 = vmatprep.subr.mxu0 0.0
  %4151 = vmatpush1.msra.mxu0 %v4050
  %4152 = vmatprep.subr.mxu0 0.0
  %4153 = vmatpush1.msra.mxu0 %v4053
  %4154 = vmatprep.subr.mxu0 0.0
  %4155 = vmatpush1.msra.mxu0 %v4056
  %4156 = vmatprep.subr.mxu0 0.0
  %4157 = vmatpush1.msra.mxu0 0.0
  %4158 = vmatprep.subr.mxu0 0.0
  %4159 = vmatpush1.msra.mxu0 0.0
  %4160 = vmatprep.subr.mxu0 0.0
  %4161 = vmatpush1.msra.mxu0 0.0
  %4162 = vmatprep.subr.mxu0 0.0
  %4163 = vmatpush1.msra.mxu0 0.0
  %4164 = vmatprep.subr.mxu0 0.0
  %4165 = vmatpush1.msra.mxu0 0.0
  %4166 = vmatprep.subr.mxu0 0.0
  %4167 = vmatpush1.msra.mxu0 0.0
  %4168 = vmatprep.subr.mxu0 0.0
  %4169 = vmatpush1.msra.mxu0 0.0
  %4170 = vmatprep.subr.mxu0 0.0
  %4171 = vmatpush1.msra.mxu0 0.0
  %4172 = vmatprep.subr.mxu0 0.0
  %4173 = vmatpush1.msra.mxu0 0.0
  %4174 = vmatprep.subr.mxu0 0.0
  %4175 = vmatpush1.msra.mxu0 0.0
  %4176 = vmatprep.subr.mxu0 0.0
  %4177 = vmatpush1.msra.mxu0 0.0
  %4178 = vmatprep.subr.mxu0 0.0
  %4179 = vmatpush1.msra.mxu0 0.0
  %4180 = vmatprep.subr.mxu0 0.0
  %4181 = vmatpush1.msra.mxu0 0.0
  %4182 = vmatprep.subr.mxu0 0.0
  %4183 = vmatpush1.msra.mxu0 0.0
  %4184 = vmatprep.subr.mxu0 0.0
  %4185 = vmatpush1.msra.mxu0 0.0
  %4186 = vmatprep.subr.mxu0 0.0
  %4187 = vmatpush1.msra.mxu0 0.0
  %4188 = vmatprep.subr.mxu0 0.0
  %4189 = vmatpush1.msra.mxu0 0.0
  %4190 = vmatprep.subr.mxu0 0.0
  %4191 = vmatpush1.msra.mxu0 0.0
  %4192 = vmatprep.subr.mxu0 0.0
  %4193 = vmatpush1.msra.mxu0 0.0
  %4194 = vmatprep.subr.mxu0 0.0
  %4195 = vmatpush1.msra.mxu0 0.0
  %4196 = vmatprep.subr.mxu0 0.0
  %4197 = vmatpush1.msra.mxu0 0.0
  %4198 = vmatprep.subr.mxu0 0.0
  %4199 = vmatpush1.msra.mxu0 0.0
  %4200 = vmatprep.subr.mxu0 0.0
  %4201 = vmatpush1.msra.mxu0 0.0
  %4202 = vmatprep.subr.mxu0 0.0
  %4203 = vmatpush1.msra.mxu0 0.0
  %4204 = vmatprep.subr.mxu0 0.0
  %4205 = vmatpush1.msra.mxu0 0.0
  %4206 = vmatprep.subr.mxu0 0.0
  %4207 = vmatpush1.msra.mxu0 0.0
  %4208 = vmatprep.subr.mxu0 0.0
  %4209 = vmatpush1.msra.mxu0 0.0
  %4210 = vmatprep.subr.mxu0 0.0
  %4211 = vmatpush1.msra.mxu0 0.0
  %4212 = vmatprep.mubr.f32.mxu0 0.0
  %4213 = vmatmul.mubr.f32.gmra.mrb[0].mxu0 %v4075
  %v4214 = vpop.f32.mrb[0].mxu0
  %v4215 = vadd.f32 %v4070, %v4214
  %v4216 = vpop.f32.mrb[0].mxu0
  %4217 = vdwg.mxu0
  %v4221 = vcombine.low %v4144, %v4146
  %v4223 = vunpack.c.l.s4 1966171168
  %v4224 = vunpack.c.0.s8 %v4223
  %v4225 = vlaneseq
  %v4226 = vshrl.u32 %v4225, 7
  %v4227 = vsub.s32 %v4224, %v4226
  %v4228 = vrot.slane %v4221, %v4227
  %v4230 = vunpack.c.l.s4 1966171168
  %v4231 = vunpack.c.0.s8 %v4230
  %v4232 = vlaneseq
  %v4233 = vshrl.u32 %v4232, 7
  %v4234 = vsub.s32 %v4231, %v4233
  %v4235 = vrot.slane %v4215, %v4234
  %v4236 = vcombine.low %v4228, %v4235
  %v4238 = vunpack.c.l.s4 1966171168
  %v4239 = vunpack.c.0.s8 %v4238
  %v4240 = vlaneseq
  %v4241 = vshrl.u32 %v4240, 7
  %v4242 = vsub.s32 %v4239, %v4241
  %v4243 = vrot.slane %v4236, %v4242
  %s4245 = scalar_lea.vmem %s14, 1
  %4246 = vst.msk [vmem:[%s4245] ss:$8 sm:$0x7] %vm2158, %v4243
  %4247 = vst.msk [vmem:[%s4245] ss:$8 sm:$0x0] %vm2158, %v4243
  // Predicated region
  $region58: #{forward.1} parent=0 // pred_check
    _
  $region59: #{forward.1} parent=0 // pred_check_branch
    %4249 = sbr.rel (0) target = $region61
  $region60: #{forward.1} parent=0 // pred_region
    _
  $region61: #{forward.1} parent=0 // pred_fallthru
    _
  // Predicated region
  $region62: #{forward.1} parent=0 // pred_check
    _
  $region63: #{forward.1} parent=0 // pred_check_branch
    %4251 = sbr.rel (0) target = $region65
  $region64: #{forward.1} parent=0 // pred_region
    _
  $region65: #{forward.1} parent=0 // pred_fallthru
    _

</llo_original>
